<compile_context>
chip_gen: v5e
topology: v5e:2x2
jax: 0.10.0
libtpu: 0.0.40
codegen_flags: <defaults>
</compile_context>

<pallas_src>
import jax
import jax.numpy as jnp
from jax.experimental import pallas as pl
from jax.experimental.pallas import tpu as pltpu

F32 = jnp.float32
MXU_DTYPE = jnp.bfloat16          # matmul-operand dtype (f32 accumulation everywhere)


def _gelu(x):
    # TODO(synk): nn.GELU is exact erf-GELU; tanh approximation used because erf is
    # not guaranteed to lower in Pallas Mosaic (difference ~1e-3).
    return jax.nn.gelu(x, approximate=True)


def _bn_affine(gamma, beta, mean, var, eps=1e-5):
    """Fold inference-mode BatchNorm2d into a per-channel scale/shift."""
    scale = gamma / jnp.sqrt(var + eps)
    shift = beta - mean * scale
    return scale.reshape(1, -1).astype(F32), shift.reshape(1, -1).astype(F32)


def _vmem_limit_bytes():
    """Per-generation scoped-VMEM ceiling: ~3/4 of physical, capped at 100 MiB.
    v5e/v6e (128 MiB) -> 96 MiB; v7x (64 MiB per TC) -> 48 MiB."""
    cap = 64 * 1024 * 1024        # conservative default if the query is unavailable
    try:
        info = pltpu.get_tpu_info()
        cap = int(getattr(info, "vmem_capacity_bytes", cap))
    except Exception:
        pass
    return int(min(cap * 3 // 4, 100 * 1024 * 1024))


# ---------------------------------------------------------------------------
# Fused kernel: conv1(3x3) -> GELU -> +res -> BN1 -> conv2(1x1) -> GELU
#               -> conv3(1x1) -> BN3
# ---------------------------------------------------------------------------
def _irmlp_fused_kernel(x_ref, w1_ref, s1_ref, t1_ref, w2_ref, w3_ref,
                        s3_ref, t3_ref, o_ref, xpad):
    # x_ref : (1, H, W, C)  bf16     w1_ref: (9C, C) bf16, rows ordered (kh, kw, cin)
    # w2_ref: (C, 4C) bf16           w3_ref: (4C, Cout) bf16
    # s*/t* : (1, ·) f32 folded BN affines
    # o_ref : (1, H*W, Cout)         xpad  : (H+2, W+2, C) bf16 VMEM scratch
    _, H, W, C = x_ref.shape
    Hp, Wp = H + 2, W + 2
    xb = x_ref[0]                                            # (H, W, C) bf16

    # --- in-VMEM zero padding: refresh only the 1-wide border each step -----
    # NOT hoisted under pl.program_id(0)==0: with a "parallel" batch axis the
    # second TensorCore never executes grid step 0 and its scratch border
    # would stay uninitialised.  The 4 strips are ~2(Hp+Wp)C elements — cheap.
    zrow = jnp.zeros((1, Wp, C), xpad.dtype)
    zcol = jnp.zeros((Hp, 1, C), xpad.dtype)
    xpad[0:1, :, :] = zrow
    xpad[Hp - 1:Hp, :, :] = zrow
    xpad[:, 0:1, :] = zcol
    xpad[:, Wp - 1:Wp, :] = zcol
    xpad[1:1 + H, 1:1 + W, :] = xb.astype(xpad.dtype)

    # --- conv1: 3x3 / pad=1 as 9 shifted (H*W,C)x(C,C) MXU matmuls ----------
    # (no (H*W, 9C) im2col buffer; identical MAC count, f32 accumulation)
    acc = jnp.zeros((H * W, C), jnp.float32)
    for kh in range(3):
        for kw in range(3):
            idx = kh * 3 + kw
            patch = xpad[kh:kh + H, kw:kw + W, :].reshape(H * W, C)
            acc = acc + jnp.dot(patch, w1_ref[idx * C:(idx + 1) * C, :],
                                preferred_element_type=jnp.float32)

    # --- GELU -> +residual -> folded BN1 (all f32) ---------------------------
    y = _gelu(acc) + xb.reshape(H * W, C).astype(jnp.float32)
    y = y * s1_ref[...] + t1_ref[...]

    # --- fused MLP: conv2(1x1) -> GELU -> conv3(1x1) -> folded BN3 -----------
    h = jnp.dot(y.astype(w2_ref.dtype), w2_ref[...],
                preferred_element_type=jnp.float32)          # (H*W, 4C) f32
    h = _gelu(h)                                             # f32 (v5e-safe)
    z = jnp.dot(h.astype(w3_ref.dtype), w3_ref[...],
                preferred_element_type=jnp.float32)          # (H*W, Cout) f32
    z = z * s3_ref[...] + t3_ref[...]
    o_ref[0] = z.astype(o_ref.dtype)


def irmlp_fused(x_nhwc, w1_flat, s1, t1, w2, w3, s3, t3, out_dtype=F32):
    """x_nhwc: (B, H, W, C) bf16 -> (B, H*W, Cout) out_dtype (NHWC row-major)."""
    B, H, W, C = x_nhwc.shape
    C4 = w2.shape[1]
    Cout = w3.shape[1]

    def _const(shape):
        # grid-invariant operand: fetch once, single buffer (saves VMEM, esp. v7x)
        return pl.BlockSpec(shape, lambda b, _s=shape: (0,) * len(_s),
                            pipeline_mode=pl.Buffered(1))

    return pl.pallas_call(
        _irmlp_fused_kernel,
        out_shape=jax.ShapeDtypeStruct((B, H * W, Cout), out_dtype),
        grid=(B,),
        in_specs=[
            pl.BlockSpec((1, H, W, C), lambda b: (b, 0, 0, 0)),
            _const((9 * C, C)),
            _const((1, C)),
            _const((1, C)),
            _const((C, C4)),
            _const((C4, Cout)),
            _const((1, Cout)),
            _const((1, Cout)),
        ],
        out_specs=pl.BlockSpec((1, H * W, Cout), lambda b: (b, 0, 0)),
        scratch_shapes=[pltpu.VMEM((H + 2, W + 2, C), MXU_DTYPE)],
        compiler_params=pltpu.CompilerParams(
            dimension_semantics=("parallel",),
            vmem_limit_bytes=_vmem_limit_bytes()),
    )(x_nhwc.astype(MXU_DTYPE), w1_flat.astype(MXU_DTYPE), s1, t1,
      w2.astype(MXU_DTYPE), w3.astype(MXU_DTYPE), s3, t3)


# ---------------------------------------------------------------------------
# Parameters & forward
# ---------------------------------------------------------------------------
def init_irmlp_params(key, inp_dim, out_dim):
    keys = iter(jax.random.split(key, 16))

    def nrm(shape, s=0.1):
        return (s * jax.random.normal(next(keys), shape)).astype(F32)

    def bn_params(c):
        return dict(gamma=(1.0 + nrm((c,))).astype(F32), beta=nrm((c,)),
                    mean=nrm((c,)), var=(1.0 + jnp.abs(nrm((c,)))).astype(F32))

    # NOTE: conv1 weight is stored HWIO.  Real PyTorch Conv2d weights are OIHW and
    # must be permuted with w.transpose(2, 3, 1, 0) before use here.
    return dict(
        conv1_w=nrm((3, 3, inp_dim, inp_dim)),     # HWIO; Conv ignores `group`
        bn1=bn_params(inp_dim),
        conv2_w=nrm((inp_dim, 4 * inp_dim)),
        conv3_w=nrm((4 * inp_dim, out_dim)),
        bn3=bn_params(out_dim),
    )


def irmlp_forward(params, x_nchw):
    B, C, H, W = x_nchw.shape
    # NHWC internally; bf16 input halves the kernel's input DMA bytes.
    x = jnp.transpose(x_nchw, (0, 2, 3, 1)).astype(MXU_DTYPE)

    s1, t1 = _bn_affine(**params["bn1"])
    s3, t3 = _bn_affine(**params["bn3"])
    w1 = params["conv1_w"].reshape(9 * C, C)                 # rows = (kh, kw, cin)

    y = irmlp_fused(x, w1, s1, t1, params["conv2_w"], params["conv3_w"], s3, t3)
    Cout = y.shape[-1]
    # (B, H*W, Cout) -> (B, H, W, Cout) is a free reshape; transpose back to NCHW
    # to match the PyTorch module interface.
    return jnp.transpose(y.reshape(B, H, W, Cout), (0, 3, 1, 2))


def irmlp_reference(params, x_nchw):
    """Pure-JAX f32 reference (same tanh-GELU), for numerical cross-check."""
    x = jnp.transpose(x_nchw, (0, 2, 3, 1)).astype(F32)
    out = jax.lax.conv_general_dilated(
        x, params["conv1_w"], window_strides=(1, 1), padding="SAME",
        dimension_numbers=("NHWC", "HWIO", "NHWC"))
    out = _gelu(out) + x
    s1, t1 = _bn_affine(**params["bn1"])
    out = out * s1.reshape(1, 1, 1, -1) + t1.reshape(1, 1, 1, -1)
    out = _gelu(jnp.einsum("bhwc,cd->bhwd", out, params["conv2_w"]))
    out = jnp.einsum("bhwc,cd->bhwd", out, params["conv3_w"])
    s3, t3 = _bn_affine(**params["bn3"])
    out = out * s3.reshape(1, 1, 1, -1) + t3.reshape(1, 1, 1, -1)
    return jnp.transpose(out, (0, 3, 1, 2))


if __name__ == "__main__":
    B, H, W = 2, 16, 16
    inp_dim, out_dim = 8, 8
    key = jax.random.PRNGKey(0)
    kx, kp = jax.random.split(key)
    x = jax.random.normal(kx, (B, inp_dim, H, W), F32)
    params = init_irmlp_params(kp, inp_dim, out_dim)

    out = jax.block_until_ready(irmlp_forward(params, x))
    assert out.shape == (B, out_dim, H, W), out.shape
    assert bool(jnp.all(jnp.isfinite(out)))

    ref = irmlp_reference(params, x)
    max_err = float(jnp.max(jnp.abs(out - ref)))
    assert max_err < 5e-2, max_err   # bf16 operands / bf16 input, f32 accumulation
    print("KERNEL_OK")
</pallas_src>

<mosaic_0001>
module attributes {stable_mosaic.version = 11 : i64} {
  func.func @_irmlp_fused_kernel(%arg0: i32, %arg1: memref<1x16x16x8xbf16, #tpu.memory_space<vmem>>, %arg2: memref<72x8xbf16, #tpu.memory_space<vmem>>, %arg3: memref<1x8xf32, #tpu.memory_space<vmem>>, %arg4: memref<1x8xf32, #tpu.memory_space<vmem>>, %arg5: memref<8x32xbf16, #tpu.memory_space<vmem>>, %arg6: memref<32x8xbf16, #tpu.memory_space<vmem>>, %arg7: memref<1x8xf32, #tpu.memory_space<vmem>>, %arg8: memref<1x8xf32, #tpu.memory_space<vmem>>, %arg9: memref<1x256x8xf32, #tpu.memory_space<vmem>>, %arg10: memref<18x18x8xbf16, #tpu.memory_space<vmem>>) attributes {dimension_semantics = [#tpu.dimension_semantics<parallel>], iteration_bounds = array<i64: 2>, scalar_prefetch = 0 : i64, scratch_operands = 1 : i64, tpu.core_type = #tpu.core_type<tc>, window_params = [{transform_indices = @transform_0, window_bounds = array<i64: 1, 16, 16, 8>}, {pipeline_mode = #tpu.pipeline_mode<synchronous>, transform_indices = @transform_1, window_bounds = array<i64: 72, 8>}, {pipeline_mode = #tpu.pipeline_mode<synchronous>, transform_indices = @transform_2, window_bounds = array<i64: 1, 8>}, {pipeline_mode = #tpu.pipeline_mode<synchronous>, transform_indices = @transform_3, window_bounds = array<i64: 1, 8>}, {pipeline_mode = #tpu.pipeline_mode<synchronous>, transform_indices = @transform_4, window_bounds = array<i64: 8, 32>}, {pipeline_mode = #tpu.pipeline_mode<synchronous>, transform_indices = @transform_5, window_bounds = array<i64: 32, 8>}, {pipeline_mode = #tpu.pipeline_mode<synchronous>, transform_indices = @transform_6, window_bounds = array<i64: 1, 8>}, {pipeline_mode = #tpu.pipeline_mode<synchronous>, transform_indices = @transform_7, window_bounds = array<i64: 1, 8>}, {transform_indices = @transform_8, window_bounds = array<i64: 1, 256, 8>}]} {
    %c0 = arith.constant 0 : index
    %c0_0 = arith.constant 0 : index
    %c0_1 = arith.constant 0 : index
    %c0_2 = arith.constant 0 : index
    %0 = vector.load %arg1[%c0, %c0_0, %c0_1, %c0_2] : memref<1x16x16x8xbf16, #tpu.memory_space<vmem>>, vector<1x16x16x8xbf16>
    %1 = vector.shape_cast %0 : vector<1x16x16x8xbf16> to vector<16x16x8xbf16>
    %cst = arith.constant 0.000000e+00 : bf16
    %2 = vector.broadcast %cst : bf16 to vector<1x18x8xbf16>
    %cst_3 = arith.constant 0.000000e+00 : bf16
    %3 = vector.broadcast %cst_3 : bf16 to vector<18x1x8xbf16>
    %c0_4 = arith.constant 0 : index
    %c0_5 = arith.constant 0 : index
    %c0_6 = arith.constant 0 : index
    %4 = vector.load %arg10[%c0_4, %c0_5, %c0_6] : memref<18x18x8xbf16, #tpu.memory_space<vmem>>, vector<1x18x8xbf16>
    tpu.vector_store %arg10[%c0_4, %c0_5, %c0_6], %2 {strides = array<i32>} : memref<18x18x8xbf16, #tpu.memory_space<vmem>>, vector<1x18x8xbf16>,
    %c17 = arith.constant 17 : index
    %c0_7 = arith.constant 0 : index
    %c0_8 = arith.constant 0 : index
    %5 = vector.load %arg10[%c17, %c0_7, %c0_8] : memref<18x18x8xbf16, #tpu.memory_space<vmem>>, vector<1x18x8xbf16>
    tpu.vector_store %arg10[%c17, %c0_7, %c0_8], %2 {strides = array<i32>} : memref<18x18x8xbf16, #tpu.memory_space<vmem>>, vector<1x18x8xbf16>,
    %c0_9 = arith.constant 0 : index
    %c0_10 = arith.constant 0 : index
    %c0_11 = arith.constant 0 : index
    %6 = vector.load %arg10[%c0_9, %c0_10, %c0_11] : memref<18x18x8xbf16, #tpu.memory_space<vmem>>, vector<18x1x8xbf16>
    tpu.vector_store %arg10[%c0_9, %c0_10, %c0_11], %3 {strides = array<i32>} : memref<18x18x8xbf16, #tpu.memory_space<vmem>>, vector<18x1x8xbf16>,
    %c0_12 = arith.constant 0 : index
    %c17_13 = arith.constant 17 : index
    %c0_14 = arith.constant 0 : index
    %7 = vector.load %arg10[%c0_12, %c17_13, %c0_14] : memref<18x18x8xbf16, #tpu.memory_space<vmem>>, vector<18x1x8xbf16>
    tpu.vector_store %arg10[%c0_12, %c17_13, %c0_14], %3 {strides = array<i32>} : memref<18x18x8xbf16, #tpu.memory_space<vmem>>, vector<18x1x8xbf16>,
    %c1 = arith.constant 1 : index
    %c1_15 = arith.constant 1 : index
    %c0_16 = arith.constant 0 : index
    %8 = vector.load %arg10[%c1, %c1_15, %c0_16] : memref<18x18x8xbf16, #tpu.memory_space<vmem>>, vector<16x16x8xbf16>
    tpu.vector_store %arg10[%c1, %c1_15, %c0_16], %1 {strides = array<i32>} : memref<18x18x8xbf16, #tpu.memory_space<vmem>>, vector<16x16x8xbf16>,
    %cst_17 = arith.constant 0.000000e+00 : f32
    %9 = vector.broadcast %cst_17 : f32 to vector<256x8xf32>
    %c0_18 = arith.constant 0 : index
    %c0_19 = arith.constant 0 : index
    %c0_20 = arith.constant 0 : index
    %10 = vector.load %arg10[%c0_18, %c0_19, %c0_20] : memref<18x18x8xbf16, #tpu.memory_space<vmem>>, vector<16x16x8xbf16>
    %11 = vector.shape_cast %10 : vector<16x16x8xbf16> to vector<256x8xbf16>
    %c0_21 = arith.constant 0 : index
    %c0_22 = arith.constant 0 : index
    %12 = vector.load %arg2[%c0_21, %c0_22] : memref<72x8xbf16, #tpu.memory_space<vmem>>, vector<8x8xbf16>
    %cst_23 = arith.constant dense<0.000000e+00> : vector<256x8xf32>
    %13 = tpu.matmul %11, %12, %cst_23 {dimension_numbers = #tpu.dot_dimension_numbers<[1], [0], [0], [1], [0, 0, 1, 1], [], []>} : vector<256x8xbf16>, vector<8x8xbf16>, vector<256x8xf32> -> vector<256x8xf32>
    %14 = arith.addf %9, %13 : vector<256x8xf32>
    %c0_24 = arith.constant 0 : index
    %c1_25 = arith.constant 1 : index
    %c0_26 = arith.constant 0 : index
    %15 = vector.load %arg10[%c0_24, %c1_25, %c0_26] : memref<18x18x8xbf16, #tpu.memory_space<vmem>>, vector<16x16x8xbf16>
    %16 = vector.shape_cast %15 : vector<16x16x8xbf16> to vector<256x8xbf16>
    %c8 = arith.constant 8 : index
    %c0_27 = arith.constant 0 : index
    %17 = vector.load %arg2[%c8, %c0_27] : memref<72x8xbf16, #tpu.memory_space<vmem>>, vector<8x8xbf16>
    %cst_28 = arith.constant dense<0.000000e+00> : vector<256x8xf32>
    %18 = tpu.matmul %16, %17, %cst_28 {dimension_numbers = #tpu.dot_dimension_numbers<[1], [0], [0], [1], [0, 0, 1, 1], [], []>} : vector<256x8xbf16>, vector<8x8xbf16>, vector<256x8xf32> -> vector<256x8xf32>
    %19 = arith.addf %14, %18 : vector<256x8xf32>
    %c0_29 = arith.constant 0 : index
    %c2 = arith.constant 2 : index
    %c0_30 = arith.constant 0 : index
    %20 = vector.load %arg10[%c0_29, %c2, %c0_30] : memref<18x18x8xbf16, #tpu.memory_space<vmem>>, vector<16x16x8xbf16>
    %21 = vector.shape_cast %20 : vector<16x16x8xbf16> to vector<256x8xbf16>
    %c16 = arith.constant 16 : index
    %c0_31 = arith.constant 0 : index
    %22 = vector.load %arg2[%c16, %c0_31] : memref<72x8xbf16, #tpu.memory_space<vmem>>, vector<8x8xbf16>
    %cst_32 = arith.constant dense<0.000000e+00> : vector<256x8xf32>
    %23 = tpu.matmul %21, %22, %cst_32 {dimension_numbers = #tpu.dot_dimension_numbers<[1], [0], [0], [1], [0, 0, 1, 1], [], []>} : vector<256x8xbf16>, vector<8x8xbf16>, vector<256x8xf32> -> vector<256x8xf32>
    %24 = arith.addf %19, %23 : vector<256x8xf32>
    %c1_33 = arith.constant 1 : index
    %c0_34 = arith.constant 0 : index
    %c0_35 = arith.constant 0 : index
    %25 = vector.load %arg10[%c1_33, %c0_34, %c0_35] : memref<18x18x8xbf16, #tpu.memory_space<vmem>>, vector<16x16x8xbf16>
    %26 = vector.shape_cast %25 : vector<16x16x8xbf16> to vector<256x8xbf16>
    %c24 = arith.constant 24 : index
    %c0_36 = arith.constant 0 : index
    %27 = vector.load %arg2[%c24, %c0_36] : memref<72x8xbf16, #tpu.memory_space<vmem>>, vector<8x8xbf16>
    %cst_37 = arith.constant dense<0.000000e+00> : vector<256x8xf32>
    %28 = tpu.matmul %26, %27, %cst_37 {dimension_numbers = #tpu.dot_dimension_numbers<[1], [0], [0], [1], [0, 0, 1, 1], [], []>} : vector<256x8xbf16>, vector<8x8xbf16>, vector<256x8xf32> -> vector<256x8xf32>
    %29 = arith.addf %24, %28 : vector<256x8xf32>
    %c1_38 = arith.constant 1 : index
    %c1_39 = arith.constant 1 : index
    %c0_40 = arith.constant 0 : index
    %30 = vector.load %arg10[%c1_38, %c1_39, %c0_40] : memref<18x18x8xbf16, #tpu.memory_space<vmem>>, vector<16x16x8xbf16>
    %31 = vector.shape_cast %30 : vector<16x16x8xbf16> to vector<256x8xbf16>
    %c32 = arith.constant 32 : index
    %c0_41 = arith.constant 0 : index
    %32 = vector.load %arg2[%c32, %c0_41] : memref<72x8xbf16, #tpu.memory_space<vmem>>, vector<8x8xbf16>
    %cst_42 = arith.constant dense<0.000000e+00> : vector<256x8xf32>
    %33 = tpu.matmul %31, %32, %cst_42 {dimension_numbers = #tpu.dot_dimension_numbers<[1], [0], [0], [1], [0, 0, 1, 1], [], []>} : vector<256x8xbf16>, vector<8x8xbf16>, vector<256x8xf32> -> vector<256x8xf32>
    %34 = arith.addf %29, %33 : vector<256x8xf32>
    %c1_43 = arith.constant 1 : index
    %c2_44 = arith.constant 2 : index
    %c0_45 = arith.constant 0 : index
    %35 = vector.load %arg10[%c1_43, %c2_44, %c0_45] : memref<18x18x8xbf16, #tpu.memory_space<vmem>>, vector<16x16x8xbf16>
    %36 = vector.shape_cast %35 : vector<16x16x8xbf16> to vector<256x8xbf16>
    %c40 = arith.constant 40 : index
    %c0_46 = arith.constant 0 : index
    %37 = vector.load %arg2[%c40, %c0_46] : memref<72x8xbf16, #tpu.memory_space<vmem>>, vector<8x8xbf16>
    %cst_47 = arith.constant dense<0.000000e+00> : vector<256x8xf32>
    %38 = tpu.matmul %36, %37, %cst_47 {dimension_numbers = #tpu.dot_dimension_numbers<[1], [0], [0], [1], [0, 0, 1, 1], [], []>} : vector<256x8xbf16>, vector<8x8xbf16>, vector<256x8xf32> -> vector<256x8xf32>
    %39 = arith.addf %34, %38 : vector<256x8xf32>
    %c2_48 = arith.constant 2 : index
    %c0_49 = arith.constant 0 : index
    %c0_50 = arith.constant 0 : index
    %40 = vector.load %arg10[%c2_48, %c0_49, %c0_50] : memref<18x18x8xbf16, #tpu.memory_space<vmem>>, vector<16x16x8xbf16>
    %41 = vector.shape_cast %40 : vector<16x16x8xbf16> to vector<256x8xbf16>
    %c48 = arith.constant 48 : index
    %c0_51 = arith.constant 0 : index
    %42 = vector.load %arg2[%c48, %c0_51] : memref<72x8xbf16, #tpu.memory_space<vmem>>, vector<8x8xbf16>
    %cst_52 = arith.constant dense<0.000000e+00> : vector<256x8xf32>
    %43 = tpu.matmul %41, %42, %cst_52 {dimension_numbers = #tpu.dot_dimension_numbers<[1], [0], [0], [1], [0, 0, 1, 1], [], []>} : vector<256x8xbf16>, vector<8x8xbf16>, vector<256x8xf32> -> vector<256x8xf32>
    %44 = arith.addf %39, %43 : vector<256x8xf32>
    %c2_53 = arith.constant 2 : index
    %c1_54 = arith.constant 1 : index
    %c0_55 = arith.constant 0 : index
    %45 = vector.load %arg10[%c2_53, %c1_54, %c0_55] : memref<18x18x8xbf16, #tpu.memory_space<vmem>>, vector<16x16x8xbf16>
    %46 = vector.shape_cast %45 : vector<16x16x8xbf16> to vector<256x8xbf16>
    %c56 = arith.constant 56 : index
    %c0_56 = arith.constant 0 : index
    %47 = vector.load %arg2[%c56, %c0_56] : memref<72x8xbf16, #tpu.memory_space<vmem>>, vector<8x8xbf16>
    %cst_57 = arith.constant dense<0.000000e+00> : vector<256x8xf32>
    %48 = tpu.matmul %46, %47, %cst_57 {dimension_numbers = #tpu.dot_dimension_numbers<[1], [0], [0], [1], [0, 0, 1, 1], [], []>} : vector<256x8xbf16>, vector<8x8xbf16>, vector<256x8xf32> -> vector<256x8xf32>
    %49 = arith.addf %44, %48 : vector<256x8xf32>
    %c2_58 = arith.constant 2 : index
    %c2_59 = arith.constant 2 : index
    %c0_60 = arith.constant 0 : index
    %50 = vector.load %arg10[%c2_58, %c2_59, %c0_60] : memref<18x18x8xbf16, #tpu.memory_space<vmem>>, vector<16x16x8xbf16>
    %51 = vector.shape_cast %50 : vector<16x16x8xbf16> to vector<256x8xbf16>
    %c64 = arith.constant 64 : index
    %c0_61 = arith.constant 0 : index
    %52 = vector.load %arg2[%c64, %c0_61] : memref<72x8xbf16, #tpu.memory_space<vmem>>, vector<8x8xbf16>
    %cst_62 = arith.constant dense<0.000000e+00> : vector<256x8xf32>
    %53 = tpu.matmul %51, %52, %cst_62 {dimension_numbers = #tpu.dot_dimension_numbers<[1], [0], [0], [1], [0, 0, 1, 1], [], []>} : vector<256x8xbf16>, vector<8x8xbf16>, vector<256x8xf32> -> vector<256x8xf32>
    %54 = arith.addf %49, %53 : vector<256x8xf32>
    %55 = arith.mulf %54, %54 : vector<256x8xf32>
    %56 = arith.mulf %54, %55 : vector<256x8xf32>
    %cst_63 = arith.constant 4.471500e-02 : f32
    %57 = vector.broadcast %cst_63 : f32 to vector<256x8xf32>
    %58 = arith.mulf %57, %56 : vector<256x8xf32>
    %59 = arith.addf %54, %58 : vector<256x8xf32>
    %cst_64 = arith.constant 0.797884583 : f32
    %60 = vector.broadcast %cst_64 : f32 to vector<256x8xf32>
    %61 = arith.mulf %60, %59 : vector<256x8xf32>
    %62 = math.tanh %61 : vector<256x8xf32>
    %cst_65 = arith.constant 1.000000e+00 : f32
    %63 = vector.broadcast %cst_65 : f32 to vector<256x8xf32>
    %64 = arith.addf %63, %62 : vector<256x8xf32>
    %cst_66 = arith.constant 5.000000e-01 : f32
    %65 = vector.broadcast %cst_66 : f32 to vector<256x8xf32>
    %66 = arith.mulf %65, %64 : vector<256x8xf32>
    %67 = arith.mulf %54, %66 : vector<256x8xf32>
    %68 = vector.shape_cast %1 : vector<16x16x8xbf16> to vector<256x8xbf16>
    %69 = arith.extf %68 : vector<256x8xbf16> to vector<256x8xf32>
    %70 = arith.addf %67, %69 : vector<256x8xf32>
    %c0_67 = arith.constant 0 : index
    %c0_68 = arith.constant 0 : index
    %71 = vector.load %arg3[%c0_67, %c0_68] : memref<1x8xf32, #tpu.memory_space<vmem>>, vector<1x8xf32>
    %72 = vector.broadcast %71 : vector<1x8xf32> to vector<256x8xf32>
    %73 = arith.mulf %70, %72 : vector<256x8xf32>
    %c0_69 = arith.constant 0 : index
    %c0_70 = arith.constant 0 : index
    %74 = vector.load %arg4[%c0_69, %c0_70] : memref<1x8xf32, #tpu.memory_space<vmem>>, vector<1x8xf32>
    %75 = vector.broadcast %74 : vector<1x8xf32> to vector<256x8xf32>
    %76 = arith.addf %73, %75 : vector<256x8xf32>
    %77 = arith.truncf %76 : vector<256x8xf32> to vector<256x8xbf16>
    %c0_71 = arith.constant 0 : index
    %c0_72 = arith.constant 0 : index
    %78 = vector.load %arg5[%c0_71, %c0_72] : memref<8x32xbf16, #tpu.memory_space<vmem>>, vector<8x32xbf16>
    %cst_73 = arith.constant dense<0.000000e+00> : vector<256x32xf32>
    %79 = tpu.matmul %77, %78, %cst_73 {dimension_numbers = #tpu.dot_dimension_numbers<[1], [0], [0], [1], [0, 0, 1, 1], [], []>} : vector<256x8xbf16>, vector<8x32xbf16>, vector<256x32xf32> -> vector<256x32xf32>
    %80 = arith.mulf %79, %79 : vector<256x32xf32>
    %81 = arith.mulf %79, %80 : vector<256x32xf32>
    %cst_74 = arith.constant 4.471500e-02 : f32
    %82 = vector.broadcast %cst_74 : f32 to vector<256x32xf32>
    %83 = arith.mulf %82, %81 : vector<256x32xf32>
    %84 = arith.addf %79, %83 : vector<256x32xf32>
    %cst_75 = arith.constant 0.797884583 : f32
    %85 = vector.broadcast %cst_75 : f32 to vector<256x32xf32>
    %86 = arith.mulf %85, %84 : vector<256x32xf32>
    %87 = math.tanh %86 : vector<256x32xf32>
    %cst_76 = arith.constant 1.000000e+00 : f32
    %88 = vector.broadcast %cst_76 : f32 to vector<256x32xf32>
    %89 = arith.addf %88, %87 : vector<256x32xf32>
    %cst_77 = arith.constant 5.000000e-01 : f32
    %90 = vector.broadcast %cst_77 : f32 to vector<256x32xf32>
    %91 = arith.mulf %90, %89 : vector<256x32xf32>
    %92 = arith.mulf %79, %91 : vector<256x32xf32>
    %93 = arith.truncf %92 : vector<256x32xf32> to vector<256x32xbf16>
    %c0_78 = arith.constant 0 : index
    %c0_79 = arith.constant 0 : index
    %94 = vector.load %arg6[%c0_78, %c0_79] : memref<32x8xbf16, #tpu.memory_space<vmem>>, vector<32x8xbf16>
    %cst_80 = arith.constant dense<0.000000e+00> : vector<256x8xf32>
    %95 = tpu.matmul %93, %94, %cst_80 {dimension_numbers = #tpu.dot_dimension_numbers<[1], [0], [0], [1], [0, 0, 1, 1], [], []>} : vector<256x32xbf16>, vector<32x8xbf16>, vector<256x8xf32> -> vector<256x8xf32>
    %c0_81 = arith.constant 0 : index
    %c0_82 = arith.constant 0 : index
    %96 = vector.load %arg7[%c0_81, %c0_82] : memref<1x8xf32, #tpu.memory_space<vmem>>, vector<1x8xf32>
    %97 = vector.broadcast %96 : vector<1x8xf32> to vector<256x8xf32>
    %98 = arith.mulf %95, %97 : vector<256x8xf32>
    %c0_83 = arith.constant 0 : index
    %c0_84 = arith.constant 0 : index
    %99 = vector.load %arg8[%c0_83, %c0_84] : memref<1x8xf32, #tpu.memory_space<vmem>>, vector<1x8xf32>
    %100 = vector.broadcast %99 : vector<1x8xf32> to vector<256x8xf32>
    %101 = arith.addf %98, %100 : vector<256x8xf32>
    %c0_85 = arith.constant 0 : index
    %c0_86 = arith.constant 0 : index
    %c0_87 = arith.constant 0 : index
    %102 = vector.load %arg9[%c0_85, %c0_86, %c0_87] : memref<1x256x8xf32, #tpu.memory_space<vmem>>, vector<1x256x8xf32>
    %103 = vector.shape_cast %102 : vector<1x256x8xf32> to vector<256x8xf32>
    %104 = vector.shape_cast %101 : vector<256x8xf32> to vector<1x256x8xf32>
    tpu.vector_store %arg9[%c0_85, %c0_86, %c0_87], %104 {strides = array<i32>} : memref<1x256x8xf32, #tpu.memory_space<vmem>>, vector<1x256x8xf32>,
    return
  }
  func.func @transform_0(%arg0: i32) -> (i32, i32, i32, i32) {
    %c0_i32 = arith.constant 0 : i32
    %c0_i32_0 = arith.constant 0 : i32
    %c0_i32_1 = arith.constant 0 : i32
    %c0_i32_2 = arith.constant 0 : i32
    return %arg0, %c0_i32, %c0_i32_0, %c0_i32_1 : i32, i32, i32, i32
  }
  func.func @transform_1(%arg0: i32) -> (i32, i32) {
    %c0_i32 = arith.constant 0 : i32
    %c0_i32_0 = arith.constant 0 : i32
    %c0_i32_1 = arith.constant 0 : i32
    return %c0_i32, %c0_i32_0 : i32, i32
  }
  func.func @transform_2(%arg0: i32) -> (i32, i32) {
    %c0_i32 = arith.constant 0 : i32
    %c0_i32_0 = arith.constant 0 : i32
    %c0_i32_1 = arith.constant 0 : i32
    return %c0_i32, %c0_i32_0 : i32, i32
  }
  func.func @transform_3(%arg0: i32) -> (i32, i32) {
    %c0_i32 = arith.constant 0 : i32
    %c0_i32_0 = arith.constant 0 : i32
    %c0_i32_1 = arith.constant 0 : i32
    return %c0_i32, %c0_i32_0 : i32, i32
  }
  func.func @transform_4(%arg0: i32) -> (i32, i32) {
    %c0_i32 = arith.constant 0 : i32
    %c0_i32_0 = arith.constant 0 : i32
    %c0_i32_1 = arith.constant 0 : i32
    return %c0_i32, %c0_i32_0 : i32, i32
  }
  func.func @transform_5(%arg0: i32) -> (i32, i32) {
    %c0_i32 = arith.constant 0 : i32
    %c0_i32_0 = arith.constant 0 : i32
    %c0_i32_1 = arith.constant 0 : i32
    return %c0_i32, %c0_i32_0 : i32, i32
  }
  func.func @transform_6(%arg0: i32) -> (i32, i32) {
    %c0_i32 = arith.constant 0 : i32
    %c0_i32_0 = arith.constant 0 : i32
    %c0_i32_1 = arith.constant 0 : i32
    return %c0_i32, %c0_i32_0 : i32, i32
  }
  func.func @transform_7(%arg0: i32) -> (i32, i32) {
    %c0_i32 = arith.constant 0 : i32
    %c0_i32_0 = arith.constant 0 : i32
    %c0_i32_1 = arith.constant 0 : i32
    return %c0_i32, %c0_i32_0 : i32, i32
  }
  func.func @transform_8(%arg0: i32) -> (i32, i32, i32) {
    %c0_i32 = arith.constant 0 : i32
    %c0_i32_0 = arith.constant 0 : i32
    %c0_i32_1 = arith.constant 0 : i32
    return %arg0, %c0_i32, %c0_i32_0 : i32, i32, i32
  }
}

</mosaic_0001>

<llo_original>
// kernel: tpu_custom_call.1
$region0: #{tpu_custom_call.1}
  #allocation0 [shape = 'u32[]', space=smem, size = 0x4, offset = 0x4, fixed_abs, tag = 'smem constant byte address 0x4 - core index']
  #allocation1 [shape = 'u32[72,128]{1,0:T(1,128)}', space=vmem, size = 0x9000, scoped, tag = 'internal scratch']
  #allocation2 [shape = 'bf16[18,18,8]{2,1,0:T(8,128)(2,1)}', space=vmem, size = 0x1b000, scoped, tag = 'scratch operand']
  %s0 = inlined_call_operand.vmem [shape: bf16[2,16,16,8], index: 0, kind: input, shape index: {}]
  %s1 = inlined_call_operand.vmem [shape: bf16[72,8], index: 1, kind: input, shape index: {}]
  %s2 = inlined_call_operand.vmem [shape: f32[1,8], index: 2, kind: input, shape index: {}]
  %s3 = inlined_call_operand.vmem [shape: f32[1,8], index: 3, kind: input, shape index: {}]
  %s4 = inlined_call_operand.vmem [shape: bf16[8,32], index: 4, kind: input, shape index: {}]
  %s5 = inlined_call_operand.vmem [shape: bf16[32,8], index: 5, kind: input, shape index: {}]
  %s6 = inlined_call_operand.vmem [shape: f32[1,8], index: 6, kind: input, shape index: {}]
  %s7 = inlined_call_operand.vmem [shape: f32[1,8], index: 7, kind: input, shape index: {}]
  %s8 = inlined_call_operand.vmem [shape: f32[2,256,8], index: 8, kind: output, shape index: {}]
  %s9 = sld [smem:[#allocation0]]
  $region65: #{tpu_custom_call.1} parent=0
    _
  %s11 = ssub.s32 1, %s9
  %s12 = scalar_select 0, %s11, %s9
  loop: start=0, step=1, limit=4
  $region2: #{tpu_custom_call.1} parent=0 // loop_pre_header
    _
  $region3: #{tpu_custom_call.1} parent=0 // loop_header
    %s14 = sphi 0, %s18
    %p15 = scmp.ge.s32.totalorder %s14, 4
    %s24 = sphi 0, %s26
    %s27 = sphi 0, %s24
    %s28 = sphi 0, %s27
    %s44 = sphi 0, %s28
    %s48 = sphi 0, %s48
    %s50 = sphi 0, %s48
    %s51 = sphi 0, %s50
    %s65 = sphi 0, %s51
    %s69 = sphi 0, %s69
    %s71 = sphi 0, %s69
    %s72 = sphi 0, %s71
    %s86 = sphi 0, %s72
    %s90 = sphi 0, %s90
    %s92 = sphi 0, %s90
    %s93 = sphi 0, %s92
    %s107 = sphi 0, %s93
    %s111 = sphi 0, %s111
    %s113 = sphi 0, %s111
    %s114 = sphi 0, %s113
    %s128 = sphi 0, %s114
    %s132 = sphi 0, %s132
    %s134 = sphi 0, %s132
    %s135 = sphi 0, %s134
    %s149 = sphi 0, %s135
    %s153 = sphi 0, %s153
    %s155 = sphi 0, %s153
    %s156 = sphi 0, %s155
    %s170 = sphi 0, %s156
    %s174 = sphi 0, %s174
    %s176 = sphi 0, %s174
    %s177 = sphi 0, %s176
    %s191 = sphi 0, %s177
    %s197 = sphi 0, %s199
    %s200 = sphi 0, %s197
    %s201 = sphi 0, %s200
    %s217 = sphi 0, %s201
  $region4: #{tpu_custom_call.1} parent=0 // loop_header_branch
    %17 = sbr.rel (%p15) target = $region8
  $region5: #{tpu_custom_call.1} parent=0 // loop_body
    %s19 = ssub.s32 %s14, 1
    %s20 = ssub.s32 %s14, 2
    %s21 = sadd.s32 %s14, 1
    %s22 = ssub.s32 %s14, %s21
    %p23 = scmp.eq.s32.totalorder %s22, 0
    %s25 = sadd.s32 %s24, 1
    %s26 = scalar_select %p23, %s24, %s25
    %p29 = pneg %p23
    %p30 = scmp.eq.s32.totalorder %s14, 1
    %p31 = por %p29, %p30
    %p32 = scmp.ne.s32.totalorder %s24, %s27
    %p33 = scmp.eq.s32.totalorder %s14, 0
    %p34 = por %p32, %p33
    %p35 = scmp.ne.s32.totalorder %s24, %s27
    %p36 = scmp.eq.s32.totalorder %s19, 1
    %p37 = por %p35, %p36
    %p38 = scmp.ne.s32.totalorder %s27, %s28
    %p39 = scmp.eq.s32.totalorder %s19, 0
    %p40 = por %p38, %p39
    %p41 = scmp.ne.s32.totalorder %s27, %s28
    %p42 = scmp.eq.s32.totalorder %s20, 1
    %p43 = por %p41, %p42
    %p45 = scmp.ne.s32.totalorder %s28, %s44
    %p46 = scmp.eq.s32.totalorder %s20, 0
    %p47 = por %p45, %p46
    %s49 = sadd.s32 %s48, 1
    %p52 = scmp.eq.s32.totalorder %s14, 1
    %p53 = scmp.ne.s32.totalorder %s48, %s50
    %p54 = scmp.eq.s32.totalorder %s14, 0
    %p55 = por %p53, %p54
    %p56 = scmp.ne.s32.totalorder %s48, %s50
    %p57 = scmp.eq.s32.totalorder %s19, 1
    %p58 = por %p56, %p57
    %p59 = scmp.ne.s32.totalorder %s50, %s51
    %p60 = scmp.eq.s32.totalorder %s19, 0
    %p61 = por %p59, %p60
    %p62 = scmp.ne.s32.totalorder %s50, %s51
    %p63 = scmp.eq.s32.totalorder %s20, 1
    %p64 = por %p62, %p63
    %p66 = scmp.ne.s32.totalorder %s51, %s65
    %p67 = scmp.eq.s32.totalorder %s20, 0
    %p68 = por %p66, %p67
    %s70 = sadd.s32 %s69, 1
    %p73 = scmp.eq.s32.totalorder %s14, 1
    %p74 = scmp.ne.s32.totalorder %s69, %s71
    %p75 = scmp.eq.s32.totalorder %s14, 0
    %p76 = por %p74, %p75
    %p77 = scmp.ne.s32.totalorder %s69, %s71
    %p78 = scmp.eq.s32.totalorder %s19, 1
    %p79 = por %p77, %p78
    %p80 = scmp.ne.s32.totalorder %s71, %s72
    %p81 = scmp.eq.s32.totalorder %s19, 0
    %p82 = por %p80, %p81
    %p83 = scmp.ne.s32.totalorder %s71, %s72
    %p84 = scmp.eq.s32.totalorder %s20, 1
    %p85 = por %p83, %p84
    %p87 = scmp.ne.s32.totalorder %s72, %s86
    %p88 = scmp.eq.s32.totalorder %s20, 0
    %p89 = por %p87, %p88
    %s91 = sadd.s32 %s90, 1
    %p94 = scmp.eq.s32.totalorder %s14, 1
    %p95 = scmp.ne.s32.totalorder %s90, %s92
    %p96 = scmp.eq.s32.totalorder %s14, 0
    %p97 = por %p95, %p96
    %p98 = scmp.ne.s32.totalorder %s90, %s92
    %p99 = scmp.eq.s32.totalorder %s19, 1
    %p100 = por %p98, %p99
    %p101 = scmp.ne.s32.totalorder %s92, %s93
    %p102 = scmp.eq.s32.totalorder %s19, 0
    %p103 = por %p101, %p102
    %p104 = scmp.ne.s32.totalorder %s92, %s93
    %p105 = scmp.eq.s32.totalorder %s20, 1
    %p106 = por %p104, %p105
    %p108 = scmp.ne.s32.totalorder %s93, %s107
    %p109 = scmp.eq.s32.totalorder %s20, 0
    %p110 = por %p108, %p109
    %s112 = sadd.s32 %s111, 1
    %p115 = scmp.eq.s32.totalorder %s14, 1
    %p116 = scmp.ne.s32.totalorder %s111, %s113
    %p117 = scmp.eq.s32.totalorder %s14, 0
    %p118 = por %p116, %p117
    %p119 = scmp.ne.s32.totalorder %s111, %s113
    %p120 = scmp.eq.s32.totalorder %s19, 1
    %p121 = por %p119, %p120
    %p122 = scmp.ne.s32.totalorder %s113, %s114
    %p123 = scmp.eq.s32.totalorder %s19, 0
    %p124 = por %p122, %p123
    %p125 = scmp.ne.s32.totalorder %s113, %s114
    %p126 = scmp.eq.s32.totalorder %s20, 1
    %p127 = por %p125, %p126
    %p129 = scmp.ne.s32.totalorder %s114, %s128
    %p130 = scmp.eq.s32.totalorder %s20, 0
    %p131 = por %p129, %p130
    %s133 = sadd.s32 %s132, 1
    %p136 = scmp.eq.s32.totalorder %s14, 1
    %p137 = scmp.ne.s32.totalorder %s132, %s134
    %p138 = scmp.eq.s32.totalorder %s14, 0
    %p139 = por %p137, %p138
    %p140 = scmp.ne.s32.totalorder %s132, %s134
    %p141 = scmp.eq.s32.totalorder %s19, 1
    %p142 = por %p140, %p141
    %p143 = scmp.ne.s32.totalorder %s134, %s135
    %p144 = scmp.eq.s32.totalorder %s19, 0
    %p145 = por %p143, %p144
    %p146 = scmp.ne.s32.totalorder %s134, %s135
    %p147 = scmp.eq.s32.totalorder %s20, 1
    %p148 = por %p146, %p147
    %p150 = scmp.ne.s32.totalorder %s135, %s149
    %p151 = scmp.eq.s32.totalorder %s20, 0
    %p152 = por %p150, %p151
    %s154 = sadd.s32 %s153, 1
    %p157 = scmp.eq.s32.totalorder %s14, 1
    %p158 = scmp.ne.s32.totalorder %s153, %s155
    %p159 = scmp.eq.s32.totalorder %s14, 0
    %p160 = por %p158, %p159
    %p161 = scmp.ne.s32.totalorder %s153, %s155
    %p162 = scmp.eq.s32.totalorder %s19, 1
    %p163 = por %p161, %p162
    %p164 = scmp.ne.s32.totalorder %s155, %s156
    %p165 = scmp.eq.s32.totalorder %s19, 0
    %p166 = por %p164, %p165
    %p167 = scmp.ne.s32.totalorder %s155, %s156
    %p168 = scmp.eq.s32.totalorder %s20, 1
    %p169 = por %p167, %p168
    %p171 = scmp.ne.s32.totalorder %s156, %s170
    %p172 = scmp.eq.s32.totalorder %s20, 0
    %p173 = por %p171, %p172
    %s175 = sadd.s32 %s174, 1
    %p178 = scmp.eq.s32.totalorder %s14, 1
    %p179 = scmp.ne.s32.totalorder %s174, %s176
    %p180 = scmp.eq.s32.totalorder %s14, 0
    %p181 = por %p179, %p180
    %p182 = scmp.ne.s32.totalorder %s174, %s176
    %p183 = scmp.eq.s32.totalorder %s19, 1
    %p184 = por %p182, %p183
    %p185 = scmp.ne.s32.totalorder %s176, %s177
    %p186 = scmp.eq.s32.totalorder %s19, 0
    %p187 = por %p185, %p186
    %p188 = scmp.ne.s32.totalorder %s176, %s177
    %p189 = scmp.eq.s32.totalorder %s20, 1
    %p190 = por %p188, %p189
    %p192 = scmp.ne.s32.totalorder %s177, %s191
    %p193 = scmp.eq.s32.totalorder %s20, 0
    %p194 = por %p192, %p193
    %s195 = ssub.s32 %s14, %s21
    %p196 = scmp.eq.s32.totalorder %s195, 0
    %s198 = sadd.s32 %s197, 1
    %s199 = scalar_select %p196, %s197, %s198
    %p202 = pneg %p196
    %p203 = scmp.eq.s32.totalorder %s14, 1
    %p204 = por %p202, %p203
    %p205 = scmp.ne.s32.totalorder %s197, %s200
    %p206 = scmp.eq.s32.totalorder %s14, 0
    %p207 = por %p205, %p206
    %p208 = scmp.ne.s32.totalorder %s197, %s200
    %p209 = scmp.eq.s32.totalorder %s19, 1
    %p210 = por %p208, %p209
    %p211 = scmp.ne.s32.totalorder %s200, %s201
    %p212 = scmp.eq.s32.totalorder %s19, 0
    %p213 = por %p211, %p212
    %p214 = scmp.ne.s32.totalorder %s200, %s201
    %p215 = scmp.eq.s32.totalorder %s20, 1
    %p216 = por %p214, %p215
    %p218 = scmp.ne.s32.totalorder %s201, %s217
    %p219 = scmp.eq.s32.totalorder %s20, 0
    %p220 = por %p218, %p219
    %p221 = scmp.le.s32.totalorder 1, %s14
    %p222 = scmp.lt.s32.totalorder %s14, 3
    %p223 = pnand %p221, %p222
    %p224 = pneg %p223
    // Predicated region
    $region9: #{tpu_custom_call.1} parent=5 // pred_check
      _
    $region10: #{tpu_custom_call.1} parent=5 // pred_check_branch
      %226 = sbr.rel (%p223) target = $region12
    $region11: #{tpu_custom_call.1} parent=5 // pred_region
      %s227 = ssub.s32 %s14, 1
      // Predicated region
      $region13: #{tpu_custom_call.1} parent=11 // pred_check
        %p228 = pneg %p61
      $region14: #{tpu_custom_call.1} parent=11 // pred_check_branch
        %230 = sbr.rel (%p228) target = $region16
      $region15: #{tpu_custom_call.1} parent=11 // pred_region
        _
      $region16: #{tpu_custom_call.1} parent=11 // pred_fallthru
        _
      // Predicated region
      $region17: #{tpu_custom_call.1} parent=11 // pred_check
        %p231 = pneg %p82
      $region18: #{tpu_custom_call.1} parent=11 // pred_check_branch
        %233 = sbr.rel (%p231) target = $region20
      $region19: #{tpu_custom_call.1} parent=11 // pred_region
        _
      $region20: #{tpu_custom_call.1} parent=11 // pred_fallthru
        _
      // Predicated region
      $region21: #{tpu_custom_call.1} parent=11 // pred_check
        %p234 = pneg %p103
      $region22: #{tpu_custom_call.1} parent=11 // pred_check_branch
        %236 = sbr.rel (%p234) target = $region24
      $region23: #{tpu_custom_call.1} parent=11 // pred_region
        _
      $region24: #{tpu_custom_call.1} parent=11 // pred_fallthru
        _
      // Predicated region
      $region25: #{tpu_custom_call.1} parent=11 // pred_check
        %p237 = pneg %p124
      $region26: #{tpu_custom_call.1} parent=11 // pred_check_branch
        %239 = sbr.rel (%p237) target = $region28
      $region27: #{tpu_custom_call.1} parent=11 // pred_region
        _
      $region28: #{tpu_custom_call.1} parent=11 // pred_fallthru
        _
      // Predicated region
      $region29: #{tpu_custom_call.1} parent=11 // pred_check
        %p240 = pneg %p145
      $region30: #{tpu_custom_call.1} parent=11 // pred_check_branch
        %242 = sbr.rel (%p240) target = $region32
      $region31: #{tpu_custom_call.1} parent=11 // pred_region
        _
      $region32: #{tpu_custom_call.1} parent=11 // pred_fallthru
        _
      // Predicated region
      $region33: #{tpu_custom_call.1} parent=11 // pred_check
        %p243 = pneg %p166
      $region34: #{tpu_custom_call.1} parent=11 // pred_check_branch
        %245 = sbr.rel (%p243) target = $region36
      $region35: #{tpu_custom_call.1} parent=11 // pred_region
        _
      $region36: #{tpu_custom_call.1} parent=11 // pred_fallthru
        _
      // Predicated region
      $region37: #{tpu_custom_call.1} parent=11 // pred_check
        %p246 = pneg %p187
      $region38: #{tpu_custom_call.1} parent=11 // pred_check_branch
        %248 = sbr.rel (%p246) target = $region40
      $region39: #{tpu_custom_call.1} parent=11 // pred_region
        _
      $region40: #{tpu_custom_call.1} parent=11 // pred_fallthru
        _
    $region12: #{tpu_custom_call.1} parent=5 // pred_fallthru
      _
    %p249 = scmp.lt.s32.totalorder %s14, 2
    // Predicated region
    $region41: #{tpu_custom_call.1} parent=5 // pred_check
      %p250 = pneg %p249
    $region42: #{tpu_custom_call.1} parent=5 // pred_check_branch
      %252 = sbr.rel (%p250) target = $region44
    $region43: #{tpu_custom_call.1} parent=5 // pred_region
      // Predicated region
      $region45: #{tpu_custom_call.1} parent=43 // pred_check
        %p253 = pneg %p34
      $region46: #{tpu_custom_call.1} parent=43 // pred_check_branch
        %255 = sbr.rel (%p253) target = $region48
      $region47: #{tpu_custom_call.1} parent=43 // pred_region
        %p256 = scmp.lt.s32.totalorder %s14, 1
        %s257 = scalar_select %p256, %s14, 1
        %s258 = smul.addr %s257, 32
        %s259 = smul.addr %s258, 4
        %s260 = scalar_lea.vmem %s0, %s259
      $region48: #{tpu_custom_call.1} parent=43 // pred_fallthru
        _
    $region44: #{tpu_custom_call.1} parent=5 // pred_fallthru
      _
    %p261 = scmp.le.s32.totalorder 1, %s14
    %p262 = scmp.lt.s32.totalorder %s14, 3
    %p263 = pnand %p261, %p262
    %p264 = pneg %p263
    // Predicated region
    $region49: #{tpu_custom_call.1} parent=5 // pred_check
      _
    $region50: #{tpu_custom_call.1} parent=5 // pred_check_branch
      %266 = sbr.rel (%p263) target = $region52
    $region51: #{tpu_custom_call.1} parent=5 // pred_region
      %s267 = ssub.s32 %s14, 1
      %p268 = scmp.lt.s32.totalorder %s19, 1
      %s269 = scalar_select %p268, %s19, 1
      %s270 = smul.addr %s269, 32
      %s271 = smul.addr %s270, 4
      %s272 = scalar_lea.vmem %s0, %s271
      %p273 = pneg %p40
      %p274 = pneg %p37
      %p275 = pneg %p61
      %p276 = pneg %p58
      %p277 = pneg %p82
      %p278 = pneg %p79
      %p279 = pneg %p103
      %p280 = pneg %p100
      %p281 = pneg %p124
      %p282 = pneg %p121
      %p283 = pneg %p145
      %p284 = pneg %p142
      %p285 = pneg %p166
      %p286 = pneg %p163
      %p287 = pneg %p187
      %p288 = pneg %p184
      %p289 = pneg %p213
      %p290 = pneg %p210
      %p291 = scmp.lt.s32.totalorder %s19, 1
      %s292 = scalar_select %p291, %s19, 1
      %s293 = smul.addr %s292, 32
      %s294 = smul.addr %s293, 8
      %s295 = scalar_lea.vmem %s8, %s294
      %p296 = scmp.lt.s32.totalorder %s19, 1
      %s297 = scalar_select %p296, %s19, 1
      %s298 = smul.addr %s297, 32
      %s299 = smul.addr %s298, 4
      %s300 = scalar_lea.vmem %s0, %s299
      %p301 = scmp.lt.s32.totalorder %s19, 1
      %s302 = scalar_select %p301, %s19, 1
      %s303 = smul.addr %s302, 32
      %s304 = smul.addr %s303, 8
      %s305 = scalar_lea.vmem %s8, %s304
      %v307 = vld [vmem:[%s300] sm:$0xf]
      %v308 = vld [vmem:[%s300 + $0x4] sm:$0xf]
      %v309 = vld [vmem:[%s300 + $0x8] sm:$0xf]
      %v310 = vld [vmem:[%s300 + $0xc] sm:$0xf]
      %v311 = vld [vmem:[%s300 + $0x10] sm:$0xf]
      %v312 = vld [vmem:[%s300 + $0x14] sm:$0xf]
      %v313 = vld [vmem:[%s300 + $0x18] sm:$0xf]
      %v314 = vld [vmem:[%s300 + $0x1c] sm:$0xf]
      %v315 = vld [vmem:[%s300 + $0x20] sm:$0xf]
      %v316 = vld [vmem:[%s300 + $0x24] sm:$0xf]
      %v317 = vld [vmem:[%s300 + $0x28] sm:$0xf]
      %v318 = vld [vmem:[%s300 + $0x2c] sm:$0xf]
      %v319 = vld [vmem:[%s300 + $0x30] sm:$0xf]
      %v320 = vld [vmem:[%s300 + $0x34] sm:$0xf]
      %v321 = vld [vmem:[%s300 + $0x38] sm:$0xf]
      %v322 = vld [vmem:[%s300 + $0x3c] sm:$0xf]
      %v323 = vld [vmem:[%s300 + $0x40] sm:$0xf]
      %v324 = vld [vmem:[%s300 + $0x44] sm:$0xf]
      %v325 = vld [vmem:[%s300 + $0x48] sm:$0xf]
      %v326 = vld [vmem:[%s300 + $0x4c] sm:$0xf]
      %v327 = vld [vmem:[%s300 + $0x50] sm:$0xf]
      %v328 = vld [vmem:[%s300 + $0x54] sm:$0xf]
      %v329 = vld [vmem:[%s300 + $0x58] sm:$0xf]
      %v330 = vld [vmem:[%s300 + $0x5c] sm:$0xf]
      %v331 = vld [vmem:[%s300 + $0x60] sm:$0xf]
      %v332 = vld [vmem:[%s300 + $0x64] sm:$0xf]
      %v333 = vld [vmem:[%s300 + $0x68] sm:$0xf]
      %v334 = vld [vmem:[%s300 + $0x6c] sm:$0xf]
      %v335 = vld [vmem:[%s300 + $0x70] sm:$0xf]
      %v336 = vld [vmem:[%s300 + $0x74] sm:$0xf]
      %v337 = vld [vmem:[%s300 + $0x78] sm:$0xf]
      %v338 = vld [vmem:[%s300 + $0x7c] sm:$0xf]
      %vm339 = vcmask 60416
      %340 = vst.msk [vmem:[#allocation2] sm:$0xf] %vm339, 0
      %341 = vst.msk [vmem:[#allocation2 + $0x4] sm:$0xf] %vm339, 0
      %vm342 = vcmask 57344
      %343 = vst.msk [vmem:[#allocation2 + $0x8] sm:$0x1] %vm342, 0
      %s344 = scalar_lea.vmem [#allocation2], 204
      %345 = vst.msk [vmem:[%s344] sm:$0xf] %vm339, 0
      %346 = vst.msk [vmem:[%s344 + $0x4] sm:$0xf] %vm339, 0
      %347 = vst.msk [vmem:[%s344 + $0x8] sm:$0x1] %vm342, 0
      %vm348 = vcmask 57344
      %vm349 = vsmask.f32 256
      %vm350 = vmand %vm348, %vm349
      %v351 = vld [vmem:[#allocation2] sm:$0x1]
      %v352 = vsel %vm350, 0, %v351
      %353 = vst [vmem:[#allocation2] sm:$0x1] %v352
      %v354 = vld [vmem:[#allocation2 + $0xc] sm:$0x1]
      %v355 = vsel %vm350, 0, %v354
      %356 = vst [vmem:[#allocation2 + $0xc] sm:$0x1] %v355
      %v357 = vld [vmem:[#allocation2 + $0x18] sm:$0x1]
      %v358 = vsel %vm350, 0, %v357
      %359 = vst [vmem:[#allocation2 + $0x18] sm:$0x1] %v358
      %v360 = vld [vmem:[#allocation2 + $0x24] sm:$0x1]
      %v361 = vsel %vm350, 0, %v360
      %362 = vst [vmem:[#allocation2 + $0x24] sm:$0x1] %v361
      %v363 = vld [vmem:[#allocation2 + $0x30] sm:$0x1]
      %v364 = vsel %vm350, 0, %v363
      %365 = vst [vmem:[#allocation2 + $0x30] sm:$0x1] %v364
      %v366 = vld [vmem:[#allocation2 + $0x3c] sm:$0x1]
      %v367 = vsel %vm350, 0, %v366
      %368 = vst [vmem:[#allocation2 + $0x3c] sm:$0x1] %v367
      %v369 = vld [vmem:[#allocation2 + $0x48] sm:$0x1]
      %v370 = vsel %vm350, 0, %v369
      %371 = vst [vmem:[#allocation2 + $0x48] sm:$0x1] %v370
      %v372 = vld [vmem:[#allocation2 + $0x54] sm:$0x1]
      %v373 = vsel %vm350, 0, %v372
      %374 = vst [vmem:[#allocation2 + $0x54] sm:$0x1] %v373
      %v375 = vld [vmem:[#allocation2 + $0x60] sm:$0x1]
      %v376 = vsel %vm350, 0, %v375
      %377 = vst [vmem:[#allocation2 + $0x60] sm:$0x1] %v376
      %v378 = vld [vmem:[#allocation2 + $0x6c] sm:$0x1]
      %v379 = vsel %vm350, 0, %v378
      %380 = vst [vmem:[#allocation2 + $0x6c] sm:$0x1] %v379
      %v381 = vld [vmem:[#allocation2 + $0x78] sm:$0x1]
      %v382 = vsel %vm350, 0, %v381
      %383 = vst [vmem:[#allocation2 + $0x78] sm:$0x1] %v382
      %v384 = vld [vmem:[#allocation2 + $0x84] sm:$0x1]
      %v385 = vsel %vm350, 0, %v384
      %386 = vst [vmem:[#allocation2 + $0x84] sm:$0x1] %v385
      %v387 = vld [vmem:[#allocation2 + $0x90] sm:$0x1]
      %v388 = vsel %vm350, 0, %v387
      %389 = vst [vmem:[#allocation2 + $0x90] sm:$0x1] %v388
      %v390 = vld [vmem:[#allocation2 + $0x9c] sm:$0x1]
      %v391 = vsel %vm350, 0, %v390
      %392 = vst [vmem:[#allocation2 + $0x9c] sm:$0x1] %v391
      %v393 = vld [vmem:[#allocation2 + $0xa8] sm:$0x1]
      %v394 = vsel %vm350, 0, %v393
      %395 = vst [vmem:[#allocation2 + $0xa8] sm:$0x1] %v394
      %v396 = vld [vmem:[#allocation2 + $0xb4] sm:$0x1]
      %v397 = vsel %vm350, 0, %v396
      %398 = vst [vmem:[#allocation2 + $0xb4] sm:$0x1] %v397
      %v399 = vld [vmem:[#allocation2 + $0xc0] sm:$0x1]
      %v400 = vsel %vm350, 0, %v399
      %401 = vst [vmem:[#allocation2 + $0xc0] sm:$0x1] %v400
      %v402 = vld [vmem:[#allocation2 + $0xcc] sm:$0x1]
      %v403 = vsel %vm350, 0, %v402
      %404 = vst [vmem:[#allocation2 + $0xcc] sm:$0x1] %v403
      %vm405 = vsmask.f32 7938
      %vm406 = vmand %vm348, %vm405
      %v407 = vld [vmem:[#allocation2 + $0x8] sm:$0x1]
      %v408 = vsel %vm406, 0, %v407
      %409 = vst [vmem:[#allocation2 + $0x8] sm:$0x1] %v408
      %v410 = vld [vmem:[#allocation2 + $0x14] sm:$0x1]
      %v411 = vsel %vm406, 0, %v410
      %412 = vst [vmem:[#allocation2 + $0x14] sm:$0x1] %v411
      %v413 = vld [vmem:[#allocation2 + $0x20] sm:$0x1]
      %v414 = vsel %vm406, 0, %v413
      %415 = vst [vmem:[#allocation2 + $0x20] sm:$0x1] %v414
      %v416 = vld [vmem:[#allocation2 + $0x2c] sm:$0x1]
      %v417 = vsel %vm406, 0, %v416
      %418 = vst [vmem:[#allocation2 + $0x2c] sm:$0x1] %v417
      %v419 = vld [vmem:[#allocation2 + $0x38] sm:$0x1]
      %v420 = vsel %vm406, 0, %v419
      %421 = vst [vmem:[#allocation2 + $0x38] sm:$0x1] %v420
      %v422 = vld [vmem:[#allocation2 + $0x44] sm:$0x1]
      %v423 = vsel %vm406, 0, %v422
      %424 = vst [vmem:[#allocation2 + $0x44] sm:$0x1] %v423
      %v425 = vld [vmem:[#allocation2 + $0x50] sm:$0x1]
      %v426 = vsel %vm406, 0, %v425
      %427 = vst [vmem:[#allocation2 + $0x50] sm:$0x1] %v426
      %v428 = vld [vmem:[#allocation2 + $0x5c] sm:$0x1]
      %v429 = vsel %vm406, 0, %v428
      %430 = vst [vmem:[#allocation2 + $0x5c] sm:$0x1] %v429
      %v431 = vld [vmem:[#allocation2 + $0x68] sm:$0x1]
      %v432 = vsel %vm406, 0, %v431
      %433 = vst [vmem:[#allocation2 + $0x68] sm:$0x1] %v432
      %v434 = vld [vmem:[#allocation2 + $0x74] sm:$0x1]
      %v435 = vsel %vm406, 0, %v434
      %436 = vst [vmem:[#allocation2 + $0x74] sm:$0x1] %v435
      %v437 = vld [vmem:[#allocation2 + $0x80] sm:$0x1]
      %v438 = vsel %vm406, 0, %v437
      %439 = vst [vmem:[#allocation2 + $0x80] sm:$0x1] %v438
      %v440 = vld [vmem:[#allocation2 + $0x8c] sm:$0x1]
      %v441 = vsel %vm406, 0, %v440
      %442 = vst [vmem:[#allocation2 + $0x8c] sm:$0x1] %v441
      %v443 = vld [vmem:[#allocation2 + $0x98] sm:$0x1]
      %v444 = vsel %vm406, 0, %v443
      %445 = vst [vmem:[#allocation2 + $0x98] sm:$0x1] %v444
      %v446 = vld [vmem:[#allocation2 + $0xa4] sm:$0x1]
      %v447 = vsel %vm406, 0, %v446
      %448 = vst [vmem:[#allocation2 + $0xa4] sm:$0x1] %v447
      %v449 = vld [vmem:[#allocation2 + $0xb0] sm:$0x1]
      %v450 = vsel %vm406, 0, %v449
      %451 = vst [vmem:[#allocation2 + $0xb0] sm:$0x1] %v450
      %v452 = vld [vmem:[#allocation2 + $0xbc] sm:$0x1]
      %v453 = vsel %vm406, 0, %v452
      %454 = vst [vmem:[#allocation2 + $0xbc] sm:$0x1] %v453
      %v455 = vld [vmem:[#allocation2 + $0xc8] sm:$0x1]
      %v456 = vsel %vm406, 0, %v455
      %457 = vst [vmem:[#allocation2 + $0xc8] sm:$0x1] %v456
      %v458 = vld [vmem:[#allocation2 + $0xd4] sm:$0x1]
      %v459 = vsel %vm406, 0, %v458
      %460 = vst [vmem:[#allocation2 + $0xd4] sm:$0x1] %v459
      %vm461 = vsmask.f32 4368
      %vm462 = vmor %vm349, %vm461
      %v464 = vshrl.u32 %v307, 16
      %v466 = vrot.slane %v464, 7
      %v467 = vshll.u32 %v307, 16
      %v469 = vor.u32 %v466, %v467
      %v470 = vrot.slane %v466, 4
      %v472 = vshrl.u32 %v308, 16
      %v474 = vrot.slane %v472, 7
      %v475 = vshll.u32 %v308, 16
      %v477 = vor.u32 %v474, %v475
      %v478 = vsel %vm462, %v470, %v477
      %v479 = vrot.slane %v474, 4
      %v481 = vshrl.u32 %v309, 16
      %v483 = vrot.slane %v481, 7
      %v484 = vshll.u32 %v309, 16
      %v486 = vor.u32 %v483, %v484
      %v487 = vrot.slane %v483, 4
      %v489 = vshrl.u32 %v310, 16
      %v491 = vrot.slane %v489, 7
      %v492 = vshll.u32 %v310, 16
      %v494 = vor.u32 %v491, %v492
      %v495 = vsel %vm462, %v487, %v494
      %v496 = vrot.slane %v491, 4
      %v498 = vshrl.u32 %v311, 16
      %v500 = vrot.slane %v498, 7
      %v501 = vshll.u32 %v311, 16
      %v503 = vor.u32 %v500, %v501
      %v504 = vrot.slane %v500, 4
      %v506 = vshrl.u32 %v312, 16
      %v508 = vrot.slane %v506, 7
      %v509 = vshll.u32 %v312, 16
      %v511 = vor.u32 %v508, %v509
      %v512 = vsel %vm462, %v504, %v511
      %v513 = vrot.slane %v508, 4
      %v515 = vshrl.u32 %v313, 16
      %v517 = vrot.slane %v515, 7
      %v518 = vshll.u32 %v313, 16
      %v520 = vor.u32 %v517, %v518
      %v521 = vrot.slane %v517, 4
      %v523 = vshrl.u32 %v314, 16
      %v525 = vrot.slane %v523, 7
      %v526 = vshll.u32 %v314, 16
      %v528 = vor.u32 %v525, %v526
      %v529 = vsel %vm462, %v521, %v528
      %v530 = vrot.slane %v525, 4
      %v532 = vshrl.u32 %v315, 16
      %v534 = vrot.slane %v532, 7
      %v535 = vshll.u32 %v315, 16
      %v537 = vor.u32 %v534, %v535
      %v538 = vrot.slane %v534, 4
      %v540 = vshrl.u32 %v316, 16
      %v542 = vrot.slane %v540, 7
      %v543 = vshll.u32 %v316, 16
      %v545 = vor.u32 %v542, %v543
      %v546 = vsel %vm462, %v538, %v545
      %v547 = vrot.slane %v542, 4
      %v549 = vshrl.u32 %v317, 16
      %v551 = vrot.slane %v549, 7
      %v552 = vshll.u32 %v317, 16
      %v554 = vor.u32 %v551, %v552
      %v555 = vrot.slane %v551, 4
      %v557 = vshrl.u32 %v318, 16
      %v559 = vrot.slane %v557, 7
      %v560 = vshll.u32 %v318, 16
      %v562 = vor.u32 %v559, %v560
      %v563 = vsel %vm462, %v555, %v562
      %v564 = vrot.slane %v559, 4
      %v566 = vshrl.u32 %v319, 16
      %v568 = vrot.slane %v566, 7
      %v569 = vshll.u32 %v319, 16
      %v571 = vor.u32 %v568, %v569
      %v572 = vrot.slane %v568, 4
      %v574 = vshrl.u32 %v320, 16
      %v576 = vrot.slane %v574, 7
      %v577 = vshll.u32 %v320, 16
      %v579 = vor.u32 %v576, %v577
      %v580 = vsel %vm462, %v572, %v579
      %v581 = vrot.slane %v576, 4
      %v583 = vshrl.u32 %v321, 16
      %v585 = vrot.slane %v583, 7
      %v586 = vshll.u32 %v321, 16
      %v588 = vor.u32 %v585, %v586
      %v589 = vrot.slane %v585, 4
      %v591 = vshrl.u32 %v322, 16
      %v593 = vrot.slane %v591, 7
      %v594 = vshll.u32 %v322, 16
      %v596 = vor.u32 %v593, %v594
      %v597 = vsel %vm462, %v589, %v596
      %v598 = vrot.slane %v593, 4
      %v600 = vshrl.u32 %v323, 16
      %v602 = vrot.slane %v600, 7
      %v603 = vshll.u32 %v323, 16
      %v605 = vor.u32 %v602, %v603
      %v606 = vrot.slane %v602, 4
      %v608 = vshrl.u32 %v324, 16
      %v610 = vrot.slane %v608, 7
      %v611 = vshll.u32 %v324, 16
      %v613 = vor.u32 %v610, %v611
      %v614 = vsel %vm462, %v606, %v613
      %v615 = vrot.slane %v610, 4
      %v617 = vshrl.u32 %v325, 16
      %v619 = vrot.slane %v617, 7
      %v620 = vshll.u32 %v325, 16
      %v622 = vor.u32 %v619, %v620
      %v623 = vrot.slane %v619, 4
      %v625 = vshrl.u32 %v326, 16
      %v627 = vrot.slane %v625, 7
      %v628 = vshll.u32 %v326, 16
      %v630 = vor.u32 %v627, %v628
      %v631 = vsel %vm462, %v623, %v630
      %v632 = vrot.slane %v627, 4
      %v634 = vshrl.u32 %v327, 16
      %v636 = vrot.slane %v634, 7
      %v637 = vshll.u32 %v327, 16
      %v639 = vor.u32 %v636, %v637
      %v640 = vrot.slane %v636, 4
      %v642 = vshrl.u32 %v328, 16
      %v644 = vrot.slane %v642, 7
      %v645 = vshll.u32 %v328, 16
      %v647 = vor.u32 %v644, %v645
      %v648 = vsel %vm462, %v640, %v647
      %v649 = vrot.slane %v644, 4
      %v651 = vshrl.u32 %v329, 16
      %v653 = vrot.slane %v651, 7
      %v654 = vshll.u32 %v329, 16
      %v656 = vor.u32 %v653, %v654
      %v657 = vrot.slane %v653, 4
      %v659 = vshrl.u32 %v330, 16
      %v661 = vrot.slane %v659, 7
      %v662 = vshll.u32 %v330, 16
      %v664 = vor.u32 %v661, %v662
      %v665 = vsel %vm462, %v657, %v664
      %v666 = vrot.slane %v661, 4
      %v668 = vshrl.u32 %v331, 16
      %v670 = vrot.slane %v668, 7
      %v671 = vshll.u32 %v331, 16
      %v673 = vor.u32 %v670, %v671
      %v674 = vrot.slane %v670, 4
      %v676 = vshrl.u32 %v332, 16
      %v678 = vrot.slane %v676, 7
      %v679 = vshll.u32 %v332, 16
      %v681 = vor.u32 %v678, %v679
      %v682 = vsel %vm462, %v674, %v681
      %v683 = vrot.slane %v678, 4
      %v685 = vshrl.u32 %v333, 16
      %v687 = vrot.slane %v685, 7
      %v688 = vshll.u32 %v333, 16
      %v690 = vor.u32 %v687, %v688
      %v691 = vrot.slane %v687, 4
      %v693 = vshrl.u32 %v334, 16
      %v695 = vrot.slane %v693, 7
      %v696 = vshll.u32 %v334, 16
      %v698 = vor.u32 %v695, %v696
      %v699 = vsel %vm462, %v691, %v698
      %v700 = vrot.slane %v695, 4
      %v702 = vshrl.u32 %v335, 16
      %v704 = vrot.slane %v702, 7
      %v705 = vshll.u32 %v335, 16
      %v707 = vor.u32 %v704, %v705
      %v708 = vrot.slane %v704, 4
      %v710 = vshrl.u32 %v336, 16
      %v712 = vrot.slane %v710, 7
      %v713 = vshll.u32 %v336, 16
      %v715 = vor.u32 %v712, %v713
      %v716 = vsel %vm462, %v708, %v715
      %v717 = vrot.slane %v712, 4
      %v719 = vshrl.u32 %v337, 16
      %v721 = vrot.slane %v719, 7
      %v722 = vshll.u32 %v337, 16
      %v724 = vor.u32 %v721, %v722
      %v725 = vrot.slane %v721, 4
      %v727 = vshrl.u32 %v338, 16
      %v729 = vrot.slane %v727, 7
      %v730 = vshll.u32 %v338, 16
      %v732 = vor.u32 %v729, %v730
      %v733 = vsel %vm462, %v725, %v732
      %v734 = vrot.slane %v729, 4
      %s783 = scalar_lea.vmem [#allocation2], 12
      %vm784 = vcmask 60416
      %vm785 = vmand %vm784, %vm405
      %v786 = vld [vmem:[%s783] sm:$0xf]
      %v787 = vsel %vm785, %v469, %v786
      %788 = vst [vmem:[%s783] sm:$0xf] %v787
      %789 = vst.msk [vmem:[%s783 + $0x4] sm:$0xf] %vm339, %v478
      %v790 = vld [vmem:[%s783 + $0x8] sm:$0x1]
      %v791 = vsel %vm350, %v479, %v790
      %792 = vst [vmem:[%s783 + $0x8] sm:$0x1] %v791
      %v793 = vld [vmem:[%s783 + $0xc] sm:$0xf]
      %v794 = vsel %vm785, %v486, %v793
      %795 = vst [vmem:[%s783 + $0xc] sm:$0xf] %v794
      %796 = vst.msk [vmem:[%s783 + $0x10] sm:$0xf] %vm339, %v495
      %v797 = vld [vmem:[%s783 + $0x14] sm:$0x1]
      %v798 = vsel %vm350, %v496, %v797
      %799 = vst [vmem:[%s783 + $0x14] sm:$0x1] %v798
      %v800 = vld [vmem:[%s783 + $0x18] sm:$0xf]
      %v801 = vsel %vm785, %v503, %v800
      %802 = vst [vmem:[%s783 + $0x18] sm:$0xf] %v801
      %803 = vst.msk [vmem:[%s783 + $0x1c] sm:$0xf] %vm339, %v512
      %v804 = vld [vmem:[%s783 + $0x20] sm:$0x1]
      %v805 = vsel %vm350, %v513, %v804
      %806 = vst [vmem:[%s783 + $0x20] sm:$0x1] %v805
      %v807 = vld [vmem:[%s783 + $0x24] sm:$0xf]
      %v808 = vsel %vm785, %v520, %v807
      %809 = vst [vmem:[%s783 + $0x24] sm:$0xf] %v808
      %810 = vst.msk [vmem:[%s783 + $0x28] sm:$0xf] %vm339, %v529
      %v811 = vld [vmem:[%s783 + $0x2c] sm:$0x1]
      %v812 = vsel %vm350, %v530, %v811
      %813 = vst [vmem:[%s783 + $0x2c] sm:$0x1] %v812
      %v814 = vld [vmem:[%s783 + $0x30] sm:$0xf]
      %v815 = vsel %vm785, %v537, %v814
      %816 = vst [vmem:[%s783 + $0x30] sm:$0xf] %v815
      %817 = vst.msk [vmem:[%s783 + $0x34] sm:$0xf] %vm339, %v546
      %v818 = vld [vmem:[%s783 + $0x38] sm:$0x1]
      %v819 = vsel %vm350, %v547, %v818
      %820 = vst [vmem:[%s783 + $0x38] sm:$0x1] %v819
      %v821 = vld [vmem:[%s783 + $0x3c] sm:$0xf]
      %v822 = vsel %vm785, %v554, %v821
      %823 = vst [vmem:[%s783 + $0x3c] sm:$0xf] %v822
      %824 = vst.msk [vmem:[%s783 + $0x40] sm:$0xf] %vm339, %v563
      %v825 = vld [vmem:[%s783 + $0x44] sm:$0x1]
      %v826 = vsel %vm350, %v564, %v825
      %827 = vst [vmem:[%s783 + $0x44] sm:$0x1] %v826
      %v828 = vld [vmem:[%s783 + $0x48] sm:$0xf]
      %v829 = vsel %vm785, %v571, %v828
      %830 = vst [vmem:[%s783 + $0x48] sm:$0xf] %v829
      %831 = vst.msk [vmem:[%s783 + $0x4c] sm:$0xf] %vm339, %v580
      %v832 = vld [vmem:[%s783 + $0x50] sm:$0x1]
      %v833 = vsel %vm350, %v581, %v832
      %834 = vst [vmem:[%s783 + $0x50] sm:$0x1] %v833
      %v835 = vld [vmem:[%s783 + $0x54] sm:$0xf]
      %v836 = vsel %vm785, %v588, %v835
      %837 = vst [vmem:[%s783 + $0x54] sm:$0xf] %v836
      %838 = vst.msk [vmem:[%s783 + $0x58] sm:$0xf] %vm339, %v597
      %v839 = vld [vmem:[%s783 + $0x5c] sm:$0x1]
      %v840 = vsel %vm350, %v598, %v839
      %841 = vst [vmem:[%s783 + $0x5c] sm:$0x1] %v840
      %v842 = vld [vmem:[%s783 + $0x60] sm:$0xf]
      %v843 = vsel %vm785, %v605, %v842
      %844 = vst [vmem:[%s783 + $0x60] sm:$0xf] %v843
      %845 = vst.msk [vmem:[%s783 + $0x64] sm:$0xf] %vm339, %v614
      %v846 = vld [vmem:[%s783 + $0x68] sm:$0x1]
      %v847 = vsel %vm350, %v615, %v846
      %848 = vst [vmem:[%s783 + $0x68] sm:$0x1] %v847
      %v849 = vld [vmem:[%s783 + $0x6c] sm:$0xf]
      %v850 = vsel %vm785, %v622, %v849
      %851 = vst [vmem:[%s783 + $0x6c] sm:$0xf] %v850
      %852 = vst.msk [vmem:[%s783 + $0x70] sm:$0xf] %vm339, %v631
      %v853 = vld [vmem:[%s783 + $0x74] sm:$0x1]
      %v854 = vsel %vm350, %v632, %v853
      %855 = vst [vmem:[%s783 + $0x74] sm:$0x1] %v854
      %v856 = vld [vmem:[%s783 + $0x78] sm:$0xf]
      %v857 = vsel %vm785, %v639, %v856
      %858 = vst [vmem:[%s783 + $0x78] sm:$0xf] %v857
      %859 = vst.msk [vmem:[%s783 + $0x7c] sm:$0xf] %vm339, %v648
      %v860 = vld [vmem:[%s783 + $0x80] sm:$0x1]
      %v861 = vsel %vm350, %v649, %v860
      %862 = vst [vmem:[%s783 + $0x80] sm:$0x1] %v861
      %v863 = vld [vmem:[%s783 + $0x84] sm:$0xf]
      %v864 = vsel %vm785, %v656, %v863
      %865 = vst [vmem:[%s783 + $0x84] sm:$0xf] %v864
      %866 = vst.msk [vmem:[%s783 + $0x88] sm:$0xf] %vm339, %v665
      %v867 = vld [vmem:[%s783 + $0x8c] sm:$0x1]
      %v868 = vsel %vm350, %v666, %v867
      %869 = vst [vmem:[%s783 + $0x8c] sm:$0x1] %v868
      %v870 = vld [vmem:[%s783 + $0x90] sm:$0xf]
      %v871 = vsel %vm785, %v673, %v870
      %872 = vst [vmem:[%s783 + $0x90] sm:$0xf] %v871
      %873 = vst.msk [vmem:[%s783 + $0x94] sm:$0xf] %vm339, %v682
      %v874 = vld [vmem:[%s783 + $0x98] sm:$0x1]
      %v875 = vsel %vm350, %v683, %v874
      %876 = vst [vmem:[%s783 + $0x98] sm:$0x1] %v875
      %v877 = vld [vmem:[%s783 + $0x9c] sm:$0xf]
      %v878 = vsel %vm785, %v690, %v877
      %879 = vst [vmem:[%s783 + $0x9c] sm:$0xf] %v878
      %880 = vst.msk [vmem:[%s783 + $0xa0] sm:$0xf] %vm339, %v699
      %v881 = vld [vmem:[%s783 + $0xa4] sm:$0x1]
      %v882 = vsel %vm350, %v700, %v881
      %883 = vst [vmem:[%s783 + $0xa4] sm:$0x1] %v882
      %v884 = vld [vmem:[%s783 + $0xa8] sm:$0xf]
      %v885 = vsel %vm785, %v707, %v884
      %886 = vst [vmem:[%s783 + $0xa8] sm:$0xf] %v885
      %887 = vst.msk [vmem:[%s783 + $0xac] sm:$0xf] %vm339, %v716
      %v888 = vld [vmem:[%s783 + $0xb0] sm:$0x1]
      %v889 = vsel %vm350, %v717, %v888
      %890 = vst [vmem:[%s783 + $0xb0] sm:$0x1] %v889
      %v891 = vld [vmem:[%s783 + $0xb4] sm:$0xf]
      %v892 = vsel %vm785, %v724, %v891
      %893 = vst [vmem:[%s783 + $0xb4] sm:$0xf] %v892
      %894 = vst.msk [vmem:[%s783 + $0xb8] sm:$0xf] %vm339, %v733
      %v895 = vld [vmem:[%s783 + $0xbc] sm:$0x1]
      %v896 = vsel %vm350, %v734, %v895
      %897 = vst [vmem:[%s783 + $0xbc] sm:$0x1] %v896
      %v898 = vld [vmem:[#allocation2] sm:$0xf]
      %v899 = vld [vmem:[#allocation2 + $0x4] sm:$0xf]
      %v900 = vld [vmem:[#allocation2 + $0xc] sm:$0xf]
      %v901 = vld [vmem:[#allocation2 + $0x10] sm:$0xf]
      %v902 = vld [vmem:[#allocation2 + $0x18] sm:$0xf]
      %v903 = vld [vmem:[#allocation2 + $0x1c] sm:$0xf]
      %v904 = vld [vmem:[#allocation2 + $0x24] sm:$0xf]
      %v905 = vld [vmem:[#allocation2 + $0x28] sm:$0xf]
      %v906 = vld [vmem:[#allocation2 + $0x30] sm:$0xf]
      %v907 = vld [vmem:[#allocation2 + $0x34] sm:$0xf]
      %v908 = vld [vmem:[#allocation2 + $0x3c] sm:$0xf]
      %v909 = vld [vmem:[#allocation2 + $0x40] sm:$0xf]
      %v910 = vld [vmem:[#allocation2 + $0x48] sm:$0xf]
      %v911 = vld [vmem:[#allocation2 + $0x4c] sm:$0xf]
      %v912 = vld [vmem:[#allocation2 + $0x54] sm:$0xf]
      %v913 = vld [vmem:[#allocation2 + $0x58] sm:$0xf]
      %v914 = vld [vmem:[#allocation2 + $0x60] sm:$0xf]
      %v915 = vld [vmem:[#allocation2 + $0x64] sm:$0xf]
      %v916 = vld [vmem:[#allocation2 + $0x6c] sm:$0xf]
      %v917 = vld [vmem:[#allocation2 + $0x70] sm:$0xf]
      %v918 = vld [vmem:[#allocation2 + $0x78] sm:$0xf]
      %v919 = vld [vmem:[#allocation2 + $0x7c] sm:$0xf]
      %v920 = vld [vmem:[#allocation2 + $0x84] sm:$0xf]
      %v921 = vld [vmem:[#allocation2 + $0x88] sm:$0xf]
      %v922 = vld [vmem:[#allocation2 + $0x90] sm:$0xf]
      %v923 = vld [vmem:[#allocation2 + $0x94] sm:$0xf]
      %v924 = vld [vmem:[#allocation2 + $0x9c] sm:$0xf]
      %v925 = vld [vmem:[#allocation2 + $0xa0] sm:$0xf]
      %v926 = vld [vmem:[#allocation2 + $0xa8] sm:$0xf]
      %v927 = vld [vmem:[#allocation2 + $0xac] sm:$0xf]
      %v928 = vld [vmem:[#allocation2 + $0xb4] sm:$0xf]
      %v929 = vld [vmem:[#allocation2 + $0xb8] sm:$0xf]
      %v930 = vld [vmem:[%s1] sm:$0xf]
      %v931 = vld [vmem:[#allocation2 + $0x8] sm:$0x1]
      %v932 = vld [vmem:[#allocation2 + $0x14] sm:$0x1]
      %v933 = vld [vmem:[#allocation2 + $0x20] sm:$0x1]
      %v934 = vld [vmem:[#allocation2 + $0x2c] sm:$0x1]
      %v935 = vld [vmem:[#allocation2 + $0x38] sm:$0x1]
      %v936 = vld [vmem:[#allocation2 + $0x44] sm:$0x1]
      %v937 = vld [vmem:[#allocation2 + $0x50] sm:$0x1]
      %v938 = vld [vmem:[#allocation2 + $0x5c] sm:$0x1]
      %v939 = vld [vmem:[#allocation2 + $0x68] sm:$0x1]
      %v940 = vld [vmem:[#allocation2 + $0x74] sm:$0x1]
      %v941 = vld [vmem:[#allocation2 + $0x80] sm:$0x1]
      %v942 = vld [vmem:[#allocation2 + $0x8c] sm:$0x1]
      %v943 = vld [vmem:[#allocation2 + $0x98] sm:$0x1]
      %v944 = vld [vmem:[#allocation2 + $0xa4] sm:$0x1]
      %v945 = vld [vmem:[#allocation2 + $0xb0] sm:$0x1]
      %v946 = vld [vmem:[#allocation2 + $0xbc] sm:$0x1]
      %vm947 = vsmask.f32 3328
      %vm948 = vsmask.f32 7440
      %vm949 = vmor %vm947, %vm948
      %v951 = vshrl.u32 %v898, 16
      %v953 = vrot.slane %v951, 4
      %v954 = vshll.u32 %v898, 16
      %v956 = vrot.slane %v954, 5
      %v957 = vor.u32 %v953, %v956
      %v958 = vrot.slane %v957, 4
      %v960 = vshll.u32 %v899, 16
      %v962 = vrot.slane %v960, 5
      %v963 = vsel %vm949, %v958, %v962
      %v964 = vshrl.u32 %v899, 16
      %v966 = vrot.slane %v964, 4
      %v967 = vor.u32 %v966, %v962
      %v968 = vrot.slane %v967, 4
      %v970 = vshll.u32 %v931, 16
      %v972 = vrot.slane %v970, 5
      %v973 = vsel %vm949, %v968, %v972
      %v975 = vshrl.u32 %v900, 16
      %v977 = vrot.slane %v975, 4
      %v978 = vshll.u32 %v900, 16
      %v980 = vrot.slane %v978, 5
      %v981 = vor.u32 %v977, %v980
      %v982 = vrot.slane %v981, 4
      %v984 = vshll.u32 %v901, 16
      %v986 = vrot.slane %v984, 5
      %v987 = vsel %vm949, %v982, %v986
      %v988 = vshrl.u32 %v901, 16
      %v990 = vrot.slane %v988, 4
      %v991 = vor.u32 %v990, %v986
      %v992 = vrot.slane %v991, 4
      %v994 = vshll.u32 %v932, 16
      %v996 = vrot.slane %v994, 5
      %v997 = vsel %vm949, %v992, %v996
      %v999 = vshrl.u32 %v902, 16
      %v1001 = vrot.slane %v999, 4
      %v1002 = vshll.u32 %v902, 16
      %v1004 = vrot.slane %v1002, 5
      %v1005 = vor.u32 %v1001, %v1004
      %v1006 = vrot.slane %v1005, 4
      %v1008 = vshll.u32 %v903, 16
      %v1010 = vrot.slane %v1008, 5
      %v1011 = vsel %vm949, %v1006, %v1010
      %v1012 = vshrl.u32 %v903, 16
      %v1014 = vrot.slane %v1012, 4
      %v1015 = vor.u32 %v1014, %v1010
      %v1016 = vrot.slane %v1015, 4
      %v1018 = vshll.u32 %v933, 16
      %v1020 = vrot.slane %v1018, 5
      %v1021 = vsel %vm949, %v1016, %v1020
      %v1023 = vshrl.u32 %v904, 16
      %v1025 = vrot.slane %v1023, 4
      %v1026 = vshll.u32 %v904, 16
      %v1028 = vrot.slane %v1026, 5
      %v1029 = vor.u32 %v1025, %v1028
      %v1030 = vrot.slane %v1029, 4
      %v1032 = vshll.u32 %v905, 16
      %v1034 = vrot.slane %v1032, 5
      %v1035 = vsel %vm949, %v1030, %v1034
      %v1036 = vshrl.u32 %v905, 16
      %v1038 = vrot.slane %v1036, 4
      %v1039 = vor.u32 %v1038, %v1034
      %v1040 = vrot.slane %v1039, 4
      %v1042 = vshll.u32 %v934, 16
      %v1044 = vrot.slane %v1042, 5
      %v1045 = vsel %vm949, %v1040, %v1044
      %v1047 = vshrl.u32 %v906, 16
      %v1049 = vrot.slane %v1047, 4
      %v1050 = vshll.u32 %v906, 16
      %v1052 = vrot.slane %v1050, 5
      %v1053 = vor.u32 %v1049, %v1052
      %v1054 = vrot.slane %v1053, 4
      %v1056 = vshll.u32 %v907, 16
      %v1058 = vrot.slane %v1056, 5
      %v1059 = vsel %vm949, %v1054, %v1058
      %v1060 = vshrl.u32 %v907, 16
      %v1062 = vrot.slane %v1060, 4
      %v1063 = vor.u32 %v1062, %v1058
      %v1064 = vrot.slane %v1063, 4
      %v1066 = vshll.u32 %v935, 16
      %v1068 = vrot.slane %v1066, 5
      %v1069 = vsel %vm949, %v1064, %v1068
      %v1071 = vshrl.u32 %v908, 16
      %v1073 = vrot.slane %v1071, 4
      %v1074 = vshll.u32 %v908, 16
      %v1076 = vrot.slane %v1074, 5
      %v1077 = vor.u32 %v1073, %v1076
      %v1078 = vrot.slane %v1077, 4
      %v1080 = vshll.u32 %v909, 16
      %v1082 = vrot.slane %v1080, 5
      %v1083 = vsel %vm949, %v1078, %v1082
      %v1084 = vshrl.u32 %v909, 16
      %v1086 = vrot.slane %v1084, 4
      %v1087 = vor.u32 %v1086, %v1082
      %v1088 = vrot.slane %v1087, 4
      %v1090 = vshll.u32 %v936, 16
      %v1092 = vrot.slane %v1090, 5
      %v1093 = vsel %vm949, %v1088, %v1092
      %v1095 = vshrl.u32 %v910, 16
      %v1097 = vrot.slane %v1095, 4
      %v1098 = vshll.u32 %v910, 16
      %v1100 = vrot.slane %v1098, 5
      %v1101 = vor.u32 %v1097, %v1100
      %v1102 = vrot.slane %v1101, 4
      %v1104 = vshll.u32 %v911, 16
      %v1106 = vrot.slane %v1104, 5
      %v1107 = vsel %vm949, %v1102, %v1106
      %v1108 = vshrl.u32 %v911, 16
      %v1110 = vrot.slane %v1108, 4
      %v1111 = vor.u32 %v1110, %v1106
      %v1112 = vrot.slane %v1111, 4
      %v1114 = vshll.u32 %v937, 16
      %v1116 = vrot.slane %v1114, 5
      %v1117 = vsel %vm949, %v1112, %v1116
      %v1119 = vshrl.u32 %v912, 16
      %v1121 = vrot.slane %v1119, 4
      %v1122 = vshll.u32 %v912, 16
      %v1124 = vrot.slane %v1122, 5
      %v1125 = vor.u32 %v1121, %v1124
      %v1126 = vrot.slane %v1125, 4
      %v1128 = vshll.u32 %v913, 16
      %v1130 = vrot.slane %v1128, 5
      %v1131 = vsel %vm949, %v1126, %v1130
      %v1132 = vshrl.u32 %v913, 16
      %v1134 = vrot.slane %v1132, 4
      %v1135 = vor.u32 %v1134, %v1130
      %v1136 = vrot.slane %v1135, 4
      %v1138 = vshll.u32 %v938, 16
      %v1140 = vrot.slane %v1138, 5
      %v1141 = vsel %vm949, %v1136, %v1140
      %v1143 = vshrl.u32 %v914, 16
      %v1145 = vrot.slane %v1143, 4
      %v1146 = vshll.u32 %v914, 16
      %v1148 = vrot.slane %v1146, 5
      %v1149 = vor.u32 %v1145, %v1148
      %v1150 = vrot.slane %v1149, 4
      %v1152 = vshll.u32 %v915, 16
      %v1154 = vrot.slane %v1152, 5
      %v1155 = vsel %vm949, %v1150, %v1154
      %v1156 = vshrl.u32 %v915, 16
      %v1158 = vrot.slane %v1156, 4
      %v1159 = vor.u32 %v1158, %v1154
      %v1160 = vrot.slane %v1159, 4
      %v1162 = vshll.u32 %v939, 16
      %v1164 = vrot.slane %v1162, 5
      %v1165 = vsel %vm949, %v1160, %v1164
      %v1167 = vshrl.u32 %v916, 16
      %v1169 = vrot.slane %v1167, 4
      %v1170 = vshll.u32 %v916, 16
      %v1172 = vrot.slane %v1170, 5
      %v1173 = vor.u32 %v1169, %v1172
      %v1174 = vrot.slane %v1173, 4
      %v1176 = vshll.u32 %v917, 16
      %v1178 = vrot.slane %v1176, 5
      %v1179 = vsel %vm949, %v1174, %v1178
      %v1180 = vshrl.u32 %v917, 16
      %v1182 = vrot.slane %v1180, 4
      %v1183 = vor.u32 %v1182, %v1178
      %v1184 = vrot.slane %v1183, 4
      %v1186 = vshll.u32 %v940, 16
      %v1188 = vrot.slane %v1186, 5
      %v1189 = vsel %vm949, %v1184, %v1188
      %v1191 = vshrl.u32 %v918, 16
      %v1193 = vrot.slane %v1191, 4
      %v1194 = vshll.u32 %v918, 16
      %v1196 = vrot.slane %v1194, 5
      %v1197 = vor.u32 %v1193, %v1196
      %v1198 = vrot.slane %v1197, 4
      %v1200 = vshll.u32 %v919, 16
      %v1202 = vrot.slane %v1200, 5
      %v1203 = vsel %vm949, %v1198, %v1202
      %v1204 = vshrl.u32 %v919, 16
      %v1206 = vrot.slane %v1204, 4
      %v1207 = vor.u32 %v1206, %v1202
      %v1208 = vrot.slane %v1207, 4
      %v1210 = vshll.u32 %v941, 16
      %v1212 = vrot.slane %v1210, 5
      %v1213 = vsel %vm949, %v1208, %v1212
      %v1215 = vshrl.u32 %v920, 16
      %v1217 = vrot.slane %v1215, 4
      %v1218 = vshll.u32 %v920, 16
      %v1220 = vrot.slane %v1218, 5
      %v1221 = vor.u32 %v1217, %v1220
      %v1222 = vrot.slane %v1221, 4
      %v1224 = vshll.u32 %v921, 16
      %v1226 = vrot.slane %v1224, 5
      %v1227 = vsel %vm949, %v1222, %v1226
      %v1228 = vshrl.u32 %v921, 16
      %v1230 = vrot.slane %v1228, 4
      %v1231 = vor.u32 %v1230, %v1226
      %v1232 = vrot.slane %v1231, 4
      %v1234 = vshll.u32 %v942, 16
      %v1236 = vrot.slane %v1234, 5
      %v1237 = vsel %vm949, %v1232, %v1236
      %v1239 = vshrl.u32 %v922, 16
      %v1241 = vrot.slane %v1239, 4
      %v1242 = vshll.u32 %v922, 16
      %v1244 = vrot.slane %v1242, 5
      %v1245 = vor.u32 %v1241, %v1244
      %v1246 = vrot.slane %v1245, 4
      %v1248 = vshll.u32 %v923, 16
      %v1250 = vrot.slane %v1248, 5
      %v1251 = vsel %vm949, %v1246, %v1250
      %v1252 = vshrl.u32 %v923, 16
      %v1254 = vrot.slane %v1252, 4
      %v1255 = vor.u32 %v1254, %v1250
      %v1256 = vrot.slane %v1255, 4
      %v1258 = vshll.u32 %v943, 16
      %v1260 = vrot.slane %v1258, 5
      %v1261 = vsel %vm949, %v1256, %v1260
      %v1263 = vshrl.u32 %v924, 16
      %v1265 = vrot.slane %v1263, 4
      %v1266 = vshll.u32 %v924, 16
      %v1268 = vrot.slane %v1266, 5
      %v1269 = vor.u32 %v1265, %v1268
      %v1270 = vrot.slane %v1269, 4
      %v1272 = vshll.u32 %v925, 16
      %v1274 = vrot.slane %v1272, 5
      %v1275 = vsel %vm949, %v1270, %v1274
      %v1276 = vshrl.u32 %v925, 16
      %v1278 = vrot.slane %v1276, 4
      %v1279 = vor.u32 %v1278, %v1274
      %v1280 = vrot.slane %v1279, 4
      %v1282 = vshll.u32 %v944, 16
      %v1284 = vrot.slane %v1282, 5
      %v1285 = vsel %vm949, %v1280, %v1284
      %v1287 = vshrl.u32 %v926, 16
      %v1289 = vrot.slane %v1287, 4
      %v1290 = vshll.u32 %v926, 16
      %v1292 = vrot.slane %v1290, 5
      %v1293 = vor.u32 %v1289, %v1292
      %v1294 = vrot.slane %v1293, 4
      %v1296 = vshll.u32 %v927, 16
      %v1298 = vrot.slane %v1296, 5
      %v1299 = vsel %vm949, %v1294, %v1298
      %v1300 = vshrl.u32 %v927, 16
      %v1302 = vrot.slane %v1300, 4
      %v1303 = vor.u32 %v1302, %v1298
      %v1304 = vrot.slane %v1303, 4
      %v1306 = vshll.u32 %v945, 16
      %v1308 = vrot.slane %v1306, 5
      %v1309 = vsel %vm949, %v1304, %v1308
      %v1311 = vshrl.u32 %v928, 16
      %v1313 = vrot.slane %v1311, 4
      %v1314 = vshll.u32 %v928, 16
      %v1316 = vrot.slane %v1314, 5
      %v1317 = vor.u32 %v1313, %v1316
      %v1318 = vrot.slane %v1317, 4
      %v1320 = vshll.u32 %v929, 16
      %v1322 = vrot.slane %v1320, 5
      %v1323 = vsel %vm949, %v1318, %v1322
      %v1324 = vshrl.u32 %v929, 16
      %v1326 = vrot.slane %v1324, 4
      %v1327 = vor.u32 %v1326, %v1322
      %v1328 = vrot.slane %v1327, 4
      %v1330 = vshll.u32 %v946, 16
      %v1332 = vrot.slane %v1330, 5
      %v1333 = vsel %vm949, %v1328, %v1332
      %v1334 = vld [vmem:[%s1 + $0x4] sm:$0xf]
      %v1335 = vunpack.c.l.b16 %v963
      %v1336 = vunpack.c.l.b16 %v973
      %v1337 = vunpack.c.l.b16 %v987
      %v1338 = vunpack.c.l.b16 %v997
      %v1339 = vunpack.c.l.b16 %v1011
      %v1340 = vunpack.c.l.b16 %v1021
      %v1341 = vunpack.c.l.b16 %v1035
      %v1342 = vunpack.c.l.b16 %v1045
      %v1343 = vunpack.c.l.b16 %v1059
      %v1344 = vunpack.c.l.b16 %v1069
      %v1345 = vunpack.c.l.b16 %v1083
      %v1346 = vunpack.c.l.b16 %v1093
      %v1347 = vunpack.c.l.b16 %v1107
      %v1348 = vunpack.c.l.b16 %v1117
      %v1349 = vunpack.c.l.b16 %v1131
      %v1350 = vunpack.c.l.b16 %v1141
      %v1351 = vunpack.c.l.b16 %v1155
      %v1352 = vunpack.c.l.b16 %v1165
      %v1353 = vunpack.c.l.b16 %v1179
      %v1354 = vunpack.c.l.b16 %v1189
      %v1355 = vunpack.c.l.b16 %v1203
      %v1356 = vunpack.c.l.b16 %v1213
      %v1357 = vunpack.c.l.b16 %v1227
      %v1358 = vunpack.c.l.b16 %v1237
      %v1359 = vunpack.c.l.b16 %v1251
      %v1360 = vunpack.c.l.b16 %v1261
      %v1361 = vunpack.c.l.b16 %v1275
      %v1362 = vunpack.c.l.b16 %v1285
      %v1363 = vunpack.c.l.b16 %v1299
      %v1364 = vunpack.c.l.b16 %v1309
      %v1365 = vunpack.c.l.b16 %v1323
      %v1366 = vunpack.c.l.b16 %v1333
      %v1367 = vpack.c.b16 %v1336, %v1335
      %v1368 = vpack.c.b16 %v1338, %v1337
      %v1369 = vpack.c.b16 %v1340, %v1339
      %v1370 = vpack.c.b16 %v1342, %v1341
      %v1371 = vpack.c.b16 %v1344, %v1343
      %v1372 = vpack.c.b16 %v1346, %v1345
      %v1373 = vpack.c.b16 %v1348, %v1347
      %v1374 = vpack.c.b16 %v1350, %v1349
      %v1375 = vpack.c.b16 %v1352, %v1351
      %v1376 = vpack.c.b16 %v1354, %v1353
      %v1377 = vpack.c.b16 %v1356, %v1355
      %v1378 = vpack.c.b16 %v1358, %v1357
      %v1379 = vpack.c.b16 %v1360, %v1359
      %v1380 = vpack.c.b16 %v1362, %v1361
      %v1381 = vpack.c.b16 %v1364, %v1363
      %v1382 = vpack.c.b16 %v1366, %v1365
      %vm1383 = vcmask 64512
      %v1385 = vsel %vm1383, %v1367, 0
      %v1388 = vsel %vm1383, %v1368, 0
      %v1391 = vsel %vm1383, %v1369, 0
      %v1394 = vsel %vm1383, %v1370, 0
      %v1397 = vsel %vm1383, %v1371, 0
      %v1400 = vsel %vm1383, %v1372, 0
      %v1403 = vsel %vm1383, %v1373, 0
      %v1406 = vsel %vm1383, %v1374, 0
      %v1409 = vsel %vm1383, %v1375, 0
      %v1412 = vsel %vm1383, %v1376, 0
      %v1415 = vsel %vm1383, %v1377, 0
      %v1418 = vsel %vm1383, %v1378, 0
      %v1421 = vsel %vm1383, %v1379, 0
      %v1424 = vsel %vm1383, %v1380, 0
      %v1427 = vsel %vm1383, %v1381, 0
      %v1430 = vsel %vm1383, %v1382, 0
      %vm1432 = vcmask 1043456
      %v1434 = vsel %vm1432, %v1334, 0
      %1436 = vmatpush.bf16.msra.mxu0 0
      %1437 = vmatpush.bf16.msra.mxu0 0
      %1438 = vmatpush.bf16.msra.mxu0 0
      %1439 = vmatpush.bf16.msra.mxu0 0
      %1440 = vmatpush.bf16.msra.mxu0 0
      %1441 = vmatpush.bf16.msra.mxu0 0
      %1442 = vmatpush.bf16.msra.mxu0 0
      %1443 = vmatpush.bf16.msra.mxu0 %v1434
      %1444 = vmatmul.bf16.gmra.mxu0 %v1385
      %v1445 = vpop.f32.mrf.mxu0
      %v1446 = vadd.f32 0.0, %v1445
      %v1447 = vpop.f32.mrf.mxu0
      %v1448 = vadd.f32 0.0, %v1447
      %1449 = vmatmul.bf16.gmra.mxu0 %v1388
      %v1450 = vpop.f32.mrf.mxu0
      %v1451 = vadd.f32 0.0, %v1450
      %v1452 = vpop.f32.mrf.mxu0
      %v1453 = vadd.f32 0.0, %v1452
      %1454 = vmatmul.bf16.gmra.mxu0 %v1391
      %v1455 = vpop.f32.mrf.mxu0
      %v1456 = vadd.f32 0.0, %v1455
      %v1457 = vpop.f32.mrf.mxu0
      %v1458 = vadd.f32 0.0, %v1457
      %1459 = vmatmul.bf16.gmra.mxu0 %v1394
      %v1460 = vpop.f32.mrf.mxu0
      %v1461 = vadd.f32 0.0, %v1460
      %v1462 = vpop.f32.mrf.mxu0
      %v1463 = vadd.f32 0.0, %v1462
      %1464 = vmatmul.bf16.gmra.mxu0 %v1397
      %v1465 = vpop.f32.mrf.mxu0
      %v1466 = vadd.f32 0.0, %v1465
      %v1467 = vpop.f32.mrf.mxu0
      %v1468 = vadd.f32 0.0, %v1467
      %1469 = vmatmul.bf16.gmra.mxu0 %v1400
      %v1470 = vpop.f32.mrf.mxu0
      %v1471 = vadd.f32 0.0, %v1470
      %v1472 = vpop.f32.mrf.mxu0
      %v1473 = vadd.f32 0.0, %v1472
      %1474 = vmatmul.bf16.gmra.mxu0 %v1403
      %v1475 = vpop.f32.mrf.mxu0
      %v1476 = vadd.f32 0.0, %v1475
      %v1477 = vpop.f32.mrf.mxu0
      %v1478 = vadd.f32 0.0, %v1477
      %1479 = vmatmul.bf16.gmra.mxu0 %v1406
      %v1480 = vpop.f32.mrf.mxu0
      %v1481 = vadd.f32 0.0, %v1480
      %v1482 = vpop.f32.mrf.mxu0
      %v1483 = vadd.f32 0.0, %v1482
      %1484 = vmatmul.bf16.gmra.mxu0 %v1409
      %v1485 = vpop.f32.mrf.mxu0
      %v1486 = vadd.f32 0.0, %v1485
      %v1487 = vpop.f32.mrf.mxu0
      %v1488 = vadd.f32 0.0, %v1487
      %1489 = vmatmul.bf16.gmra.mxu0 %v1412
      %v1490 = vpop.f32.mrf.mxu0
      %v1491 = vadd.f32 0.0, %v1490
      %v1492 = vpop.f32.mrf.mxu0
      %v1493 = vadd.f32 0.0, %v1492
      %1494 = vmatmul.bf16.gmra.mxu0 %v1415
      %v1495 = vpop.f32.mrf.mxu0
      %v1496 = vadd.f32 0.0, %v1495
      %v1497 = vpop.f32.mrf.mxu0
      %v1498 = vadd.f32 0.0, %v1497
      %1499 = vmatmul.bf16.gmra.mxu0 %v1418
      %v1500 = vpop.f32.mrf.mxu0
      %v1501 = vadd.f32 0.0, %v1500
      %v1502 = vpop.f32.mrf.mxu0
      %v1503 = vadd.f32 0.0, %v1502
      %1504 = vmatmul.bf16.gmra.mxu0 %v1421
      %v1505 = vpop.f32.mrf.mxu0
      %v1506 = vadd.f32 0.0, %v1505
      %v1507 = vpop.f32.mrf.mxu0
      %v1508 = vadd.f32 0.0, %v1507
      %1509 = vmatmul.bf16.gmra.mxu0 %v1424
      %v1510 = vpop.f32.mrf.mxu0
      %v1511 = vadd.f32 0.0, %v1510
      %v1512 = vpop.f32.mrf.mxu0
      %v1513 = vadd.f32 0.0, %v1512
      %1514 = vmatmul.bf16.gmra.mxu0 %v1427
      %v1515 = vpop.f32.mrf.mxu0
      %v1516 = vadd.f32 0.0, %v1515
      %v1517 = vpop.f32.mrf.mxu0
      %v1518 = vadd.f32 0.0, %v1517
      %1519 = vmatmul.bf16.gmra.mxu0 %v1430
      %v1520 = vpop.f32.mrf.mxu0
      %v1521 = vadd.f32 0.0, %v1520
      %v1522 = vpop.f32.mrf.mxu0
      %v1523 = vadd.f32 0.0, %v1522
      %1524 = vdwg.mxu0
      %v1557 = vunpack.c.l.b16 %v898
      %v1558 = vunpack.c.l.b16 %v899
      %v1559 = vunpack.c.l.b16 %v900
      %v1560 = vunpack.c.l.b16 %v901
      %v1561 = vunpack.c.l.b16 %v902
      %v1562 = vunpack.c.l.b16 %v903
      %v1563 = vunpack.c.l.b16 %v904
      %v1564 = vunpack.c.l.b16 %v905
      %v1565 = vunpack.c.l.b16 %v906
      %v1566 = vunpack.c.l.b16 %v907
      %v1567 = vunpack.c.l.b16 %v908
      %v1568 = vunpack.c.l.b16 %v909
      %v1569 = vunpack.c.l.b16 %v910
      %v1570 = vunpack.c.l.b16 %v911
      %v1571 = vunpack.c.l.b16 %v912
      %v1572 = vunpack.c.l.b16 %v913
      %v1573 = vunpack.c.l.b16 %v914
      %v1574 = vunpack.c.l.b16 %v915
      %v1575 = vunpack.c.l.b16 %v916
      %v1576 = vunpack.c.l.b16 %v917
      %v1577 = vunpack.c.l.b16 %v918
      %v1578 = vunpack.c.l.b16 %v919
      %v1579 = vunpack.c.l.b16 %v920
      %v1580 = vunpack.c.l.b16 %v921
      %v1581 = vunpack.c.l.b16 %v922
      %v1582 = vunpack.c.l.b16 %v923
      %v1583 = vunpack.c.l.b16 %v924
      %v1584 = vunpack.c.l.b16 %v925
      %v1585 = vunpack.c.l.b16 %v926
      %v1586 = vunpack.c.l.b16 %v927
      %v1587 = vunpack.c.l.b16 %v928
      %v1588 = vunpack.c.l.b16 %v929
      %v1589 = vpack.c.b16 %v1558, %v1557
      %v1590 = vpack.c.b16 %v1560, %v1559
      %v1591 = vpack.c.b16 %v1562, %v1561
      %v1592 = vpack.c.b16 %v1564, %v1563
      %v1593 = vpack.c.b16 %v1566, %v1565
      %v1594 = vpack.c.b16 %v1568, %v1567
      %v1595 = vpack.c.b16 %v1570, %v1569
      %v1596 = vpack.c.b16 %v1572, %v1571
      %v1597 = vpack.c.b16 %v1574, %v1573
      %v1598 = vpack.c.b16 %v1576, %v1575
      %v1599 = vpack.c.b16 %v1578, %v1577
      %v1600 = vpack.c.b16 %v1580, %v1579
      %v1601 = vpack.c.b16 %v1582, %v1581
      %v1602 = vpack.c.b16 %v1584, %v1583
      %v1603 = vpack.c.b16 %v1586, %v1585
      %v1604 = vpack.c.b16 %v1588, %v1587
      %v1606 = vsel %vm1383, %v1589, 0
      %v1609 = vsel %vm1383, %v1590, 0
      %v1612 = vsel %vm1383, %v1591, 0
      %v1615 = vsel %vm1383, %v1592, 0
      %v1618 = vsel %vm1383, %v1593, 0
      %v1621 = vsel %vm1383, %v1594, 0
      %v1624 = vsel %vm1383, %v1595, 0
      %v1627 = vsel %vm1383, %v1596, 0
      %v1630 = vsel %vm1383, %v1597, 0
      %v1633 = vsel %vm1383, %v1598, 0
      %v1636 = vsel %vm1383, %v1599, 0
      %v1639 = vsel %vm1383, %v1600, 0
      %v1642 = vsel %vm1383, %v1601, 0
      %v1645 = vsel %vm1383, %v1602, 0
      %v1648 = vsel %vm1383, %v1603, 0
      %v1651 = vsel %vm1383, %v1604, 0
      %v1654 = vsel %vm1432, %v930, 0
      %1656 = vmatpush.bf16.msra.mxu0 0
      %1657 = vmatpush.bf16.msra.mxu0 0
      %1658 = vmatpush.bf16.msra.mxu0 0
      %1659 = vmatpush.bf16.msra.mxu0 0
      %1660 = vmatpush.bf16.msra.mxu0 0
      %1661 = vmatpush.bf16.msra.mxu0 0
      %1662 = vmatpush.bf16.msra.mxu0 0
      %1663 = vmatpush.bf16.msra.mxu0 %v1654
      %1664 = vmatmul.bf16.gmra.mxu0 %v1606
      %v1665 = vpop.f32.mrf.mxu0
      %v1666 = vadd.f32 %v1446, %v1665
      %v1667 = vpop.f32.mrf.mxu0
      %v1668 = vadd.f32 %v1448, %v1667
      %1669 = vmatmul.bf16.gmra.mxu0 %v1609
      %v1670 = vpop.f32.mrf.mxu0
      %v1671 = vadd.f32 %v1451, %v1670
      %v1672 = vpop.f32.mrf.mxu0
      %v1673 = vadd.f32 %v1453, %v1672
      %1674 = vmatmul.bf16.gmra.mxu0 %v1612
      %v1675 = vpop.f32.mrf.mxu0
      %v1676 = vadd.f32 %v1456, %v1675
      %v1677 = vpop.f32.mrf.mxu0
      %v1678 = vadd.f32 %v1458, %v1677
      %1679 = vmatmul.bf16.gmra.mxu0 %v1615
      %v1680 = vpop.f32.mrf.mxu0
      %v1681 = vadd.f32 %v1461, %v1680
      %v1682 = vpop.f32.mrf.mxu0
      %v1683 = vadd.f32 %v1463, %v1682
      %1684 = vmatmul.bf16.gmra.mxu0 %v1618
      %v1685 = vpop.f32.mrf.mxu0
      %v1686 = vadd.f32 %v1466, %v1685
      %v1687 = vpop.f32.mrf.mxu0
      %v1688 = vadd.f32 %v1468, %v1687
      %1689 = vmatmul.bf16.gmra.mxu0 %v1621
      %v1690 = vpop.f32.mrf.mxu0
      %v1691 = vadd.f32 %v1471, %v1690
      %v1692 = vpop.f32.mrf.mxu0
      %v1693 = vadd.f32 %v1473, %v1692
      %1694 = vmatmul.bf16.gmra.mxu0 %v1624
      %v1695 = vpop.f32.mrf.mxu0
      %v1696 = vadd.f32 %v1476, %v1695
      %v1697 = vpop.f32.mrf.mxu0
      %v1698 = vadd.f32 %v1478, %v1697
      %1699 = vmatmul.bf16.gmra.mxu0 %v1627
      %v1700 = vpop.f32.mrf.mxu0
      %v1701 = vadd.f32 %v1481, %v1700
      %v1702 = vpop.f32.mrf.mxu0
      %v1703 = vadd.f32 %v1483, %v1702
      %1704 = vmatmul.bf16.gmra.mxu0 %v1630
      %v1705 = vpop.f32.mrf.mxu0
      %v1706 = vadd.f32 %v1486, %v1705
      %v1707 = vpop.f32.mrf.mxu0
      %v1708 = vadd.f32 %v1488, %v1707
      %1709 = vmatmul.bf16.gmra.mxu0 %v1633
      %v1710 = vpop.f32.mrf.mxu0
      %v1711 = vadd.f32 %v1491, %v1710
      %v1712 = vpop.f32.mrf.mxu0
      %v1713 = vadd.f32 %v1493, %v1712
      %1714 = vmatmul.bf16.gmra.mxu0 %v1636
      %v1715 = vpop.f32.mrf.mxu0
      %v1716 = vadd.f32 %v1496, %v1715
      %v1717 = vpop.f32.mrf.mxu0
      %v1718 = vadd.f32 %v1498, %v1717
      %1719 = vmatmul.bf16.gmra.mxu0 %v1639
      %v1720 = vpop.f32.mrf.mxu0
      %v1721 = vadd.f32 %v1501, %v1720
      %v1722 = vpop.f32.mrf.mxu0
      %v1723 = vadd.f32 %v1503, %v1722
      %1724 = vmatmul.bf16.gmra.mxu0 %v1642
      %v1725 = vpop.f32.mrf.mxu0
      %v1726 = vadd.f32 %v1506, %v1725
      %v1727 = vpop.f32.mrf.mxu0
      %v1728 = vadd.f32 %v1508, %v1727
      %1729 = vmatmul.bf16.gmra.mxu0 %v1645
      %v1730 = vpop.f32.mrf.mxu0
      %v1731 = vadd.f32 %v1511, %v1730
      %v1732 = vpop.f32.mrf.mxu0
      %v1733 = vadd.f32 %v1513, %v1732
      %1734 = vmatmul.bf16.gmra.mxu0 %v1648
      %v1735 = vpop.f32.mrf.mxu0
      %v1736 = vadd.f32 %v1516, %v1735
      %v1737 = vpop.f32.mrf.mxu0
      %v1738 = vadd.f32 %v1518, %v1737
      %1739 = vmatmul.bf16.gmra.mxu0 %v1651
      %v1740 = vpop.f32.mrf.mxu0
      %v1741 = vadd.f32 %v1521, %v1740
      %v1742 = vpop.f32.mrf.mxu0
      %v1743 = vadd.f32 %v1523, %v1742
      %1744 = vdwg.mxu0
      %v1745 = vld [vmem:[#allocation2] sm:$0xe]
      %v1746 = vld [vmem:[#allocation2 + $0xc] sm:$0xe]
      %v1747 = vld [vmem:[#allocation2 + $0x18] sm:$0xe]
      %v1748 = vld [vmem:[#allocation2 + $0x24] sm:$0xe]
      %v1749 = vld [vmem:[#allocation2 + $0x30] sm:$0xe]
      %v1750 = vld [vmem:[#allocation2 + $0x3c] sm:$0xe]
      %v1751 = vld [vmem:[#allocation2 + $0x48] sm:$0xe]
      %v1752 = vld [vmem:[#allocation2 + $0x54] sm:$0xe]
      %v1753 = vld [vmem:[#allocation2 + $0x60] sm:$0xe]
      %v1754 = vld [vmem:[#allocation2 + $0x6c] sm:$0xe]
      %v1755 = vld [vmem:[#allocation2 + $0x78] sm:$0xe]
      %v1756 = vld [vmem:[#allocation2 + $0x84] sm:$0xe]
      %v1757 = vld [vmem:[#allocation2 + $0x90] sm:$0xe]
      %v1758 = vld [vmem:[#allocation2 + $0x9c] sm:$0xe]
      %v1759 = vld [vmem:[#allocation2 + $0xa8] sm:$0xe]
      %v1760 = vld [vmem:[#allocation2 + $0xb4] sm:$0xe]
      %vm1793 = vcmask 1042432
      %vm1794 = vcmask 1046532
      %vm1795 = vmor %vm1793, %vm1794
      %v1796 = vrot.slane %v1745, 5
      %v1797 = vrot.slane %v1796, 4
      %v1798 = vrot.slane %v899, 5
      %v1799 = vsel %vm1795, %v1797, %v1798
      %v1800 = vrot.slane %v1798, 4
      %v1801 = vrot.slane %v931, 5
      %v1802 = vsel %vm1795, %v1800, %v1801
      %v1803 = vrot.slane %v1746, 5
      %v1804 = vrot.slane %v1803, 4
      %v1805 = vrot.slane %v901, 5
      %v1806 = vsel %vm1795, %v1804, %v1805
      %v1807 = vrot.slane %v1805, 4
      %v1808 = vrot.slane %v932, 5
      %v1809 = vsel %vm1795, %v1807, %v1808
      %v1810 = vrot.slane %v1747, 5
      %v1811 = vrot.slane %v1810, 4
      %v1812 = vrot.slane %v903, 5
      %v1813 = vsel %vm1795, %v1811, %v1812
      %v1814 = vrot.slane %v1812, 4
      %v1815 = vrot.slane %v933, 5
      %v1816 = vsel %vm1795, %v1814, %v1815
      %v1817 = vrot.slane %v1748, 5
      %v1818 = vrot.slane %v1817, 4
      %v1819 = vrot.slane %v905, 5
      %v1820 = vsel %vm1795, %v1818, %v1819
      %v1821 = vrot.slane %v1819, 4
      %v1822 = vrot.slane %v934, 5
      %v1823 = vsel %vm1795, %v1821, %v1822
      %v1824 = vrot.slane %v1749, 5
      %v1825 = vrot.slane %v1824, 4
      %v1826 = vrot.slane %v907, 5
      %v1827 = vsel %vm1795, %v1825, %v1826
      %v1828 = vrot.slane %v1826, 4
      %v1829 = vrot.slane %v935, 5
      %v1830 = vsel %vm1795, %v1828, %v1829
      %v1831 = vrot.slane %v1750, 5
      %v1832 = vrot.slane %v1831, 4
      %v1833 = vrot.slane %v909, 5
      %v1834 = vsel %vm1795, %v1832, %v1833
      %v1835 = vrot.slane %v1833, 4
      %v1836 = vrot.slane %v936, 5
      %v1837 = vsel %vm1795, %v1835, %v1836
      %v1838 = vrot.slane %v1751, 5
      %v1839 = vrot.slane %v1838, 4
      %v1840 = vrot.slane %v911, 5
      %v1841 = vsel %vm1795, %v1839, %v1840
      %v1842 = vrot.slane %v1840, 4
      %v1843 = vrot.slane %v937, 5
      %v1844 = vsel %vm1795, %v1842, %v1843
      %v1845 = vrot.slane %v1752, 5
      %v1846 = vrot.slane %v1845, 4
      %v1847 = vrot.slane %v913, 5
      %v1848 = vsel %vm1795, %v1846, %v1847
      %v1849 = vrot.slane %v1847, 4
      %v1850 = vrot.slane %v938, 5
      %v1851 = vsel %vm1795, %v1849, %v1850
      %v1852 = vrot.slane %v1753, 5
      %v1853 = vrot.slane %v1852, 4
      %v1854 = vrot.slane %v915, 5
      %v1855 = vsel %vm1795, %v1853, %v1854
      %v1856 = vrot.slane %v1854, 4
      %v1857 = vrot.slane %v939, 5
      %v1858 = vsel %vm1795, %v1856, %v1857
      %v1859 = vrot.slane %v1754, 5
      %v1860 = vrot.slane %v1859, 4
      %v1861 = vrot.slane %v917, 5
      %v1862 = vsel %vm1795, %v1860, %v1861
      %v1863 = vrot.slane %v1861, 4
      %v1864 = vrot.slane %v940, 5
      %v1865 = vsel %vm1795, %v1863, %v1864
      %v1866 = vrot.slane %v1755, 5
      %v1867 = vrot.slane %v1866, 4
      %v1868 = vrot.slane %v919, 5
      %v1869 = vsel %vm1795, %v1867, %v1868
      %v1870 = vrot.slane %v1868, 4
      %v1871 = vrot.slane %v941, 5
      %v1872 = vsel %vm1795, %v1870, %v1871
      %v1873 = vrot.slane %v1756, 5
      %v1874 = vrot.slane %v1873, 4
      %v1875 = vrot.slane %v921, 5
      %v1876 = vsel %vm1795, %v1874, %v1875
      %v1877 = vrot.slane %v1875, 4
      %v1878 = vrot.slane %v942, 5
      %v1879 = vsel %vm1795, %v1877, %v1878
      %v1880 = vrot.slane %v1757, 5
      %v1881 = vrot.slane %v1880, 4
      %v1882 = vrot.slane %v923, 5
      %v1883 = vsel %vm1795, %v1881, %v1882
      %v1884 = vrot.slane %v1882, 4
      %v1885 = vrot.slane %v943, 5
      %v1886 = vsel %vm1795, %v1884, %v1885
      %v1887 = vrot.slane %v1758, 5
      %v1888 = vrot.slane %v1887, 4
      %v1889 = vrot.slane %v925, 5
      %v1890 = vsel %vm1795, %v1888, %v1889
      %v1891 = vrot.slane %v1889, 4
      %v1892 = vrot.slane %v944, 5
      %v1893 = vsel %vm1795, %v1891, %v1892
      %v1894 = vrot.slane %v1759, 5
      %v1895 = vrot.slane %v1894, 4
      %v1896 = vrot.slane %v927, 5
      %v1897 = vsel %vm1795, %v1895, %v1896
      %v1898 = vrot.slane %v1896, 4
      %v1899 = vrot.slane %v945, 5
      %v1900 = vsel %vm1795, %v1898, %v1899
      %v1901 = vrot.slane %v1760, 5
      %v1902 = vrot.slane %v1901, 4
      %v1903 = vrot.slane %v929, 5
      %v1904 = vsel %vm1795, %v1902, %v1903
      %v1905 = vrot.slane %v1903, 4
      %v1906 = vrot.slane %v946, 5
      %v1907 = vsel %vm1795, %v1905, %v1906
      %v1908 = vld [vmem:[%s1 + $0x8] sm:$0xf]
      %v1909 = vunpack.c.l.b16 %v1799
      %v1910 = vunpack.c.l.b16 %v1802
      %v1911 = vunpack.c.l.b16 %v1806
      %v1912 = vunpack.c.l.b16 %v1809
      %v1913 = vunpack.c.l.b16 %v1813
      %v1914 = vunpack.c.l.b16 %v1816
      %v1915 = vunpack.c.l.b16 %v1820
      %v1916 = vunpack.c.l.b16 %v1823
      %v1917 = vunpack.c.l.b16 %v1827
      %v1918 = vunpack.c.l.b16 %v1830
      %v1919 = vunpack.c.l.b16 %v1834
      %v1920 = vunpack.c.l.b16 %v1837
      %v1921 = vunpack.c.l.b16 %v1841
      %v1922 = vunpack.c.l.b16 %v1844
      %v1923 = vunpack.c.l.b16 %v1848
      %v1924 = vunpack.c.l.b16 %v1851
      %v1925 = vunpack.c.l.b16 %v1855
      %v1926 = vunpack.c.l.b16 %v1858
      %v1927 = vunpack.c.l.b16 %v1862
      %v1928 = vunpack.c.l.b16 %v1865
      %v1929 = vunpack.c.l.b16 %v1869
      %v1930 = vunpack.c.l.b16 %v1872
      %v1931 = vunpack.c.l.b16 %v1876
      %v1932 = vunpack.c.l.b16 %v1879
      %v1933 = vunpack.c.l.b16 %v1883
      %v1934 = vunpack.c.l.b16 %v1886
      %v1935 = vunpack.c.l.b16 %v1890
      %v1936 = vunpack.c.l.b16 %v1893
      %v1937 = vunpack.c.l.b16 %v1897
      %v1938 = vunpack.c.l.b16 %v1900
      %v1939 = vunpack.c.l.b16 %v1904
      %v1940 = vunpack.c.l.b16 %v1907
      %v1941 = vpack.c.b16 %v1910, %v1909
      %v1942 = vpack.c.b16 %v1912, %v1911
      %v1943 = vpack.c.b16 %v1914, %v1913
      %v1944 = vpack.c.b16 %v1916, %v1915
      %v1945 = vpack.c.b16 %v1918, %v1917
      %v1946 = vpack.c.b16 %v1920, %v1919
      %v1947 = vpack.c.b16 %v1922, %v1921
      %v1948 = vpack.c.b16 %v1924, %v1923
      %v1949 = vpack.c.b16 %v1926, %v1925
      %v1950 = vpack.c.b16 %v1928, %v1927
      %v1951 = vpack.c.b16 %v1930, %v1929
      %v1952 = vpack.c.b16 %v1932, %v1931
      %v1953 = vpack.c.b16 %v1934, %v1933
      %v1954 = vpack.c.b16 %v1936, %v1935
      %v1955 = vpack.c.b16 %v1938, %v1937
      %v1956 = vpack.c.b16 %v1940, %v1939
      %v1958 = vsel %vm1383, %v1941, 0
      %v1961 = vsel %vm1383, %v1942, 0
      %v1964 = vsel %vm1383, %v1943, 0
      %v1967 = vsel %vm1383, %v1944, 0
      %v1970 = vsel %vm1383, %v1945, 0
      %v1973 = vsel %vm1383, %v1946, 0
      %v1976 = vsel %vm1383, %v1947, 0
      %v1979 = vsel %vm1383, %v1948, 0
      %v1982 = vsel %vm1383, %v1949, 0
      %v1985 = vsel %vm1383, %v1950, 0
      %v1988 = vsel %vm1383, %v1951, 0
      %v1991 = vsel %vm1383, %v1952, 0
      %v1994 = vsel %vm1383, %v1953, 0
      %v1997 = vsel %vm1383, %v1954, 0
      %v2000 = vsel %vm1383, %v1955, 0
      %v2003 = vsel %vm1383, %v1956, 0
      %v2006 = vsel %vm1432, %v1908, 0
      %2008 = vmatpush.bf16.msra.mxu0 0
      %2009 = vmatpush.bf16.msra.mxu0 0
      %2010 = vmatpush.bf16.msra.mxu0 0
      %2011 = vmatpush.bf16.msra.mxu0 0
      %2012 = vmatpush.bf16.msra.mxu0 0
      %2013 = vmatpush.bf16.msra.mxu0 0
      %2014 = vmatpush.bf16.msra.mxu0 0
      %2015 = vmatpush.bf16.msra.mxu0 %v2006
      %2016 = vmatmul.bf16.gmra.mxu0 %v1958
      %v2017 = vpop.f32.mrf.mxu0
      %v2018 = vadd.f32 0.0, %v2017
      %v2019 = vpop.f32.mrf.mxu0
      %v2020 = vadd.f32 0.0, %v2019
      %2021 = vmatmul.bf16.gmra.mxu0 %v1961
      %v2022 = vpop.f32.mrf.mxu0
      %v2023 = vadd.f32 0.0, %v2022
      %v2024 = vpop.f32.mrf.mxu0
      %v2025 = vadd.f32 0.0, %v2024
      %2026 = vmatmul.bf16.gmra.mxu0 %v1964
      %v2027 = vpop.f32.mrf.mxu0
      %v2028 = vadd.f32 0.0, %v2027
      %v2029 = vpop.f32.mrf.mxu0
      %v2030 = vadd.f32 0.0, %v2029
      %2031 = vmatmul.bf16.gmra.mxu0 %v1967
      %v2032 = vpop.f32.mrf.mxu0
      %v2033 = vadd.f32 0.0, %v2032
      %v2034 = vpop.f32.mrf.mxu0
      %v2035 = vadd.f32 0.0, %v2034
      %2036 = vmatmul.bf16.gmra.mxu0 %v1970
      %v2037 = vpop.f32.mrf.mxu0
      %v2038 = vadd.f32 0.0, %v2037
      %v2039 = vpop.f32.mrf.mxu0
      %v2040 = vadd.f32 0.0, %v2039
      %2041 = vmatmul.bf16.gmra.mxu0 %v1973
      %v2042 = vpop.f32.mrf.mxu0
      %v2043 = vadd.f32 0.0, %v2042
      %v2044 = vpop.f32.mrf.mxu0
      %v2045 = vadd.f32 0.0, %v2044
      %2046 = vmatmul.bf16.gmra.mxu0 %v1976
      %v2047 = vpop.f32.mrf.mxu0
      %v2048 = vadd.f32 0.0, %v2047
      %v2049 = vpop.f32.mrf.mxu0
      %v2050 = vadd.f32 0.0, %v2049
      %2051 = vmatmul.bf16.gmra.mxu0 %v1979
      %v2052 = vpop.f32.mrf.mxu0
      %v2053 = vadd.f32 0.0, %v2052
      %v2054 = vpop.f32.mrf.mxu0
      %v2055 = vadd.f32 0.0, %v2054
      %2056 = vmatmul.bf16.gmra.mxu0 %v1982
      %v2057 = vpop.f32.mrf.mxu0
      %v2058 = vadd.f32 0.0, %v2057
      %v2059 = vpop.f32.mrf.mxu0
      %v2060 = vadd.f32 0.0, %v2059
      %2061 = vmatmul.bf16.gmra.mxu0 %v1985
      %v2062 = vpop.f32.mrf.mxu0
      %v2063 = vadd.f32 0.0, %v2062
      %v2064 = vpop.f32.mrf.mxu0
      %v2065 = vadd.f32 0.0, %v2064
      %2066 = vmatmul.bf16.gmra.mxu0 %v1988
      %v2067 = vpop.f32.mrf.mxu0
      %v2068 = vadd.f32 0.0, %v2067
      %v2069 = vpop.f32.mrf.mxu0
      %v2070 = vadd.f32 0.0, %v2069
      %2071 = vmatmul.bf16.gmra.mxu0 %v1991
      %v2072 = vpop.f32.mrf.mxu0
      %v2073 = vadd.f32 0.0, %v2072
      %v2074 = vpop.f32.mrf.mxu0
      %v2075 = vadd.f32 0.0, %v2074
      %2076 = vmatmul.bf16.gmra.mxu0 %v1994
      %v2077 = vpop.f32.mrf.mxu0
      %v2078 = vadd.f32 0.0, %v2077
      %v2079 = vpop.f32.mrf.mxu0
      %v2080 = vadd.f32 0.0, %v2079
      %2081 = vmatmul.bf16.gmra.mxu0 %v1997
      %v2082 = vpop.f32.mrf.mxu0
      %v2083 = vadd.f32 0.0, %v2082
      %v2084 = vpop.f32.mrf.mxu0
      %v2085 = vadd.f32 0.0, %v2084
      %2086 = vmatmul.bf16.gmra.mxu0 %v2000
      %v2087 = vpop.f32.mrf.mxu0
      %v2088 = vadd.f32 0.0, %v2087
      %v2089 = vpop.f32.mrf.mxu0
      %v2090 = vadd.f32 0.0, %v2089
      %2091 = vmatmul.bf16.gmra.mxu0 %v2003
      %v2092 = vpop.f32.mrf.mxu0
      %v2093 = vadd.f32 0.0, %v2092
      %v2094 = vpop.f32.mrf.mxu0
      %v2095 = vadd.f32 0.0, %v2094
      %2096 = vdwg.mxu0
      %v2097 = vadd.f32 %v1666, %v2018
      %v2098 = vadd.f32 %v1668, %v2020
      %v2099 = vadd.f32 %v1671, %v2023
      %v2100 = vadd.f32 %v1673, %v2025
      %v2101 = vadd.f32 %v1676, %v2028
      %v2102 = vadd.f32 %v1678, %v2030
      %v2103 = vadd.f32 %v1681, %v2033
      %v2104 = vadd.f32 %v1683, %v2035
      %v2105 = vadd.f32 %v1686, %v2038
      %v2106 = vadd.f32 %v1688, %v2040
      %v2107 = vadd.f32 %v1691, %v2043
      %v2108 = vadd.f32 %v1693, %v2045
      %v2109 = vadd.f32 %v1696, %v2048
      %v2110 = vadd.f32 %v1698, %v2050
      %v2111 = vadd.f32 %v1701, %v2053
      %v2112 = vadd.f32 %v1703, %v2055
      %v2113 = vadd.f32 %v1706, %v2058
      %v2114 = vadd.f32 %v1708, %v2060
      %v2115 = vadd.f32 %v1711, %v2063
      %v2116 = vadd.f32 %v1713, %v2065
      %v2117 = vadd.f32 %v1716, %v2068
      %v2118 = vadd.f32 %v1718, %v2070
      %v2119 = vadd.f32 %v1721, %v2073
      %v2120 = vadd.f32 %v1723, %v2075
      %v2121 = vadd.f32 %v1726, %v2078
      %v2122 = vadd.f32 %v1728, %v2080
      %v2123 = vadd.f32 %v1731, %v2083
      %v2124 = vadd.f32 %v1733, %v2085
      %v2125 = vadd.f32 %v1736, %v2088
      %v2126 = vadd.f32 %v1738, %v2090
      %v2127 = vadd.f32 %v1741, %v2093
      %v2128 = vadd.f32 %v1743, %v2095
      %v2129 = vld [vmem:[%s783] sm:$0xf]
      %v2130 = vld [vmem:[%s783 + $0x4] sm:$0xf]
      %v2131 = vld [vmem:[%s783 + $0xc] sm:$0xf]
      %v2132 = vld [vmem:[%s783 + $0x10] sm:$0xf]
      %v2133 = vld [vmem:[%s783 + $0x18] sm:$0xf]
      %v2134 = vld [vmem:[%s783 + $0x1c] sm:$0xf]
      %v2135 = vld [vmem:[%s783 + $0x24] sm:$0xf]
      %v2136 = vld [vmem:[%s783 + $0x28] sm:$0xf]
      %v2137 = vld [vmem:[%s783 + $0x30] sm:$0xf]
      %v2138 = vld [vmem:[%s783 + $0x34] sm:$0xf]
      %v2139 = vld [vmem:[%s783 + $0x3c] sm:$0xf]
      %v2140 = vld [vmem:[%s783 + $0x40] sm:$0xf]
      %v2141 = vld [vmem:[%s783 + $0x48] sm:$0xf]
      %v2142 = vld [vmem:[%s783 + $0x4c] sm:$0xf]
      %v2143 = vld [vmem:[%s783 + $0x54] sm:$0xf]
      %v2144 = vld [vmem:[%s783 + $0x58] sm:$0xf]
      %v2145 = vld [vmem:[%s783 + $0x60] sm:$0xf]
      %v2146 = vld [vmem:[%s783 + $0x64] sm:$0xf]
      %v2147 = vld [vmem:[%s783 + $0x6c] sm:$0xf]
      %v2148 = vld [vmem:[%s783 + $0x70] sm:$0xf]
      %v2149 = vld [vmem:[%s783 + $0x78] sm:$0xf]
      %v2150 = vld [vmem:[%s783 + $0x7c] sm:$0xf]
      %v2151 = vld [vmem:[%s783 + $0x84] sm:$0xf]
      %v2152 = vld [vmem:[%s783 + $0x88] sm:$0xf]
      %v2153 = vld [vmem:[%s783 + $0x90] sm:$0xf]
      %v2154 = vld [vmem:[%s783 + $0x94] sm:$0xf]
      %v2155 = vld [vmem:[%s783 + $0x9c] sm:$0xf]
      %v2156 = vld [vmem:[%s783 + $0xa0] sm:$0xf]
      %v2157 = vld [vmem:[%s783 + $0xa8] sm:$0xf]
      %v2158 = vld [vmem:[%s783 + $0xac] sm:$0xf]
      %v2159 = vld [vmem:[%s783 + $0xb4] sm:$0xf]
      %v2160 = vld [vmem:[%s783 + $0xb8] sm:$0xf]
      %v2161 = vld [vmem:[%s1 + $0xc] sm:$0xf]
      %v2194 = vunpack.c.l.b16 %v2129
      %v2195 = vunpack.c.l.b16 %v2130
      %v2196 = vunpack.c.l.b16 %v2131
      %v2197 = vunpack.c.l.b16 %v2132
      %v2198 = vunpack.c.l.b16 %v2133
      %v2199 = vunpack.c.l.b16 %v2134
      %v2200 = vunpack.c.l.b16 %v2135
      %v2201 = vunpack.c.l.b16 %v2136
      %v2202 = vunpack.c.l.b16 %v2137
      %v2203 = vunpack.c.l.b16 %v2138
      %v2204 = vunpack.c.l.b16 %v2139
      %v2205 = vunpack.c.l.b16 %v2140
      %v2206 = vunpack.c.l.b16 %v2141
      %v2207 = vunpack.c.l.b16 %v2142
      %v2208 = vunpack.c.l.b16 %v2143
      %v2209 = vunpack.c.l.b16 %v2144
      %v2210 = vunpack.c.l.b16 %v2145
      %v2211 = vunpack.c.l.b16 %v2146
      %v2212 = vunpack.c.l.b16 %v2147
      %v2213 = vunpack.c.l.b16 %v2148
      %v2214 = vunpack.c.l.b16 %v2149
      %v2215 = vunpack.c.l.b16 %v2150
      %v2216 = vunpack.c.l.b16 %v2151
      %v2217 = vunpack.c.l.b16 %v2152
      %v2218 = vunpack.c.l.b16 %v2153
      %v2219 = vunpack.c.l.b16 %v2154
      %v2220 = vunpack.c.l.b16 %v2155
      %v2221 = vunpack.c.l.b16 %v2156
      %v2222 = vunpack.c.l.b16 %v2157
      %v2223 = vunpack.c.l.b16 %v2158
      %v2224 = vunpack.c.l.b16 %v2159
      %v2225 = vunpack.c.l.b16 %v2160
      %v2226 = vpack.c.b16 %v2195, %v2194
      %v2227 = vpack.c.b16 %v2197, %v2196
      %v2228 = vpack.c.b16 %v2199, %v2198
      %v2229 = vpack.c.b16 %v2201, %v2200
      %v2230 = vpack.c.b16 %v2203, %v2202
      %v2231 = vpack.c.b16 %v2205, %v2204
      %v2232 = vpack.c.b16 %v2207, %v2206
      %v2233 = vpack.c.b16 %v2209, %v2208
      %v2234 = vpack.c.b16 %v2211, %v2210
      %v2235 = vpack.c.b16 %v2213, %v2212
      %v2236 = vpack.c.b16 %v2215, %v2214
      %v2237 = vpack.c.b16 %v2217, %v2216
      %v2238 = vpack.c.b16 %v2219, %v2218
      %v2239 = vpack.c.b16 %v2221, %v2220
      %v2240 = vpack.c.b16 %v2223, %v2222
      %v2241 = vpack.c.b16 %v2225, %v2224
      %v2243 = vsel %vm1383, %v2226, 0
      %v2246 = vsel %vm1383, %v2227, 0
      %v2249 = vsel %vm1383, %v2228, 0
      %v2252 = vsel %vm1383, %v2229, 0
      %v2255 = vsel %vm1383, %v2230, 0
      %v2258 = vsel %vm1383, %v2231, 0
      %v2261 = vsel %vm1383, %v2232, 0
      %v2264 = vsel %vm1383, %v2233, 0
      %v2267 = vsel %vm1383, %v2234, 0
      %v2270 = vsel %vm1383, %v2235, 0
      %v2273 = vsel %vm1383, %v2236, 0
      %v2276 = vsel %vm1383, %v2237, 0
      %v2279 = vsel %vm1383, %v2238, 0
      %v2282 = vsel %vm1383, %v2239, 0
      %v2285 = vsel %vm1383, %v2240, 0
      %v2288 = vsel %vm1383, %v2241, 0
      %v2291 = vsel %vm1432, %v2161, 0
      %2293 = vmatpush.bf16.msra.mxu0 0
      %2294 = vmatpush.bf16.msra.mxu0 0
      %2295 = vmatpush.bf16.msra.mxu0 0
      %2296 = vmatpush.bf16.msra.mxu0 0
      %2297 = vmatpush.bf16.msra.mxu0 0
      %2298 = vmatpush.bf16.msra.mxu0 0
      %2299 = vmatpush.bf16.msra.mxu0 0
      %2300 = vmatpush.bf16.msra.mxu0 %v2291
      %2301 = vmatmul.bf16.gmra.mxu0 %v2243
      %v2302 = vpop.f32.mrf.mxu0
      %v2303 = vadd.f32 0.0, %v2302
      %v2304 = vpop.f32.mrf.mxu0
      %v2305 = vadd.f32 0.0, %v2304
      %2306 = vmatmul.bf16.gmra.mxu0 %v2246
      %v2307 = vpop.f32.mrf.mxu0
      %v2308 = vadd.f32 0.0, %v2307
      %v2309 = vpop.f32.mrf.mxu0
      %v2310 = vadd.f32 0.0, %v2309
      %2311 = vmatmul.bf16.gmra.mxu0 %v2249
      %v2312 = vpop.f32.mrf.mxu0
      %v2313 = vadd.f32 0.0, %v2312
      %v2314 = vpop.f32.mrf.mxu0
      %v2315 = vadd.f32 0.0, %v2314
      %2316 = vmatmul.bf16.gmra.mxu0 %v2252
      %v2317 = vpop.f32.mrf.mxu0
      %v2318 = vadd.f32 0.0, %v2317
      %v2319 = vpop.f32.mrf.mxu0
      %v2320 = vadd.f32 0.0, %v2319
      %2321 = vmatmul.bf16.gmra.mxu0 %v2255
      %v2322 = vpop.f32.mrf.mxu0
      %v2323 = vadd.f32 0.0, %v2322
      %v2324 = vpop.f32.mrf.mxu0
      %v2325 = vadd.f32 0.0, %v2324
      %2326 = vmatmul.bf16.gmra.mxu0 %v2258
      %v2327 = vpop.f32.mrf.mxu0
      %v2328 = vadd.f32 0.0, %v2327
      %v2329 = vpop.f32.mrf.mxu0
      %v2330 = vadd.f32 0.0, %v2329
      %2331 = vmatmul.bf16.gmra.mxu0 %v2261
      %v2332 = vpop.f32.mrf.mxu0
      %v2333 = vadd.f32 0.0, %v2332
      %v2334 = vpop.f32.mrf.mxu0
      %v2335 = vadd.f32 0.0, %v2334
      %2336 = vmatmul.bf16.gmra.mxu0 %v2264
      %v2337 = vpop.f32.mrf.mxu0
      %v2338 = vadd.f32 0.0, %v2337
      %v2339 = vpop.f32.mrf.mxu0
      %v2340 = vadd.f32 0.0, %v2339
      %2341 = vmatmul.bf16.gmra.mxu0 %v2267
      %v2342 = vpop.f32.mrf.mxu0
      %v2343 = vadd.f32 0.0, %v2342
      %v2344 = vpop.f32.mrf.mxu0
      %v2345 = vadd.f32 0.0, %v2344
      %2346 = vmatmul.bf16.gmra.mxu0 %v2270
      %v2347 = vpop.f32.mrf.mxu0
      %v2348 = vadd.f32 0.0, %v2347
      %v2349 = vpop.f32.mrf.mxu0
      %v2350 = vadd.f32 0.0, %v2349
      %2351 = vmatmul.bf16.gmra.mxu0 %v2273
      %v2352 = vpop.f32.mrf.mxu0
      %v2353 = vadd.f32 0.0, %v2352
      %v2354 = vpop.f32.mrf.mxu0
      %v2355 = vadd.f32 0.0, %v2354
      %2356 = vmatmul.bf16.gmra.mxu0 %v2276
      %v2357 = vpop.f32.mrf.mxu0
      %v2358 = vadd.f32 0.0, %v2357
      %v2359 = vpop.f32.mrf.mxu0
      %v2360 = vadd.f32 0.0, %v2359
      %2361 = vmatmul.bf16.gmra.mxu0 %v2279
      %v2362 = vpop.f32.mrf.mxu0
      %v2363 = vadd.f32 0.0, %v2362
      %v2364 = vpop.f32.mrf.mxu0
      %v2365 = vadd.f32 0.0, %v2364
      %2366 = vmatmul.bf16.gmra.mxu0 %v2282
      %v2367 = vpop.f32.mrf.mxu0
      %v2368 = vadd.f32 0.0, %v2367
      %v2369 = vpop.f32.mrf.mxu0
      %v2370 = vadd.f32 0.0, %v2369
      %2371 = vmatmul.bf16.gmra.mxu0 %v2285
      %v2372 = vpop.f32.mrf.mxu0
      %v2373 = vadd.f32 0.0, %v2372
      %v2374 = vpop.f32.mrf.mxu0
      %v2375 = vadd.f32 0.0, %v2374
      %2376 = vmatmul.bf16.gmra.mxu0 %v2288
      %v2377 = vpop.f32.mrf.mxu0
      %v2378 = vadd.f32 0.0, %v2377
      %v2379 = vpop.f32.mrf.mxu0
      %v2380 = vadd.f32 0.0, %v2379
      %2381 = vdwg.mxu0
      %v2382 = vadd.f32 %v2097, %v2303
      %v2383 = vadd.f32 %v2098, %v2305
      %v2384 = vadd.f32 %v2099, %v2308
      %v2385 = vadd.f32 %v2100, %v2310
      %v2386 = vadd.f32 %v2101, %v2313
      %v2387 = vadd.f32 %v2102, %v2315
      %v2388 = vadd.f32 %v2103, %v2318
      %v2389 = vadd.f32 %v2104, %v2320
      %v2390 = vadd.f32 %v2105, %v2323
      %v2391 = vadd.f32 %v2106, %v2325
      %v2392 = vadd.f32 %v2107, %v2328
      %v2393 = vadd.f32 %v2108, %v2330
      %v2394 = vadd.f32 %v2109, %v2333
      %v2395 = vadd.f32 %v2110, %v2335
      %v2396 = vadd.f32 %v2111, %v2338
      %v2397 = vadd.f32 %v2112, %v2340
      %v2398 = vadd.f32 %v2113, %v2343
      %v2399 = vadd.f32 %v2114, %v2345
      %v2400 = vadd.f32 %v2115, %v2348
      %v2401 = vadd.f32 %v2116, %v2350
      %v2402 = vadd.f32 %v2117, %v2353
      %v2403 = vadd.f32 %v2118, %v2355
      %v2404 = vadd.f32 %v2119, %v2358
      %v2405 = vadd.f32 %v2120, %v2360
      %v2406 = vadd.f32 %v2121, %v2363
      %v2407 = vadd.f32 %v2122, %v2365
      %v2408 = vadd.f32 %v2123, %v2368
      %v2409 = vadd.f32 %v2124, %v2370
      %v2410 = vadd.f32 %v2125, %v2373
      %v2411 = vadd.f32 %v2126, %v2375
      %v2412 = vadd.f32 %v2127, %v2378
      %v2413 = vadd.f32 %v2128, %v2380
      %v2414 = vld [vmem:[%s783] sm:$0xf]
      %v2415 = vld [vmem:[%s783 + $0x4] sm:$0xf]
      %v2416 = vld [vmem:[%s783 + $0x8] sm:$0x1]
      %v2417 = vld [vmem:[%s783 + $0xc] sm:$0xf]
      %v2418 = vld [vmem:[%s783 + $0x10] sm:$0xf]
      %v2419 = vld [vmem:[%s783 + $0x14] sm:$0x1]
      %v2420 = vld [vmem:[%s783 + $0x18] sm:$0xf]
      %v2421 = vld [vmem:[%s783 + $0x1c] sm:$0xf]
      %v2422 = vld [vmem:[%s783 + $0x20] sm:$0x1]
      %v2423 = vld [vmem:[%s783 + $0x24] sm:$0xf]
      %v2424 = vld [vmem:[%s783 + $0x28] sm:$0xf]
      %v2425 = vld [vmem:[%s783 + $0x2c] sm:$0x1]
      %v2426 = vld [vmem:[%s783 + $0x30] sm:$0xf]
      %v2427 = vld [vmem:[%s783 + $0x34] sm:$0xf]
      %v2428 = vld [vmem:[%s783 + $0x38] sm:$0x1]
      %v2429 = vld [vmem:[%s783 + $0x3c] sm:$0xf]
      %v2430 = vld [vmem:[%s783 + $0x40] sm:$0xf]
      %v2431 = vld [vmem:[%s783 + $0x44] sm:$0x1]
      %v2432 = vld [vmem:[%s783 + $0x48] sm:$0xf]
      %v2433 = vld [vmem:[%s783 + $0x4c] sm:$0xf]
      %v2434 = vld [vmem:[%s783 + $0x50] sm:$0x1]
      %v2435 = vld [vmem:[%s783 + $0x54] sm:$0xf]
      %v2436 = vld [vmem:[%s783 + $0x58] sm:$0xf]
      %v2437 = vld [vmem:[%s783 + $0x5c] sm:$0x1]
      %v2438 = vld [vmem:[%s783 + $0x60] sm:$0xf]
      %v2439 = vld [vmem:[%s783 + $0x64] sm:$0xf]
      %v2440 = vld [vmem:[%s783 + $0x68] sm:$0x1]
      %v2441 = vld [vmem:[%s783 + $0x6c] sm:$0xf]
      %v2442 = vld [vmem:[%s783 + $0x70] sm:$0xf]
      %v2443 = vld [vmem:[%s783 + $0x74] sm:$0x1]
      %v2444 = vld [vmem:[%s783 + $0x78] sm:$0xf]
      %v2445 = vld [vmem:[%s783 + $0x7c] sm:$0xf]
      %v2446 = vld [vmem:[%s783 + $0x80] sm:$0x1]
      %v2447 = vld [vmem:[%s783 + $0x84] sm:$0xf]
      %v2448 = vld [vmem:[%s783 + $0x88] sm:$0xf]
      %v2449 = vld [vmem:[%s783 + $0x8c] sm:$0x1]
      %v2450 = vld [vmem:[%s783 + $0x90] sm:$0xf]
      %v2451 = vld [vmem:[%s783 + $0x94] sm:$0xf]
      %v2452 = vld [vmem:[%s783 + $0x98] sm:$0x1]
      %v2453 = vld [vmem:[%s783 + $0x9c] sm:$0xf]
      %v2454 = vld [vmem:[%s783 + $0xa0] sm:$0xf]
      %v2455 = vld [vmem:[%s783 + $0xa4] sm:$0x1]
      %v2456 = vld [vmem:[%s783 + $0xa8] sm:$0xf]
      %v2457 = vld [vmem:[%s783 + $0xac] sm:$0xf]
      %v2458 = vld [vmem:[%s783 + $0xb0] sm:$0x1]
      %v2459 = vld [vmem:[%s783 + $0xb4] sm:$0xf]
      %v2460 = vld [vmem:[%s783 + $0xb8] sm:$0xf]
      %v2461 = vld [vmem:[%s783 + $0xbc] sm:$0x1]
      %v2463 = vshrl.u32 %v2414, 16
      %v2465 = vrot.slane %v2463, 4
      %v2466 = vshll.u32 %v2414, 16
      %v2468 = vrot.slane %v2466, 5
      %v2469 = vor.u32 %v2465, %v2468
      %v2470 = vrot.slane %v2469, 4
      %v2472 = vshll.u32 %v2415, 16
      %v2474 = vrot.slane %v2472, 5
      %v2475 = vsel %vm949, %v2470, %v2474
      %v2476 = vshrl.u32 %v2415, 16
      %v2478 = vrot.slane %v2476, 4
      %v2479 = vor.u32 %v2478, %v2474
      %v2480 = vrot.slane %v2479, 4
      %v2482 = vshll.u32 %v2416, 16
      %v2484 = vrot.slane %v2482, 5
      %v2485 = vsel %vm949, %v2480, %v2484
      %v2487 = vshrl.u32 %v2417, 16
      %v2489 = vrot.slane %v2487, 4
      %v2490 = vshll.u32 %v2417, 16
      %v2492 = vrot.slane %v2490, 5
      %v2493 = vor.u32 %v2489, %v2492
      %v2494 = vrot.slane %v2493, 4
      %v2496 = vshll.u32 %v2418, 16
      %v2498 = vrot.slane %v2496, 5
      %v2499 = vsel %vm949, %v2494, %v2498
      %v2500 = vshrl.u32 %v2418, 16
      %v2502 = vrot.slane %v2500, 4
      %v2503 = vor.u32 %v2502, %v2498
      %v2504 = vrot.slane %v2503, 4
      %v2506 = vshll.u32 %v2419, 16
      %v2508 = vrot.slane %v2506, 5
      %v2509 = vsel %vm949, %v2504, %v2508
      %v2511 = vshrl.u32 %v2420, 16
      %v2513 = vrot.slane %v2511, 4
      %v2514 = vshll.u32 %v2420, 16
      %v2516 = vrot.slane %v2514, 5
      %v2517 = vor.u32 %v2513, %v2516
      %v2518 = vrot.slane %v2517, 4
      %v2520 = vshll.u32 %v2421, 16
      %v2522 = vrot.slane %v2520, 5
      %v2523 = vsel %vm949, %v2518, %v2522
      %v2524 = vshrl.u32 %v2421, 16
      %v2526 = vrot.slane %v2524, 4
      %v2527 = vor.u32 %v2526, %v2522
      %v2528 = vrot.slane %v2527, 4
      %v2530 = vshll.u32 %v2422, 16
      %v2532 = vrot.slane %v2530, 5
      %v2533 = vsel %vm949, %v2528, %v2532
      %v2535 = vshrl.u32 %v2423, 16
      %v2537 = vrot.slane %v2535, 4
      %v2538 = vshll.u32 %v2423, 16
      %v2540 = vrot.slane %v2538, 5
      %v2541 = vor.u32 %v2537, %v2540
      %v2542 = vrot.slane %v2541, 4
      %v2544 = vshll.u32 %v2424, 16
      %v2546 = vrot.slane %v2544, 5
      %v2547 = vsel %vm949, %v2542, %v2546
      %v2548 = vshrl.u32 %v2424, 16
      %v2550 = vrot.slane %v2548, 4
      %v2551 = vor.u32 %v2550, %v2546
      %v2552 = vrot.slane %v2551, 4
      %v2554 = vshll.u32 %v2425, 16
      %v2556 = vrot.slane %v2554, 5
      %v2557 = vsel %vm949, %v2552, %v2556
      %v2559 = vshrl.u32 %v2426, 16
      %v2561 = vrot.slane %v2559, 4
      %v2562 = vshll.u32 %v2426, 16
      %v2564 = vrot.slane %v2562, 5
      %v2565 = vor.u32 %v2561, %v2564
      %v2566 = vrot.slane %v2565, 4
      %v2568 = vshll.u32 %v2427, 16
      %v2570 = vrot.slane %v2568, 5
      %v2571 = vsel %vm949, %v2566, %v2570
      %v2572 = vshrl.u32 %v2427, 16
      %v2574 = vrot.slane %v2572, 4
      %v2575 = vor.u32 %v2574, %v2570
      %v2576 = vrot.slane %v2575, 4
      %v2578 = vshll.u32 %v2428, 16
      %v2580 = vrot.slane %v2578, 5
      %v2581 = vsel %vm949, %v2576, %v2580
      %v2583 = vshrl.u32 %v2429, 16
      %v2585 = vrot.slane %v2583, 4
      %v2586 = vshll.u32 %v2429, 16
      %v2588 = vrot.slane %v2586, 5
      %v2589 = vor.u32 %v2585, %v2588
      %v2590 = vrot.slane %v2589, 4
      %v2592 = vshll.u32 %v2430, 16
      %v2594 = vrot.slane %v2592, 5
      %v2595 = vsel %vm949, %v2590, %v2594
      %v2596 = vshrl.u32 %v2430, 16
      %v2598 = vrot.slane %v2596, 4
      %v2599 = vor.u32 %v2598, %v2594
      %v2600 = vrot.slane %v2599, 4
      %v2602 = vshll.u32 %v2431, 16
      %v2604 = vrot.slane %v2602, 5
      %v2605 = vsel %vm949, %v2600, %v2604
      %v2607 = vshrl.u32 %v2432, 16
      %v2609 = vrot.slane %v2607, 4
      %v2610 = vshll.u32 %v2432, 16
      %v2612 = vrot.slane %v2610, 5
      %v2613 = vor.u32 %v2609, %v2612
      %v2614 = vrot.slane %v2613, 4
      %v2616 = vshll.u32 %v2433, 16
      %v2618 = vrot.slane %v2616, 5
      %v2619 = vsel %vm949, %v2614, %v2618
      %v2620 = vshrl.u32 %v2433, 16
      %v2622 = vrot.slane %v2620, 4
      %v2623 = vor.u32 %v2622, %v2618
      %v2624 = vrot.slane %v2623, 4
      %v2626 = vshll.u32 %v2434, 16
      %v2628 = vrot.slane %v2626, 5
      %v2629 = vsel %vm949, %v2624, %v2628
      %v2631 = vshrl.u32 %v2435, 16
      %v2633 = vrot.slane %v2631, 4
      %v2634 = vshll.u32 %v2435, 16
      %v2636 = vrot.slane %v2634, 5
      %v2637 = vor.u32 %v2633, %v2636
      %v2638 = vrot.slane %v2637, 4
      %v2640 = vshll.u32 %v2436, 16
      %v2642 = vrot.slane %v2640, 5
      %v2643 = vsel %vm949, %v2638, %v2642
      %v2644 = vshrl.u32 %v2436, 16
      %v2646 = vrot.slane %v2644, 4
      %v2647 = vor.u32 %v2646, %v2642
      %v2648 = vrot.slane %v2647, 4
      %v2650 = vshll.u32 %v2437, 16
      %v2652 = vrot.slane %v2650, 5
      %v2653 = vsel %vm949, %v2648, %v2652
      %v2655 = vshrl.u32 %v2438, 16
      %v2657 = vrot.slane %v2655, 4
      %v2658 = vshll.u32 %v2438, 16
      %v2660 = vrot.slane %v2658, 5
      %v2661 = vor.u32 %v2657, %v2660
      %v2662 = vrot.slane %v2661, 4
      %v2664 = vshll.u32 %v2439, 16
      %v2666 = vrot.slane %v2664, 5
      %v2667 = vsel %vm949, %v2662, %v2666
      %v2668 = vshrl.u32 %v2439, 16
      %v2670 = vrot.slane %v2668, 4
      %v2671 = vor.u32 %v2670, %v2666
      %v2672 = vrot.slane %v2671, 4
      %v2674 = vshll.u32 %v2440, 16
      %v2676 = vrot.slane %v2674, 5
      %v2677 = vsel %vm949, %v2672, %v2676
      %v2679 = vshrl.u32 %v2441, 16
      %v2681 = vrot.slane %v2679, 4
      %v2682 = vshll.u32 %v2441, 16
      %v2684 = vrot.slane %v2682, 5
      %v2685 = vor.u32 %v2681, %v2684
      %v2686 = vrot.slane %v2685, 4
      %v2688 = vshll.u32 %v2442, 16
      %v2690 = vrot.slane %v2688, 5
      %v2691 = vsel %vm949, %v2686, %v2690
      %v2692 = vshrl.u32 %v2442, 16
      %v2694 = vrot.slane %v2692, 4
      %v2695 = vor.u32 %v2694, %v2690
      %v2696 = vrot.slane %v2695, 4
      %v2698 = vshll.u32 %v2443, 16
      %v2700 = vrot.slane %v2698, 5
      %v2701 = vsel %vm949, %v2696, %v2700
      %v2703 = vshrl.u32 %v2444, 16
      %v2705 = vrot.slane %v2703, 4
      %v2706 = vshll.u32 %v2444, 16
      %v2708 = vrot.slane %v2706, 5
      %v2709 = vor.u32 %v2705, %v2708
      %v2710 = vrot.slane %v2709, 4
      %v2712 = vshll.u32 %v2445, 16
      %v2714 = vrot.slane %v2712, 5
      %v2715 = vsel %vm949, %v2710, %v2714
      %v2716 = vshrl.u32 %v2445, 16
      %v2718 = vrot.slane %v2716, 4
      %v2719 = vor.u32 %v2718, %v2714
      %v2720 = vrot.slane %v2719, 4
      %v2722 = vshll.u32 %v2446, 16
      %v2724 = vrot.slane %v2722, 5
      %v2725 = vsel %vm949, %v2720, %v2724
      %v2727 = vshrl.u32 %v2447, 16
      %v2729 = vrot.slane %v2727, 4
      %v2730 = vshll.u32 %v2447, 16
      %v2732 = vrot.slane %v2730, 5
      %v2733 = vor.u32 %v2729, %v2732
      %v2734 = vrot.slane %v2733, 4
      %v2736 = vshll.u32 %v2448, 16
      %v2738 = vrot.slane %v2736, 5
      %v2739 = vsel %vm949, %v2734, %v2738
      %v2740 = vshrl.u32 %v2448, 16
      %v2742 = vrot.slane %v2740, 4
      %v2743 = vor.u32 %v2742, %v2738
      %v2744 = vrot.slane %v2743, 4
      %v2746 = vshll.u32 %v2449, 16
      %v2748 = vrot.slane %v2746, 5
      %v2749 = vsel %vm949, %v2744, %v2748
      %v2751 = vshrl.u32 %v2450, 16
      %v2753 = vrot.slane %v2751, 4
      %v2754 = vshll.u32 %v2450, 16
      %v2756 = vrot.slane %v2754, 5
      %v2757 = vor.u32 %v2753, %v2756
      %v2758 = vrot.slane %v2757, 4
      %v2760 = vshll.u32 %v2451, 16
      %v2762 = vrot.slane %v2760, 5
      %v2763 = vsel %vm949, %v2758, %v2762
      %v2764 = vshrl.u32 %v2451, 16
      %v2766 = vrot.slane %v2764, 4
      %v2767 = vor.u32 %v2766, %v2762
      %v2768 = vrot.slane %v2767, 4
      %v2770 = vshll.u32 %v2452, 16
      %v2772 = vrot.slane %v2770, 5
      %v2773 = vsel %vm949, %v2768, %v2772
      %v2775 = vshrl.u32 %v2453, 16
      %v2777 = vrot.slane %v2775, 4
      %v2778 = vshll.u32 %v2453, 16
      %v2780 = vrot.slane %v2778, 5
      %v2781 = vor.u32 %v2777, %v2780
      %v2782 = vrot.slane %v2781, 4
      %v2784 = vshll.u32 %v2454, 16
      %v2786 = vrot.slane %v2784, 5
      %v2787 = vsel %vm949, %v2782, %v2786
      %v2788 = vshrl.u32 %v2454, 16
      %v2790 = vrot.slane %v2788, 4
      %v2791 = vor.u32 %v2790, %v2786
      %v2792 = vrot.slane %v2791, 4
      %v2794 = vshll.u32 %v2455, 16
      %v2796 = vrot.slane %v2794, 5
      %v2797 = vsel %vm949, %v2792, %v2796
      %v2799 = vshrl.u32 %v2456, 16
      %v2801 = vrot.slane %v2799, 4
      %v2802 = vshll.u32 %v2456, 16
      %v2804 = vrot.slane %v2802, 5
      %v2805 = vor.u32 %v2801, %v2804
      %v2806 = vrot.slane %v2805, 4
      %v2808 = vshll.u32 %v2457, 16
      %v2810 = vrot.slane %v2808, 5
      %v2811 = vsel %vm949, %v2806, %v2810
      %v2812 = vshrl.u32 %v2457, 16
      %v2814 = vrot.slane %v2812, 4
      %v2815 = vor.u32 %v2814, %v2810
      %v2816 = vrot.slane %v2815, 4
      %v2818 = vshll.u32 %v2458, 16
      %v2820 = vrot.slane %v2818, 5
      %v2821 = vsel %vm949, %v2816, %v2820
      %v2823 = vshrl.u32 %v2459, 16
      %v2825 = vrot.slane %v2823, 4
      %v2826 = vshll.u32 %v2459, 16
      %v2828 = vrot.slane %v2826, 5
      %v2829 = vor.u32 %v2825, %v2828
      %v2830 = vrot.slane %v2829, 4
      %v2832 = vshll.u32 %v2460, 16
      %v2834 = vrot.slane %v2832, 5
      %v2835 = vsel %vm949, %v2830, %v2834
      %v2836 = vshrl.u32 %v2460, 16
      %v2838 = vrot.slane %v2836, 4
      %v2839 = vor.u32 %v2838, %v2834
      %v2840 = vrot.slane %v2839, 4
      %v2842 = vshll.u32 %v2461, 16
      %v2844 = vrot.slane %v2842, 5
      %v2845 = vsel %vm949, %v2840, %v2844
      %v2846 = vld [vmem:[%s1 + $0x10] sm:$0xf]
      %v2847 = vunpack.c.l.b16 %v2475
      %v2848 = vunpack.c.l.b16 %v2485
      %v2849 = vunpack.c.l.b16 %v2499
      %v2850 = vunpack.c.l.b16 %v2509
      %v2851 = vunpack.c.l.b16 %v2523
      %v2852 = vunpack.c.l.b16 %v2533
      %v2853 = vunpack.c.l.b16 %v2547
      %v2854 = vunpack.c.l.b16 %v2557
      %v2855 = vunpack.c.l.b16 %v2571
      %v2856 = vunpack.c.l.b16 %v2581
      %v2857 = vunpack.c.l.b16 %v2595
      %v2858 = vunpack.c.l.b16 %v2605
      %v2859 = vunpack.c.l.b16 %v2619
      %v2860 = vunpack.c.l.b16 %v2629
      %v2861 = vunpack.c.l.b16 %v2643
      %v2862 = vunpack.c.l.b16 %v2653
      %v2863 = vunpack.c.l.b16 %v2667
      %v2864 = vunpack.c.l.b16 %v2677
      %v2865 = vunpack.c.l.b16 %v2691
      %v2866 = vunpack.c.l.b16 %v2701
      %v2867 = vunpack.c.l.b16 %v2715
      %v2868 = vunpack.c.l.b16 %v2725
      %v2869 = vunpack.c.l.b16 %v2739
      %v2870 = vunpack.c.l.b16 %v2749
      %v2871 = vunpack.c.l.b16 %v2763
      %v2872 = vunpack.c.l.b16 %v2773
      %v2873 = vunpack.c.l.b16 %v2787
      %v2874 = vunpack.c.l.b16 %v2797
      %v2875 = vunpack.c.l.b16 %v2811
      %v2876 = vunpack.c.l.b16 %v2821
      %v2877 = vunpack.c.l.b16 %v2835
      %v2878 = vunpack.c.l.b16 %v2845
      %v2879 = vpack.c.b16 %v2848, %v2847
      %v2880 = vpack.c.b16 %v2850, %v2849
      %v2881 = vpack.c.b16 %v2852, %v2851
      %v2882 = vpack.c.b16 %v2854, %v2853
      %v2883 = vpack.c.b16 %v2856, %v2855
      %v2884 = vpack.c.b16 %v2858, %v2857
      %v2885 = vpack.c.b16 %v2860, %v2859
      %v2886 = vpack.c.b16 %v2862, %v2861
      %v2887 = vpack.c.b16 %v2864, %v2863
      %v2888 = vpack.c.b16 %v2866, %v2865
      %v2889 = vpack.c.b16 %v2868, %v2867
      %v2890 = vpack.c.b16 %v2870, %v2869
      %v2891 = vpack.c.b16 %v2872, %v2871
      %v2892 = vpack.c.b16 %v2874, %v2873
      %v2893 = vpack.c.b16 %v2876, %v2875
      %v2894 = vpack.c.b16 %v2878, %v2877
      %v2896 = vsel %vm1383, %v2879, 0
      %v2899 = vsel %vm1383, %v2880, 0
      %v2902 = vsel %vm1383, %v2881, 0
      %v2905 = vsel %vm1383, %v2882, 0
      %v2908 = vsel %vm1383, %v2883, 0
      %v2911 = vsel %vm1383, %v2884, 0
      %v2914 = vsel %vm1383, %v2885, 0
      %v2917 = vsel %vm1383, %v2886, 0
      %v2920 = vsel %vm1383, %v2887, 0
      %v2923 = vsel %vm1383, %v2888, 0
      %v2926 = vsel %vm1383, %v2889, 0
      %v2929 = vsel %vm1383, %v2890, 0
      %v2932 = vsel %vm1383, %v2891, 0
      %v2935 = vsel %vm1383, %v2892, 0
      %v2938 = vsel %vm1383, %v2893, 0
      %v2941 = vsel %vm1383, %v2894, 0
      %v2944 = vsel %vm1432, %v2846, 0
      %2946 = vmatpush.bf16.msra.mxu0 0
      %2947 = vmatpush.bf16.msra.mxu0 0
      %2948 = vmatpush.bf16.msra.mxu0 0
      %2949 = vmatpush.bf16.msra.mxu0 0
      %2950 = vmatpush.bf16.msra.mxu0 0
      %2951 = vmatpush.bf16.msra.mxu0 0
      %2952 = vmatpush.bf16.msra.mxu0 0
      %2953 = vmatpush.bf16.msra.mxu0 %v2944
      %2954 = vmatmul.bf16.gmra.mxu0 %v2896
      %v2955 = vpop.f32.mrf.mxu0
      %v2956 = vadd.f32 0.0, %v2955
      %v2957 = vpop.f32.mrf.mxu0
      %v2958 = vadd.f32 0.0, %v2957
      %2959 = vmatmul.bf16.gmra.mxu0 %v2899
      %v2960 = vpop.f32.mrf.mxu0
      %v2961 = vadd.f32 0.0, %v2960
      %v2962 = vpop.f32.mrf.mxu0
      %v2963 = vadd.f32 0.0, %v2962
      %2964 = vmatmul.bf16.gmra.mxu0 %v2902
      %v2965 = vpop.f32.mrf.mxu0
      %v2966 = vadd.f32 0.0, %v2965
      %v2967 = vpop.f32.mrf.mxu0
      %v2968 = vadd.f32 0.0, %v2967
      %2969 = vmatmul.bf16.gmra.mxu0 %v2905
      %v2970 = vpop.f32.mrf.mxu0
      %v2971 = vadd.f32 0.0, %v2970
      %v2972 = vpop.f32.mrf.mxu0
      %v2973 = vadd.f32 0.0, %v2972
      %2974 = vmatmul.bf16.gmra.mxu0 %v2908
      %v2975 = vpop.f32.mrf.mxu0
      %v2976 = vadd.f32 0.0, %v2975
      %v2977 = vpop.f32.mrf.mxu0
      %v2978 = vadd.f32 0.0, %v2977
      %2979 = vmatmul.bf16.gmra.mxu0 %v2911
      %v2980 = vpop.f32.mrf.mxu0
      %v2981 = vadd.f32 0.0, %v2980
      %v2982 = vpop.f32.mrf.mxu0
      %v2983 = vadd.f32 0.0, %v2982
      %2984 = vmatmul.bf16.gmra.mxu0 %v2914
      %v2985 = vpop.f32.mrf.mxu0
      %v2986 = vadd.f32 0.0, %v2985
      %v2987 = vpop.f32.mrf.mxu0
      %v2988 = vadd.f32 0.0, %v2987
      %2989 = vmatmul.bf16.gmra.mxu0 %v2917
      %v2990 = vpop.f32.mrf.mxu0
      %v2991 = vadd.f32 0.0, %v2990
      %v2992 = vpop.f32.mrf.mxu0
      %v2993 = vadd.f32 0.0, %v2992
      %2994 = vmatmul.bf16.gmra.mxu0 %v2920
      %v2995 = vpop.f32.mrf.mxu0
      %v2996 = vadd.f32 0.0, %v2995
      %v2997 = vpop.f32.mrf.mxu0
      %v2998 = vadd.f32 0.0, %v2997
      %2999 = vmatmul.bf16.gmra.mxu0 %v2923
      %v3000 = vpop.f32.mrf.mxu0
      %v3001 = vadd.f32 0.0, %v3000
      %v3002 = vpop.f32.mrf.mxu0
      %v3003 = vadd.f32 0.0, %v3002
      %3004 = vmatmul.bf16.gmra.mxu0 %v2926
      %v3005 = vpop.f32.mrf.mxu0
      %v3006 = vadd.f32 0.0, %v3005
      %v3007 = vpop.f32.mrf.mxu0
      %v3008 = vadd.f32 0.0, %v3007
      %3009 = vmatmul.bf16.gmra.mxu0 %v2929
      %v3010 = vpop.f32.mrf.mxu0
      %v3011 = vadd.f32 0.0, %v3010
      %v3012 = vpop.f32.mrf.mxu0
      %v3013 = vadd.f32 0.0, %v3012
      %3014 = vmatmul.bf16.gmra.mxu0 %v2932
      %v3015 = vpop.f32.mrf.mxu0
      %v3016 = vadd.f32 0.0, %v3015
      %v3017 = vpop.f32.mrf.mxu0
      %v3018 = vadd.f32 0.0, %v3017
      %3019 = vmatmul.bf16.gmra.mxu0 %v2935
      %v3020 = vpop.f32.mrf.mxu0
      %v3021 = vadd.f32 0.0, %v3020
      %v3022 = vpop.f32.mrf.mxu0
      %v3023 = vadd.f32 0.0, %v3022
      %3024 = vmatmul.bf16.gmra.mxu0 %v2938
      %v3025 = vpop.f32.mrf.mxu0
      %v3026 = vadd.f32 0.0, %v3025
      %v3027 = vpop.f32.mrf.mxu0
      %v3028 = vadd.f32 0.0, %v3027
      %3029 = vmatmul.bf16.gmra.mxu0 %v2941
      %v3030 = vpop.f32.mrf.mxu0
      %v3031 = vadd.f32 0.0, %v3030
      %v3032 = vpop.f32.mrf.mxu0
      %v3033 = vadd.f32 0.0, %v3032
      %3034 = vdwg.mxu0
      %v3035 = vadd.f32 %v2382, %v2956
      %v3036 = vadd.f32 %v2383, %v2958
      %v3037 = vadd.f32 %v2384, %v2961
      %v3038 = vadd.f32 %v2385, %v2963
      %v3039 = vadd.f32 %v2386, %v2966
      %v3040 = vadd.f32 %v2387, %v2968
      %v3041 = vadd.f32 %v2388, %v2971
      %v3042 = vadd.f32 %v2389, %v2973
      %v3043 = vadd.f32 %v2390, %v2976
      %v3044 = vadd.f32 %v2391, %v2978
      %v3045 = vadd.f32 %v2392, %v2981
      %v3046 = vadd.f32 %v2393, %v2983
      %v3047 = vadd.f32 %v2394, %v2986
      %v3048 = vadd.f32 %v2395, %v2988
      %v3049 = vadd.f32 %v2396, %v2991
      %v3050 = vadd.f32 %v2397, %v2993
      %v3051 = vadd.f32 %v2398, %v2996
      %v3052 = vadd.f32 %v2399, %v2998
      %v3053 = vadd.f32 %v2400, %v3001
      %v3054 = vadd.f32 %v2401, %v3003
      %v3055 = vadd.f32 %v2402, %v3006
      %v3056 = vadd.f32 %v2403, %v3008
      %v3057 = vadd.f32 %v2404, %v3011
      %v3058 = vadd.f32 %v2405, %v3013
      %v3059 = vadd.f32 %v2406, %v3016
      %v3060 = vadd.f32 %v2407, %v3018
      %v3061 = vadd.f32 %v2408, %v3021
      %v3062 = vadd.f32 %v2409, %v3023
      %v3063 = vadd.f32 %v2410, %v3026
      %v3064 = vadd.f32 %v2411, %v3028
      %v3065 = vadd.f32 %v2412, %v3031
      %v3066 = vadd.f32 %v2413, %v3033
      %v3067 = vld [vmem:[%s783] sm:$0xe]
      %v3068 = vld [vmem:[%s783 + $0xc] sm:$0xe]
      %v3069 = vld [vmem:[%s783 + $0x18] sm:$0xe]
      %v3070 = vld [vmem:[%s783 + $0x24] sm:$0xe]
      %v3071 = vld [vmem:[%s783 + $0x30] sm:$0xe]
      %v3072 = vld [vmem:[%s783 + $0x3c] sm:$0xe]
      %v3073 = vld [vmem:[%s783 + $0x48] sm:$0xe]
      %v3074 = vld [vmem:[%s783 + $0x54] sm:$0xe]
      %v3075 = vld [vmem:[%s783 + $0x60] sm:$0xe]
      %v3076 = vld [vmem:[%s783 + $0x6c] sm:$0xe]
      %v3077 = vld [vmem:[%s783 + $0x78] sm:$0xe]
      %v3078 = vld [vmem:[%s783 + $0x84] sm:$0xe]
      %v3079 = vld [vmem:[%s783 + $0x90] sm:$0xe]
      %v3080 = vld [vmem:[%s783 + $0x9c] sm:$0xe]
      %v3081 = vld [vmem:[%s783 + $0xa8] sm:$0xe]
      %v3082 = vld [vmem:[%s783 + $0xb4] sm:$0xe]
      %v3131 = vrot.slane %v3067, 5
      %v3132 = vrot.slane %v3131, 4
      %v3133 = vrot.slane %v2415, 5
      %v3134 = vsel %vm1795, %v3132, %v3133
      %v3135 = vrot.slane %v3133, 4
      %v3136 = vrot.slane %v2416, 5
      %v3137 = vsel %vm1795, %v3135, %v3136
      %v3138 = vrot.slane %v3068, 5
      %v3139 = vrot.slane %v3138, 4
      %v3140 = vrot.slane %v2418, 5
      %v3141 = vsel %vm1795, %v3139, %v3140
      %v3142 = vrot.slane %v3140, 4
      %v3143 = vrot.slane %v2419, 5
      %v3144 = vsel %vm1795, %v3142, %v3143
      %v3145 = vrot.slane %v3069, 5
      %v3146 = vrot.slane %v3145, 4
      %v3147 = vrot.slane %v2421, 5
      %v3148 = vsel %vm1795, %v3146, %v3147
      %v3149 = vrot.slane %v3147, 4
      %v3150 = vrot.slane %v2422, 5
      %v3151 = vsel %vm1795, %v3149, %v3150
      %v3152 = vrot.slane %v3070, 5
      %v3153 = vrot.slane %v3152, 4
      %v3154 = vrot.slane %v2424, 5
      %v3155 = vsel %vm1795, %v3153, %v3154
      %v3156 = vrot.slane %v3154, 4
      %v3157 = vrot.slane %v2425, 5
      %v3158 = vsel %vm1795, %v3156, %v3157
      %v3159 = vrot.slane %v3071, 5
      %v3160 = vrot.slane %v3159, 4
      %v3161 = vrot.slane %v2427, 5
      %v3162 = vsel %vm1795, %v3160, %v3161
      %v3163 = vrot.slane %v3161, 4
      %v3164 = vrot.slane %v2428, 5
      %v3165 = vsel %vm1795, %v3163, %v3164
      %v3166 = vrot.slane %v3072, 5
      %v3167 = vrot.slane %v3166, 4
      %v3168 = vrot.slane %v2430, 5
      %v3169 = vsel %vm1795, %v3167, %v3168
      %v3170 = vrot.slane %v3168, 4
      %v3171 = vrot.slane %v2431, 5
      %v3172 = vsel %vm1795, %v3170, %v3171
      %v3173 = vrot.slane %v3073, 5
      %v3174 = vrot.slane %v3173, 4
      %v3175 = vrot.slane %v2433, 5
      %v3176 = vsel %vm1795, %v3174, %v3175
      %v3177 = vrot.slane %v3175, 4
      %v3178 = vrot.slane %v2434, 5
      %v3179 = vsel %vm1795, %v3177, %v3178
      %v3180 = vrot.slane %v3074, 5
      %v3181 = vrot.slane %v3180, 4
      %v3182 = vrot.slane %v2436, 5
      %v3183 = vsel %vm1795, %v3181, %v3182
      %v3184 = vrot.slane %v3182, 4
      %v3185 = vrot.slane %v2437, 5
      %v3186 = vsel %vm1795, %v3184, %v3185
      %v3187 = vrot.slane %v3075, 5
      %v3188 = vrot.slane %v3187, 4
      %v3189 = vrot.slane %v2439, 5
      %v3190 = vsel %vm1795, %v3188, %v3189
      %v3191 = vrot.slane %v3189, 4
      %v3192 = vrot.slane %v2440, 5
      %v3193 = vsel %vm1795, %v3191, %v3192
      %v3194 = vrot.slane %v3076, 5
      %v3195 = vrot.slane %v3194, 4
      %v3196 = vrot.slane %v2442, 5
      %v3197 = vsel %vm1795, %v3195, %v3196
      %v3198 = vrot.slane %v3196, 4
      %v3199 = vrot.slane %v2443, 5
      %v3200 = vsel %vm1795, %v3198, %v3199
      %v3201 = vrot.slane %v3077, 5
      %v3202 = vrot.slane %v3201, 4
      %v3203 = vrot.slane %v2445, 5
      %v3204 = vsel %vm1795, %v3202, %v3203
      %v3205 = vrot.slane %v3203, 4
      %v3206 = vrot.slane %v2446, 5
      %v3207 = vsel %vm1795, %v3205, %v3206
      %v3208 = vrot.slane %v3078, 5
      %v3209 = vrot.slane %v3208, 4
      %v3210 = vrot.slane %v2448, 5
      %v3211 = vsel %vm1795, %v3209, %v3210
      %v3212 = vrot.slane %v3210, 4
      %v3213 = vrot.slane %v2449, 5
      %v3214 = vsel %vm1795, %v3212, %v3213
      %v3215 = vrot.slane %v3079, 5
      %v3216 = vrot.slane %v3215, 4
      %v3217 = vrot.slane %v2451, 5
      %v3218 = vsel %vm1795, %v3216, %v3217
      %v3219 = vrot.slane %v3217, 4
      %v3220 = vrot.slane %v2452, 5
      %v3221 = vsel %vm1795, %v3219, %v3220
      %v3222 = vrot.slane %v3080, 5
      %v3223 = vrot.slane %v3222, 4
      %v3224 = vrot.slane %v2454, 5
      %v3225 = vsel %vm1795, %v3223, %v3224
      %v3226 = vrot.slane %v3224, 4
      %v3227 = vrot.slane %v2455, 5
      %v3228 = vsel %vm1795, %v3226, %v3227
      %v3229 = vrot.slane %v3081, 5
      %v3230 = vrot.slane %v3229, 4
      %v3231 = vrot.slane %v2457, 5
      %v3232 = vsel %vm1795, %v3230, %v3231
      %v3233 = vrot.slane %v3231, 4
      %v3234 = vrot.slane %v2458, 5
      %v3235 = vsel %vm1795, %v3233, %v3234
      %v3236 = vrot.slane %v3082, 5
      %v3237 = vrot.slane %v3236, 4
      %v3238 = vrot.slane %v2460, 5
      %v3239 = vsel %vm1795, %v3237, %v3238
      %v3240 = vrot.slane %v3238, 4
      %v3241 = vrot.slane %v2461, 5
      %v3242 = vsel %vm1795, %v3240, %v3241
      %v3243 = vld [vmem:[%s1 + $0x14] sm:$0xf]
      %v3244 = vunpack.c.l.b16 %v3134
      %v3245 = vunpack.c.l.b16 %v3137
      %v3246 = vunpack.c.l.b16 %v3141
      %v3247 = vunpack.c.l.b16 %v3144
      %v3248 = vunpack.c.l.b16 %v3148
      %v3249 = vunpack.c.l.b16 %v3151
      %v3250 = vunpack.c.l.b16 %v3155
      %v3251 = vunpack.c.l.b16 %v3158
      %v3252 = vunpack.c.l.b16 %v3162
      %v3253 = vunpack.c.l.b16 %v3165
      %v3254 = vunpack.c.l.b16 %v3169
      %v3255 = vunpack.c.l.b16 %v3172
      %v3256 = vunpack.c.l.b16 %v3176
      %v3257 = vunpack.c.l.b16 %v3179
      %v3258 = vunpack.c.l.b16 %v3183
      %v3259 = vunpack.c.l.b16 %v3186
      %v3260 = vunpack.c.l.b16 %v3190
      %v3261 = vunpack.c.l.b16 %v3193
      %v3262 = vunpack.c.l.b16 %v3197
      %v3263 = vunpack.c.l.b16 %v3200
      %v3264 = vunpack.c.l.b16 %v3204
      %v3265 = vunpack.c.l.b16 %v3207
      %v3266 = vunpack.c.l.b16 %v3211
      %v3267 = vunpack.c.l.b16 %v3214
      %v3268 = vunpack.c.l.b16 %v3218
      %v3269 = vunpack.c.l.b16 %v3221
      %v3270 = vunpack.c.l.b16 %v3225
      %v3271 = vunpack.c.l.b16 %v3228
      %v3272 = vunpack.c.l.b16 %v3232
      %v3273 = vunpack.c.l.b16 %v3235
      %v3274 = vunpack.c.l.b16 %v3239
      %v3275 = vunpack.c.l.b16 %v3242
      %v3276 = vpack.c.b16 %v3245, %v3244
      %v3277 = vpack.c.b16 %v3247, %v3246
      %v3278 = vpack.c.b16 %v3249, %v3248
      %v3279 = vpack.c.b16 %v3251, %v3250
      %v3280 = vpack.c.b16 %v3253, %v3252
      %v3281 = vpack.c.b16 %v3255, %v3254
      %v3282 = vpack.c.b16 %v3257, %v3256
      %v3283 = vpack.c.b16 %v3259, %v3258
      %v3284 = vpack.c.b16 %v3261, %v3260
      %v3285 = vpack.c.b16 %v3263, %v3262
      %v3286 = vpack.c.b16 %v3265, %v3264
      %v3287 = vpack.c.b16 %v3267, %v3266
      %v3288 = vpack.c.b16 %v3269, %v3268
      %v3289 = vpack.c.b16 %v3271, %v3270
      %v3290 = vpack.c.b16 %v3273, %v3272
      %v3291 = vpack.c.b16 %v3275, %v3274
      %v3293 = vsel %vm1383, %v3276, 0
      %v3296 = vsel %vm1383, %v3277, 0
      %v3299 = vsel %vm1383, %v3278, 0
      %v3302 = vsel %vm1383, %v3279, 0
      %v3305 = vsel %vm1383, %v3280, 0
      %v3308 = vsel %vm1383, %v3281, 0
      %v3311 = vsel %vm1383, %v3282, 0
      %v3314 = vsel %vm1383, %v3283, 0
      %v3317 = vsel %vm1383, %v3284, 0
      %v3320 = vsel %vm1383, %v3285, 0
      %v3323 = vsel %vm1383, %v3286, 0
      %v3326 = vsel %vm1383, %v3287, 0
      %v3329 = vsel %vm1383, %v3288, 0
      %v3332 = vsel %vm1383, %v3289, 0
      %v3335 = vsel %vm1383, %v3290, 0
      %v3338 = vsel %vm1383, %v3291, 0
      %v3341 = vsel %vm1432, %v3243, 0
      %3343 = vmatpush.bf16.msra.mxu0 0
      %3344 = vmatpush.bf16.msra.mxu0 0
      %3345 = vmatpush.bf16.msra.mxu0 0
      %3346 = vmatpush.bf16.msra.mxu0 0
      %3347 = vmatpush.bf16.msra.mxu0 0
      %3348 = vmatpush.bf16.msra.mxu0 0
      %3349 = vmatpush.bf16.msra.mxu0 0
      %3350 = vmatpush.bf16.msra.mxu0 %v3341
      %3351 = vmatmul.bf16.gmra.mxu0 %v3293
      %v3352 = vpop.f32.mrf.mxu0
      %v3353 = vadd.f32 0.0, %v3352
      %v3354 = vpop.f32.mrf.mxu0
      %v3355 = vadd.f32 0.0, %v3354
      %3356 = vmatmul.bf16.gmra.mxu0 %v3296
      %v3357 = vpop.f32.mrf.mxu0
      %v3358 = vadd.f32 0.0, %v3357
      %v3359 = vpop.f32.mrf.mxu0
      %v3360 = vadd.f32 0.0, %v3359
      %3361 = vmatmul.bf16.gmra.mxu0 %v3299
      %v3362 = vpop.f32.mrf.mxu0
      %v3363 = vadd.f32 0.0, %v3362
      %v3364 = vpop.f32.mrf.mxu0
      %v3365 = vadd.f32 0.0, %v3364
      %3366 = vmatmul.bf16.gmra.mxu0 %v3302
      %v3367 = vpop.f32.mrf.mxu0
      %v3368 = vadd.f32 0.0, %v3367
      %v3369 = vpop.f32.mrf.mxu0
      %v3370 = vadd.f32 0.0, %v3369
      %3371 = vmatmul.bf16.gmra.mxu0 %v3305
      %v3372 = vpop.f32.mrf.mxu0
      %v3373 = vadd.f32 0.0, %v3372
      %v3374 = vpop.f32.mrf.mxu0
      %v3375 = vadd.f32 0.0, %v3374
      %3376 = vmatmul.bf16.gmra.mxu0 %v3308
      %v3377 = vpop.f32.mrf.mxu0
      %v3378 = vadd.f32 0.0, %v3377
      %v3379 = vpop.f32.mrf.mxu0
      %v3380 = vadd.f32 0.0, %v3379
      %3381 = vmatmul.bf16.gmra.mxu0 %v3311
      %v3382 = vpop.f32.mrf.mxu0
      %v3383 = vadd.f32 0.0, %v3382
      %v3384 = vpop.f32.mrf.mxu0
      %v3385 = vadd.f32 0.0, %v3384
      %3386 = vmatmul.bf16.gmra.mxu0 %v3314
      %v3387 = vpop.f32.mrf.mxu0
      %v3388 = vadd.f32 0.0, %v3387
      %v3389 = vpop.f32.mrf.mxu0
      %v3390 = vadd.f32 0.0, %v3389
      %3391 = vmatmul.bf16.gmra.mxu0 %v3317
      %v3392 = vpop.f32.mrf.mxu0
      %v3393 = vadd.f32 0.0, %v3392
      %v3394 = vpop.f32.mrf.mxu0
      %v3395 = vadd.f32 0.0, %v3394
      %3396 = vmatmul.bf16.gmra.mxu0 %v3320
      %v3397 = vpop.f32.mrf.mxu0
      %v3398 = vadd.f32 0.0, %v3397
      %v3399 = vpop.f32.mrf.mxu0
      %v3400 = vadd.f32 0.0, %v3399
      %3401 = vmatmul.bf16.gmra.mxu0 %v3323
      %v3402 = vpop.f32.mrf.mxu0
      %v3403 = vadd.f32 0.0, %v3402
      %v3404 = vpop.f32.mrf.mxu0
      %v3405 = vadd.f32 0.0, %v3404
      %3406 = vmatmul.bf16.gmra.mxu0 %v3326
      %v3407 = vpop.f32.mrf.mxu0
      %v3408 = vadd.f32 0.0, %v3407
      %v3409 = vpop.f32.mrf.mxu0
      %v3410 = vadd.f32 0.0, %v3409
      %3411 = vmatmul.bf16.gmra.mxu0 %v3329
      %v3412 = vpop.f32.mrf.mxu0
      %v3413 = vadd.f32 0.0, %v3412
      %v3414 = vpop.f32.mrf.mxu0
      %v3415 = vadd.f32 0.0, %v3414
      %3416 = vmatmul.bf16.gmra.mxu0 %v3332
      %v3417 = vpop.f32.mrf.mxu0
      %v3418 = vadd.f32 0.0, %v3417
      %v3419 = vpop.f32.mrf.mxu0
      %v3420 = vadd.f32 0.0, %v3419
      %3421 = vmatmul.bf16.gmra.mxu0 %v3335
      %v3422 = vpop.f32.mrf.mxu0
      %v3423 = vadd.f32 0.0, %v3422
      %v3424 = vpop.f32.mrf.mxu0
      %v3425 = vadd.f32 0.0, %v3424
      %3426 = vmatmul.bf16.gmra.mxu0 %v3338
      %v3427 = vpop.f32.mrf.mxu0
      %v3428 = vadd.f32 0.0, %v3427
      %v3429 = vpop.f32.mrf.mxu0
      %v3430 = vadd.f32 0.0, %v3429
      %3431 = vdwg.mxu0
      %v3432 = vadd.f32 %v3035, %v3353
      %v3433 = vadd.f32 %v3036, %v3355
      %v3434 = vadd.f32 %v3037, %v3358
      %v3435 = vadd.f32 %v3038, %v3360
      %v3436 = vadd.f32 %v3039, %v3363
      %v3437 = vadd.f32 %v3040, %v3365
      %v3438 = vadd.f32 %v3041, %v3368
      %v3439 = vadd.f32 %v3042, %v3370
      %v3440 = vadd.f32 %v3043, %v3373
      %v3441 = vadd.f32 %v3044, %v3375
      %v3442 = vadd.f32 %v3045, %v3378
      %v3443 = vadd.f32 %v3046, %v3380
      %v3444 = vadd.f32 %v3047, %v3383
      %v3445 = vadd.f32 %v3048, %v3385
      %v3446 = vadd.f32 %v3049, %v3388
      %v3447 = vadd.f32 %v3050, %v3390
      %v3448 = vadd.f32 %v3051, %v3393
      %v3449 = vadd.f32 %v3052, %v3395
      %v3450 = vadd.f32 %v3053, %v3398
      %v3451 = vadd.f32 %v3054, %v3400
      %v3452 = vadd.f32 %v3055, %v3403
      %v3453 = vadd.f32 %v3056, %v3405
      %v3454 = vadd.f32 %v3057, %v3408
      %v3455 = vadd.f32 %v3058, %v3410
      %v3456 = vadd.f32 %v3059, %v3413
      %v3457 = vadd.f32 %v3060, %v3415
      %v3458 = vadd.f32 %v3061, %v3418
      %v3459 = vadd.f32 %v3062, %v3420
      %v3460 = vadd.f32 %v3063, %v3423
      %v3461 = vadd.f32 %v3064, %v3425
      %v3462 = vadd.f32 %v3065, %v3428
      %v3463 = vadd.f32 %v3066, %v3430
      %s3464 = scalar_lea.vmem [#allocation2], 24
      %v3465 = vld [vmem:[%s3464] sm:$0xf]
      %v3466 = vld [vmem:[%s3464 + $0x4] sm:$0xf]
      %v3467 = vld [vmem:[%s3464 + $0xc] sm:$0xf]
      %v3468 = vld [vmem:[%s3464 + $0x10] sm:$0xf]
      %v3469 = vld [vmem:[%s3464 + $0x18] sm:$0xf]
      %v3470 = vld [vmem:[%s3464 + $0x1c] sm:$0xf]
      %v3471 = vld [vmem:[%s3464 + $0x24] sm:$0xf]
      %v3472 = vld [vmem:[%s3464 + $0x28] sm:$0xf]
      %v3473 = vld [vmem:[%s3464 + $0x30] sm:$0xf]
      %v3474 = vld [vmem:[%s3464 + $0x34] sm:$0xf]
      %v3475 = vld [vmem:[%s3464 + $0x3c] sm:$0xf]
      %v3476 = vld [vmem:[%s3464 + $0x40] sm:$0xf]
      %v3477 = vld [vmem:[%s3464 + $0x48] sm:$0xf]
      %v3478 = vld [vmem:[%s3464 + $0x4c] sm:$0xf]
      %v3479 = vld [vmem:[%s3464 + $0x54] sm:$0xf]
      %v3480 = vld [vmem:[%s3464 + $0x58] sm:$0xf]
      %v3481 = vld [vmem:[%s3464 + $0x60] sm:$0xf]
      %v3482 = vld [vmem:[%s3464 + $0x64] sm:$0xf]
      %v3483 = vld [vmem:[%s3464 + $0x6c] sm:$0xf]
      %v3484 = vld [vmem:[%s3464 + $0x70] sm:$0xf]
      %v3485 = vld [vmem:[%s3464 + $0x78] sm:$0xf]
      %v3486 = vld [vmem:[%s3464 + $0x7c] sm:$0xf]
      %v3487 = vld [vmem:[%s3464 + $0x84] sm:$0xf]
      %v3488 = vld [vmem:[%s3464 + $0x88] sm:$0xf]
      %v3489 = vld [vmem:[%s3464 + $0x90] sm:$0xf]
      %v3490 = vld [vmem:[%s3464 + $0x94] sm:$0xf]
      %v3491 = vld [vmem:[%s3464 + $0x9c] sm:$0xf]
      %v3492 = vld [vmem:[%s3464 + $0xa0] sm:$0xf]
      %v3493 = vld [vmem:[%s3464 + $0xa8] sm:$0xf]
      %v3494 = vld [vmem:[%s3464 + $0xac] sm:$0xf]
      %v3495 = vld [vmem:[%s3464 + $0xb4] sm:$0xf]
      %v3496 = vld [vmem:[%s3464 + $0xb8] sm:$0xf]
      %v3497 = vld [vmem:[%s1 + $0x18] sm:$0xf]
      %v3530 = vunpack.c.l.b16 %v3465
      %v3531 = vunpack.c.l.b16 %v3466
      %v3532 = vunpack.c.l.b16 %v3467
      %v3533 = vunpack.c.l.b16 %v3468
      %v3534 = vunpack.c.l.b16 %v3469
      %v3535 = vunpack.c.l.b16 %v3470
      %v3536 = vunpack.c.l.b16 %v3471
      %v3537 = vunpack.c.l.b16 %v3472
      %v3538 = vunpack.c.l.b16 %v3473
      %v3539 = vunpack.c.l.b16 %v3474
      %v3540 = vunpack.c.l.b16 %v3475
      %v3541 = vunpack.c.l.b16 %v3476
      %v3542 = vunpack.c.l.b16 %v3477
      %v3543 = vunpack.c.l.b16 %v3478
      %v3544 = vunpack.c.l.b16 %v3479
      %v3545 = vunpack.c.l.b16 %v3480
      %v3546 = vunpack.c.l.b16 %v3481
      %v3547 = vunpack.c.l.b16 %v3482
      %v3548 = vunpack.c.l.b16 %v3483
      %v3549 = vunpack.c.l.b16 %v3484
      %v3550 = vunpack.c.l.b16 %v3485
      %v3551 = vunpack.c.l.b16 %v3486
      %v3552 = vunpack.c.l.b16 %v3487
      %v3553 = vunpack.c.l.b16 %v3488
      %v3554 = vunpack.c.l.b16 %v3489
      %v3555 = vunpack.c.l.b16 %v3490
      %v3556 = vunpack.c.l.b16 %v3491
      %v3557 = vunpack.c.l.b16 %v3492
      %v3558 = vunpack.c.l.b16 %v3493
      %v3559 = vunpack.c.l.b16 %v3494
      %v3560 = vunpack.c.l.b16 %v3495
      %v3561 = vunpack.c.l.b16 %v3496
      %v3562 = vpack.c.b16 %v3531, %v3530
      %v3563 = vpack.c.b16 %v3533, %v3532
      %v3564 = vpack.c.b16 %v3535, %v3534
      %v3565 = vpack.c.b16 %v3537, %v3536
      %v3566 = vpack.c.b16 %v3539, %v3538
      %v3567 = vpack.c.b16 %v3541, %v3540
      %v3568 = vpack.c.b16 %v3543, %v3542
      %v3569 = vpack.c.b16 %v3545, %v3544
      %v3570 = vpack.c.b16 %v3547, %v3546
      %v3571 = vpack.c.b16 %v3549, %v3548
      %v3572 = vpack.c.b16 %v3551, %v3550
      %v3573 = vpack.c.b16 %v3553, %v3552
      %v3574 = vpack.c.b16 %v3555, %v3554
      %v3575 = vpack.c.b16 %v3557, %v3556
      %v3576 = vpack.c.b16 %v3559, %v3558
      %v3577 = vpack.c.b16 %v3561, %v3560
      %v3579 = vsel %vm1383, %v3562, 0
      %v3582 = vsel %vm1383, %v3563, 0
      %v3585 = vsel %vm1383, %v3564, 0
      %v3588 = vsel %vm1383, %v3565, 0
      %v3591 = vsel %vm1383, %v3566, 0
      %v3594 = vsel %vm1383, %v3567, 0
      %v3597 = vsel %vm1383, %v3568, 0
      %v3600 = vsel %vm1383, %v3569, 0
      %v3603 = vsel %vm1383, %v3570, 0
      %v3606 = vsel %vm1383, %v3571, 0
      %v3609 = vsel %vm1383, %v3572, 0
      %v3612 = vsel %vm1383, %v3573, 0
      %v3615 = vsel %vm1383, %v3574, 0
      %v3618 = vsel %vm1383, %v3575, 0
      %v3621 = vsel %vm1383, %v3576, 0
      %v3624 = vsel %vm1383, %v3577, 0
      %v3627 = vsel %vm1432, %v3497, 0
      %3629 = vmatpush.bf16.msra.mxu0 0
      %3630 = vmatpush.bf16.msra.mxu0 0
      %3631 = vmatpush.bf16.msra.mxu0 0
      %3632 = vmatpush.bf16.msra.mxu0 0
      %3633 = vmatpush.bf16.msra.mxu0 0
      %3634 = vmatpush.bf16.msra.mxu0 0
      %3635 = vmatpush.bf16.msra.mxu0 0
      %3636 = vmatpush.bf16.msra.mxu0 %v3627
      %3637 = vmatmul.bf16.gmra.mxu0 %v3579
      %v3638 = vpop.f32.mrf.mxu0
      %v3639 = vadd.f32 0.0, %v3638
      %v3640 = vpop.f32.mrf.mxu0
      %v3641 = vadd.f32 0.0, %v3640
      %3642 = vmatmul.bf16.gmra.mxu0 %v3582
      %v3643 = vpop.f32.mrf.mxu0
      %v3644 = vadd.f32 0.0, %v3643
      %v3645 = vpop.f32.mrf.mxu0
      %v3646 = vadd.f32 0.0, %v3645
      %3647 = vmatmul.bf16.gmra.mxu0 %v3585
      %v3648 = vpop.f32.mrf.mxu0
      %v3649 = vadd.f32 0.0, %v3648
      %v3650 = vpop.f32.mrf.mxu0
      %v3651 = vadd.f32 0.0, %v3650
      %3652 = vmatmul.bf16.gmra.mxu0 %v3588
      %v3653 = vpop.f32.mrf.mxu0
      %v3654 = vadd.f32 0.0, %v3653
      %v3655 = vpop.f32.mrf.mxu0
      %v3656 = vadd.f32 0.0, %v3655
      %3657 = vmatmul.bf16.gmra.mxu0 %v3591
      %v3658 = vpop.f32.mrf.mxu0
      %v3659 = vadd.f32 0.0, %v3658
      %v3660 = vpop.f32.mrf.mxu0
      %v3661 = vadd.f32 0.0, %v3660
      %3662 = vmatmul.bf16.gmra.mxu0 %v3594
      %v3663 = vpop.f32.mrf.mxu0
      %v3664 = vadd.f32 0.0, %v3663
      %v3665 = vpop.f32.mrf.mxu0
      %v3666 = vadd.f32 0.0, %v3665
      %3667 = vmatmul.bf16.gmra.mxu0 %v3597
      %v3668 = vpop.f32.mrf.mxu0
      %v3669 = vadd.f32 0.0, %v3668
      %v3670 = vpop.f32.mrf.mxu0
      %v3671 = vadd.f32 0.0, %v3670
      %3672 = vmatmul.bf16.gmra.mxu0 %v3600
      %v3673 = vpop.f32.mrf.mxu0
      %v3674 = vadd.f32 0.0, %v3673
      %v3675 = vpop.f32.mrf.mxu0
      %v3676 = vadd.f32 0.0, %v3675
      %3677 = vmatmul.bf16.gmra.mxu0 %v3603
      %v3678 = vpop.f32.mrf.mxu0
      %v3679 = vadd.f32 0.0, %v3678
      %v3680 = vpop.f32.mrf.mxu0
      %v3681 = vadd.f32 0.0, %v3680
      %3682 = vmatmul.bf16.gmra.mxu0 %v3606
      %v3683 = vpop.f32.mrf.mxu0
      %v3684 = vadd.f32 0.0, %v3683
      %v3685 = vpop.f32.mrf.mxu0
      %v3686 = vadd.f32 0.0, %v3685
      %3687 = vmatmul.bf16.gmra.mxu0 %v3609
      %v3688 = vpop.f32.mrf.mxu0
      %v3689 = vadd.f32 0.0, %v3688
      %v3690 = vpop.f32.mrf.mxu0
      %v3691 = vadd.f32 0.0, %v3690
      %3692 = vmatmul.bf16.gmra.mxu0 %v3612
      %v3693 = vpop.f32.mrf.mxu0
      %v3694 = vadd.f32 0.0, %v3693
      %v3695 = vpop.f32.mrf.mxu0
      %v3696 = vadd.f32 0.0, %v3695
      %3697 = vmatmul.bf16.gmra.mxu0 %v3615
      %v3698 = vpop.f32.mrf.mxu0
      %v3699 = vadd.f32 0.0, %v3698
      %v3700 = vpop.f32.mrf.mxu0
      %v3701 = vadd.f32 0.0, %v3700
      %3702 = vmatmul.bf16.gmra.mxu0 %v3618
      %v3703 = vpop.f32.mrf.mxu0
      %v3704 = vadd.f32 0.0, %v3703
      %v3705 = vpop.f32.mrf.mxu0
      %v3706 = vadd.f32 0.0, %v3705
      %3707 = vmatmul.bf16.gmra.mxu0 %v3621
      %v3708 = vpop.f32.mrf.mxu0
      %v3709 = vadd.f32 0.0, %v3708
      %v3710 = vpop.f32.mrf.mxu0
      %v3711 = vadd.f32 0.0, %v3710
      %3712 = vmatmul.bf16.gmra.mxu0 %v3624
      %v3713 = vpop.f32.mrf.mxu0
      %v3714 = vadd.f32 0.0, %v3713
      %v3715 = vpop.f32.mrf.mxu0
      %v3716 = vadd.f32 0.0, %v3715
      %3717 = vdwg.mxu0
      %v3718 = vadd.f32 %v3432, %v3639
      %v3719 = vadd.f32 %v3433, %v3641
      %v3720 = vadd.f32 %v3434, %v3644
      %v3721 = vadd.f32 %v3435, %v3646
      %v3722 = vadd.f32 %v3436, %v3649
      %v3723 = vadd.f32 %v3437, %v3651
      %v3724 = vadd.f32 %v3438, %v3654
      %v3725 = vadd.f32 %v3439, %v3656
      %v3726 = vadd.f32 %v3440, %v3659
      %v3727 = vadd.f32 %v3441, %v3661
      %v3728 = vadd.f32 %v3442, %v3664
      %v3729 = vadd.f32 %v3443, %v3666
      %v3730 = vadd.f32 %v3444, %v3669
      %v3731 = vadd.f32 %v3445, %v3671
      %v3732 = vadd.f32 %v3446, %v3674
      %v3733 = vadd.f32 %v3447, %v3676
      %v3734 = vadd.f32 %v3448, %v3679
      %v3735 = vadd.f32 %v3449, %v3681
      %v3736 = vadd.f32 %v3450, %v3684
      %v3737 = vadd.f32 %v3451, %v3686
      %v3738 = vadd.f32 %v3452, %v3689
      %v3739 = vadd.f32 %v3453, %v3691
      %v3740 = vadd.f32 %v3454, %v3694
      %v3741 = vadd.f32 %v3455, %v3696
      %v3742 = vadd.f32 %v3456, %v3699
      %v3743 = vadd.f32 %v3457, %v3701
      %v3744 = vadd.f32 %v3458, %v3704
      %v3745 = vadd.f32 %v3459, %v3706
      %v3746 = vadd.f32 %v3460, %v3709
      %v3747 = vadd.f32 %v3461, %v3711
      %v3748 = vadd.f32 %v3462, %v3714
      %v3749 = vadd.f32 %v3463, %v3716
      %v3750 = vld [vmem:[%s3464] sm:$0xf]
      %v3751 = vld [vmem:[%s3464 + $0x4] sm:$0xf]
      %v3752 = vld [vmem:[%s3464 + $0x8] sm:$0x1]
      %v3753 = vld [vmem:[%s3464 + $0xc] sm:$0xf]
      %v3754 = vld [vmem:[%s3464 + $0x10] sm:$0xf]
      %v3755 = vld [vmem:[%s3464 + $0x14] sm:$0x1]
      %v3756 = vld [vmem:[%s3464 + $0x18] sm:$0xf]
      %v3757 = vld [vmem:[%s3464 + $0x1c] sm:$0xf]
      %v3758 = vld [vmem:[%s3464 + $0x20] sm:$0x1]
      %v3759 = vld [vmem:[%s3464 + $0x24] sm:$0xf]
      %v3760 = vld [vmem:[%s3464 + $0x28] sm:$0xf]
      %v3761 = vld [vmem:[%s3464 + $0x2c] sm:$0x1]
      %v3762 = vld [vmem:[%s3464 + $0x30] sm:$0xf]
      %v3763 = vld [vmem:[%s3464 + $0x34] sm:$0xf]
      %v3764 = vld [vmem:[%s3464 + $0x38] sm:$0x1]
      %v3765 = vld [vmem:[%s3464 + $0x3c] sm:$0xf]
      %v3766 = vld [vmem:[%s3464 + $0x40] sm:$0xf]
      %v3767 = vld [vmem:[%s3464 + $0x44] sm:$0x1]
      %v3768 = vld [vmem:[%s3464 + $0x48] sm:$0xf]
      %v3769 = vld [vmem:[%s3464 + $0x4c] sm:$0xf]
      %v3770 = vld [vmem:[%s3464 + $0x50] sm:$0x1]
      %v3771 = vld [vmem:[%s3464 + $0x54] sm:$0xf]
      %v3772 = vld [vmem:[%s3464 + $0x58] sm:$0xf]
      %v3773 = vld [vmem:[%s3464 + $0x5c] sm:$0x1]
      %v3774 = vld [vmem:[%s3464 + $0x60] sm:$0xf]
      %v3775 = vld [vmem:[%s3464 + $0x64] sm:$0xf]
      %v3776 = vld [vmem:[%s3464 + $0x68] sm:$0x1]
      %v3777 = vld [vmem:[%s3464 + $0x6c] sm:$0xf]
      %v3778 = vld [vmem:[%s3464 + $0x70] sm:$0xf]
      %v3779 = vld [vmem:[%s3464 + $0x74] sm:$0x1]
      %v3780 = vld [vmem:[%s3464 + $0x78] sm:$0xf]
      %v3781 = vld [vmem:[%s3464 + $0x7c] sm:$0xf]
      %v3782 = vld [vmem:[%s3464 + $0x80] sm:$0x1]
      %v3783 = vld [vmem:[%s3464 + $0x84] sm:$0xf]
      %v3784 = vld [vmem:[%s3464 + $0x88] sm:$0xf]
      %v3785 = vld [vmem:[%s3464 + $0x8c] sm:$0x1]
      %v3786 = vld [vmem:[%s3464 + $0x90] sm:$0xf]
      %v3787 = vld [vmem:[%s3464 + $0x94] sm:$0xf]
      %v3788 = vld [vmem:[%s3464 + $0x98] sm:$0x1]
      %v3789 = vld [vmem:[%s3464 + $0x9c] sm:$0xf]
      %v3790 = vld [vmem:[%s3464 + $0xa0] sm:$0xf]
      %v3791 = vld [vmem:[%s3464 + $0xa4] sm:$0x1]
      %v3792 = vld [vmem:[%s3464 + $0xa8] sm:$0xf]
      %v3793 = vld [vmem:[%s3464 + $0xac] sm:$0xf]
      %v3794 = vld [vmem:[%s3464 + $0xb0] sm:$0x1]
      %v3795 = vld [vmem:[%s3464 + $0xb4] sm:$0xf]
      %v3796 = vld [vmem:[%s3464 + $0xb8] sm:$0xf]
      %v3797 = vld [vmem:[%s3464 + $0xbc] sm:$0x1]
      %v3799 = vshrl.u32 %v3750, 16
      %v3801 = vrot.slane %v3799, 4
      %v3802 = vshll.u32 %v3750, 16
      %v3804 = vrot.slane %v3802, 5
      %v3805 = vor.u32 %v3801, %v3804
      %v3806 = vrot.slane %v3805, 4
      %v3808 = vshll.u32 %v3751, 16
      %v3810 = vrot.slane %v3808, 5
      %v3811 = vsel %vm949, %v3806, %v3810
      %v3812 = vshrl.u32 %v3751, 16
      %v3814 = vrot.slane %v3812, 4
      %v3815 = vor.u32 %v3814, %v3810
      %v3816 = vrot.slane %v3815, 4
      %v3818 = vshll.u32 %v3752, 16
      %v3820 = vrot.slane %v3818, 5
      %v3821 = vsel %vm949, %v3816, %v3820
      %v3823 = vshrl.u32 %v3753, 16
      %v3825 = vrot.slane %v3823, 4
      %v3826 = vshll.u32 %v3753, 16
      %v3828 = vrot.slane %v3826, 5
      %v3829 = vor.u32 %v3825, %v3828
      %v3830 = vrot.slane %v3829, 4
      %v3832 = vshll.u32 %v3754, 16
      %v3834 = vrot.slane %v3832, 5
      %v3835 = vsel %vm949, %v3830, %v3834
      %v3836 = vshrl.u32 %v3754, 16
      %v3838 = vrot.slane %v3836, 4
      %v3839 = vor.u32 %v3838, %v3834
      %v3840 = vrot.slane %v3839, 4
      %v3842 = vshll.u32 %v3755, 16
      %v3844 = vrot.slane %v3842, 5
      %v3845 = vsel %vm949, %v3840, %v3844
      %v3847 = vshrl.u32 %v3756, 16
      %v3849 = vrot.slane %v3847, 4
      %v3850 = vshll.u32 %v3756, 16
      %v3852 = vrot.slane %v3850, 5
      %v3853 = vor.u32 %v3849, %v3852
      %v3854 = vrot.slane %v3853, 4
      %v3856 = vshll.u32 %v3757, 16
      %v3858 = vrot.slane %v3856, 5
      %v3859 = vsel %vm949, %v3854, %v3858
      %v3860 = vshrl.u32 %v3757, 16
      %v3862 = vrot.slane %v3860, 4
      %v3863 = vor.u32 %v3862, %v3858
      %v3864 = vrot.slane %v3863, 4
      %v3866 = vshll.u32 %v3758, 16
      %v3868 = vrot.slane %v3866, 5
      %v3869 = vsel %vm949, %v3864, %v3868
      %v3871 = vshrl.u32 %v3759, 16
      %v3873 = vrot.slane %v3871, 4
      %v3874 = vshll.u32 %v3759, 16
      %v3876 = vrot.slane %v3874, 5
      %v3877 = vor.u32 %v3873, %v3876
      %v3878 = vrot.slane %v3877, 4
      %v3880 = vshll.u32 %v3760, 16
      %v3882 = vrot.slane %v3880, 5
      %v3883 = vsel %vm949, %v3878, %v3882
      %v3884 = vshrl.u32 %v3760, 16
      %v3886 = vrot.slane %v3884, 4
      %v3887 = vor.u32 %v3886, %v3882
      %v3888 = vrot.slane %v3887, 4
      %v3890 = vshll.u32 %v3761, 16
      %v3892 = vrot.slane %v3890, 5
      %v3893 = vsel %vm949, %v3888, %v3892
      %v3895 = vshrl.u32 %v3762, 16
      %v3897 = vrot.slane %v3895, 4
      %v3898 = vshll.u32 %v3762, 16
      %v3900 = vrot.slane %v3898, 5
      %v3901 = vor.u32 %v3897, %v3900
      %v3902 = vrot.slane %v3901, 4
      %v3904 = vshll.u32 %v3763, 16
      %v3906 = vrot.slane %v3904, 5
      %v3907 = vsel %vm949, %v3902, %v3906
      %v3908 = vshrl.u32 %v3763, 16
      %v3910 = vrot.slane %v3908, 4
      %v3911 = vor.u32 %v3910, %v3906
      %v3912 = vrot.slane %v3911, 4
      %v3914 = vshll.u32 %v3764, 16
      %v3916 = vrot.slane %v3914, 5
      %v3917 = vsel %vm949, %v3912, %v3916
      %v3919 = vshrl.u32 %v3765, 16
      %v3921 = vrot.slane %v3919, 4
      %v3922 = vshll.u32 %v3765, 16
      %v3924 = vrot.slane %v3922, 5
      %v3925 = vor.u32 %v3921, %v3924
      %v3926 = vrot.slane %v3925, 4
      %v3928 = vshll.u32 %v3766, 16
      %v3930 = vrot.slane %v3928, 5
      %v3931 = vsel %vm949, %v3926, %v3930
      %v3932 = vshrl.u32 %v3766, 16
      %v3934 = vrot.slane %v3932, 4
      %v3935 = vor.u32 %v3934, %v3930
      %v3936 = vrot.slane %v3935, 4
      %v3938 = vshll.u32 %v3767, 16
      %v3940 = vrot.slane %v3938, 5
      %v3941 = vsel %vm949, %v3936, %v3940
      %v3943 = vshrl.u32 %v3768, 16
      %v3945 = vrot.slane %v3943, 4
      %v3946 = vshll.u32 %v3768, 16
      %v3948 = vrot.slane %v3946, 5
      %v3949 = vor.u32 %v3945, %v3948
      %v3950 = vrot.slane %v3949, 4
      %v3952 = vshll.u32 %v3769, 16
      %v3954 = vrot.slane %v3952, 5
      %v3955 = vsel %vm949, %v3950, %v3954
      %v3956 = vshrl.u32 %v3769, 16
      %v3958 = vrot.slane %v3956, 4
      %v3959 = vor.u32 %v3958, %v3954
      %v3960 = vrot.slane %v3959, 4
      %v3962 = vshll.u32 %v3770, 16
      %v3964 = vrot.slane %v3962, 5
      %v3965 = vsel %vm949, %v3960, %v3964
      %v3967 = vshrl.u32 %v3771, 16
      %v3969 = vrot.slane %v3967, 4
      %v3970 = vshll.u32 %v3771, 16
      %v3972 = vrot.slane %v3970, 5
      %v3973 = vor.u32 %v3969, %v3972
      %v3974 = vrot.slane %v3973, 4
      %v3976 = vshll.u32 %v3772, 16
      %v3978 = vrot.slane %v3976, 5
      %v3979 = vsel %vm949, %v3974, %v3978
      %v3980 = vshrl.u32 %v3772, 16
      %v3982 = vrot.slane %v3980, 4
      %v3983 = vor.u32 %v3982, %v3978
      %v3984 = vrot.slane %v3983, 4
      %v3986 = vshll.u32 %v3773, 16
      %v3988 = vrot.slane %v3986, 5
      %v3989 = vsel %vm949, %v3984, %v3988
      %v3991 = vshrl.u32 %v3774, 16
      %v3993 = vrot.slane %v3991, 4
      %v3994 = vshll.u32 %v3774, 16
      %v3996 = vrot.slane %v3994, 5
      %v3997 = vor.u32 %v3993, %v3996
      %v3998 = vrot.slane %v3997, 4
      %v4000 = vshll.u32 %v3775, 16
      %v4002 = vrot.slane %v4000, 5
      %v4003 = vsel %vm949, %v3998, %v4002
      %v4004 = vshrl.u32 %v3775, 16
      %v4006 = vrot.slane %v4004, 4
      %v4007 = vor.u32 %v4006, %v4002
      %v4008 = vrot.slane %v4007, 4
      %v4010 = vshll.u32 %v3776, 16
      %v4012 = vrot.slane %v4010, 5
      %v4013 = vsel %vm949, %v4008, %v4012
      %v4015 = vshrl.u32 %v3777, 16
      %v4017 = vrot.slane %v4015, 4
      %v4018 = vshll.u32 %v3777, 16
      %v4020 = vrot.slane %v4018, 5
      %v4021 = vor.u32 %v4017, %v4020
      %v4022 = vrot.slane %v4021, 4
      %v4024 = vshll.u32 %v3778, 16
      %v4026 = vrot.slane %v4024, 5
      %v4027 = vsel %vm949, %v4022, %v4026
      %v4028 = vshrl.u32 %v3778, 16
      %v4030 = vrot.slane %v4028, 4
      %v4031 = vor.u32 %v4030, %v4026
      %v4032 = vrot.slane %v4031, 4
      %v4034 = vshll.u32 %v3779, 16
      %v4036 = vrot.slane %v4034, 5
      %v4037 = vsel %vm949, %v4032, %v4036
      %v4039 = vshrl.u32 %v3780, 16
      %v4041 = vrot.slane %v4039, 4
      %v4042 = vshll.u32 %v3780, 16
      %v4044 = vrot.slane %v4042, 5
      %v4045 = vor.u32 %v4041, %v4044
      %v4046 = vrot.slane %v4045, 4
      %v4048 = vshll.u32 %v3781, 16
      %v4050 = vrot.slane %v4048, 5
      %v4051 = vsel %vm949, %v4046, %v4050
      %v4052 = vshrl.u32 %v3781, 16
      %v4054 = vrot.slane %v4052, 4
      %v4055 = vor.u32 %v4054, %v4050
      %v4056 = vrot.slane %v4055, 4
      %v4058 = vshll.u32 %v3782, 16
      %v4060 = vrot.slane %v4058, 5
      %v4061 = vsel %vm949, %v4056, %v4060
      %v4063 = vshrl.u32 %v3783, 16
      %v4065 = vrot.slane %v4063, 4
      %v4066 = vshll.u32 %v3783, 16
      %v4068 = vrot.slane %v4066, 5
      %v4069 = vor.u32 %v4065, %v4068
      %v4070 = vrot.slane %v4069, 4
      %v4072 = vshll.u32 %v3784, 16
      %v4074 = vrot.slane %v4072, 5
      %v4075 = vsel %vm949, %v4070, %v4074
      %v4076 = vshrl.u32 %v3784, 16
      %v4078 = vrot.slane %v4076, 4
      %v4079 = vor.u32 %v4078, %v4074
      %v4080 = vrot.slane %v4079, 4
      %v4082 = vshll.u32 %v3785, 16
      %v4084 = vrot.slane %v4082, 5
      %v4085 = vsel %vm949, %v4080, %v4084
      %v4087 = vshrl.u32 %v3786, 16
      %v4089 = vrot.slane %v4087, 4
      %v4090 = vshll.u32 %v3786, 16
      %v4092 = vrot.slane %v4090, 5
      %v4093 = vor.u32 %v4089, %v4092
      %v4094 = vrot.slane %v4093, 4
      %v4096 = vshll.u32 %v3787, 16
      %v4098 = vrot.slane %v4096, 5
      %v4099 = vsel %vm949, %v4094, %v4098
      %v4100 = vshrl.u32 %v3787, 16
      %v4102 = vrot.slane %v4100, 4
      %v4103 = vor.u32 %v4102, %v4098
      %v4104 = vrot.slane %v4103, 4
      %v4106 = vshll.u32 %v3788, 16
      %v4108 = vrot.slane %v4106, 5
      %v4109 = vsel %vm949, %v4104, %v4108
      %v4111 = vshrl.u32 %v3789, 16
      %v4113 = vrot.slane %v4111, 4
      %v4114 = vshll.u32 %v3789, 16
      %v4116 = vrot.slane %v4114, 5
      %v4117 = vor.u32 %v4113, %v4116
      %v4118 = vrot.slane %v4117, 4
      %v4120 = vshll.u32 %v3790, 16
      %v4122 = vrot.slane %v4120, 5
      %v4123 = vsel %vm949, %v4118, %v4122
      %v4124 = vshrl.u32 %v3790, 16
      %v4126 = vrot.slane %v4124, 4
      %v4127 = vor.u32 %v4126, %v4122
      %v4128 = vrot.slane %v4127, 4
      %v4130 = vshll.u32 %v3791, 16
      %v4132 = vrot.slane %v4130, 5
      %v4133 = vsel %vm949, %v4128, %v4132
      %v4135 = vshrl.u32 %v3792, 16
      %v4137 = vrot.slane %v4135, 4
      %v4138 = vshll.u32 %v3792, 16
      %v4140 = vrot.slane %v4138, 5
      %v4141 = vor.u32 %v4137, %v4140
      %v4142 = vrot.slane %v4141, 4
      %v4144 = vshll.u32 %v3793, 16
      %v4146 = vrot.slane %v4144, 5
      %v4147 = vsel %vm949, %v4142, %v4146
      %v4148 = vshrl.u32 %v3793, 16
      %v4150 = vrot.slane %v4148, 4
      %v4151 = vor.u32 %v4150, %v4146
      %v4152 = vrot.slane %v4151, 4
      %v4154 = vshll.u32 %v3794, 16
      %v4156 = vrot.slane %v4154, 5
      %v4157 = vsel %vm949, %v4152, %v4156
      %v4159 = vshrl.u32 %v3795, 16
      %v4161 = vrot.slane %v4159, 4
      %v4162 = vshll.u32 %v3795, 16
      %v4164 = vrot.slane %v4162, 5
      %v4165 = vor.u32 %v4161, %v4164
      %v4166 = vrot.slane %v4165, 4
      %v4168 = vshll.u32 %v3796, 16
      %v4170 = vrot.slane %v4168, 5
      %v4171 = vsel %vm949, %v4166, %v4170
      %v4172 = vshrl.u32 %v3796, 16
      %v4174 = vrot.slane %v4172, 4
      %v4175 = vor.u32 %v4174, %v4170
      %v4176 = vrot.slane %v4175, 4
      %v4178 = vshll.u32 %v3797, 16
      %v4180 = vrot.slane %v4178, 5
      %v4181 = vsel %vm949, %v4176, %v4180
      %v4182 = vld [vmem:[%s1 + $0x1c] sm:$0xf]
      %v4183 = vunpack.c.l.b16 %v3811
      %v4184 = vunpack.c.l.b16 %v3821
      %v4185 = vunpack.c.l.b16 %v3835
      %v4186 = vunpack.c.l.b16 %v3845
      %v4187 = vunpack.c.l.b16 %v3859
      %v4188 = vunpack.c.l.b16 %v3869
      %v4189 = vunpack.c.l.b16 %v3883
      %v4190 = vunpack.c.l.b16 %v3893
      %v4191 = vunpack.c.l.b16 %v3907
      %v4192 = vunpack.c.l.b16 %v3917
      %v4193 = vunpack.c.l.b16 %v3931
      %v4194 = vunpack.c.l.b16 %v3941
      %v4195 = vunpack.c.l.b16 %v3955
      %v4196 = vunpack.c.l.b16 %v3965
      %v4197 = vunpack.c.l.b16 %v3979
      %v4198 = vunpack.c.l.b16 %v3989
      %v4199 = vunpack.c.l.b16 %v4003
      %v4200 = vunpack.c.l.b16 %v4013
      %v4201 = vunpack.c.l.b16 %v4027
      %v4202 = vunpack.c.l.b16 %v4037
      %v4203 = vunpack.c.l.b16 %v4051
      %v4204 = vunpack.c.l.b16 %v4061
      %v4205 = vunpack.c.l.b16 %v4075
      %v4206 = vunpack.c.l.b16 %v4085
      %v4207 = vunpack.c.l.b16 %v4099
      %v4208 = vunpack.c.l.b16 %v4109
      %v4209 = vunpack.c.l.b16 %v4123
      %v4210 = vunpack.c.l.b16 %v4133
      %v4211 = vunpack.c.l.b16 %v4147
      %v4212 = vunpack.c.l.b16 %v4157
      %v4213 = vunpack.c.l.b16 %v4171
      %v4214 = vunpack.c.l.b16 %v4181
      %v4215 = vpack.c.b16 %v4184, %v4183
      %v4216 = vpack.c.b16 %v4186, %v4185
      %v4217 = vpack.c.b16 %v4188, %v4187
      %v4218 = vpack.c.b16 %v4190, %v4189
      %v4219 = vpack.c.b16 %v4192, %v4191
      %v4220 = vpack.c.b16 %v4194, %v4193
      %v4221 = vpack.c.b16 %v4196, %v4195
      %v4222 = vpack.c.b16 %v4198, %v4197
      %v4223 = vpack.c.b16 %v4200, %v4199
      %v4224 = vpack.c.b16 %v4202, %v4201
      %v4225 = vpack.c.b16 %v4204, %v4203
      %v4226 = vpack.c.b16 %v4206, %v4205
      %v4227 = vpack.c.b16 %v4208, %v4207
      %v4228 = vpack.c.b16 %v4210, %v4209
      %v4229 = vpack.c.b16 %v4212, %v4211
      %v4230 = vpack.c.b16 %v4214, %v4213
      %v4232 = vsel %vm1383, %v4215, 0
      %v4235 = vsel %vm1383, %v4216, 0
      %v4238 = vsel %vm1383, %v4217, 0
      %v4241 = vsel %vm1383, %v4218, 0
      %v4244 = vsel %vm1383, %v4219, 0
      %v4247 = vsel %vm1383, %v4220, 0
      %v4250 = vsel %vm1383, %v4221, 0
      %v4253 = vsel %vm1383, %v4222, 0
      %v4256 = vsel %vm1383, %v4223, 0
      %v4259 = vsel %vm1383, %v4224, 0
      %v4262 = vsel %vm1383, %v4225, 0
      %v4265 = vsel %vm1383, %v4226, 0
      %v4268 = vsel %vm1383, %v4227, 0
      %v4271 = vsel %vm1383, %v4228, 0
      %v4274 = vsel %vm1383, %v4229, 0
      %v4277 = vsel %vm1383, %v4230, 0
      %v4280 = vsel %vm1432, %v4182, 0
      %4282 = vmatpush.bf16.msra.mxu0 0
      %4283 = vmatpush.bf16.msra.mxu0 0
      %4284 = vmatpush.bf16.msra.mxu0 0
      %4285 = vmatpush.bf16.msra.mxu0 0
      %4286 = vmatpush.bf16.msra.mxu0 0
      %4287 = vmatpush.bf16.msra.mxu0 0
      %4288 = vmatpush.bf16.msra.mxu0 0
      %4289 = vmatpush.bf16.msra.mxu0 %v4280
      %4290 = vmatmul.bf16.gmra.mxu0 %v4232
      %v4291 = vpop.f32.mrf.mxu0
      %v4292 = vadd.f32 0.0, %v4291
      %v4293 = vpop.f32.mrf.mxu0
      %v4294 = vadd.f32 0.0, %v4293
      %4295 = vmatmul.bf16.gmra.mxu0 %v4235
      %v4296 = vpop.f32.mrf.mxu0
      %v4297 = vadd.f32 0.0, %v4296
      %v4298 = vpop.f32.mrf.mxu0
      %v4299 = vadd.f32 0.0, %v4298
      %4300 = vmatmul.bf16.gmra.mxu0 %v4238
      %v4301 = vpop.f32.mrf.mxu0
      %v4302 = vadd.f32 0.0, %v4301
      %v4303 = vpop.f32.mrf.mxu0
      %v4304 = vadd.f32 0.0, %v4303
      %4305 = vmatmul.bf16.gmra.mxu0 %v4241
      %v4306 = vpop.f32.mrf.mxu0
      %v4307 = vadd.f32 0.0, %v4306
      %v4308 = vpop.f32.mrf.mxu0
      %v4309 = vadd.f32 0.0, %v4308
      %4310 = vmatmul.bf16.gmra.mxu0 %v4244
      %v4311 = vpop.f32.mrf.mxu0
      %v4312 = vadd.f32 0.0, %v4311
      %v4313 = vpop.f32.mrf.mxu0
      %v4314 = vadd.f32 0.0, %v4313
      %4315 = vmatmul.bf16.gmra.mxu0 %v4247
      %v4316 = vpop.f32.mrf.mxu0
      %v4317 = vadd.f32 0.0, %v4316
      %v4318 = vpop.f32.mrf.mxu0
      %v4319 = vadd.f32 0.0, %v4318
      %4320 = vmatmul.bf16.gmra.mxu0 %v4250
      %v4321 = vpop.f32.mrf.mxu0
      %v4322 = vadd.f32 0.0, %v4321
      %v4323 = vpop.f32.mrf.mxu0
      %v4324 = vadd.f32 0.0, %v4323
      %4325 = vmatmul.bf16.gmra.mxu0 %v4253
      %v4326 = vpop.f32.mrf.mxu0
      %v4327 = vadd.f32 0.0, %v4326
      %v4328 = vpop.f32.mrf.mxu0
      %v4329 = vadd.f32 0.0, %v4328
      %4330 = vmatmul.bf16.gmra.mxu0 %v4256
      %v4331 = vpop.f32.mrf.mxu0
      %v4332 = vadd.f32 0.0, %v4331
      %v4333 = vpop.f32.mrf.mxu0
      %v4334 = vadd.f32 0.0, %v4333
      %4335 = vmatmul.bf16.gmra.mxu0 %v4259
      %v4336 = vpop.f32.mrf.mxu0
      %v4337 = vadd.f32 0.0, %v4336
      %v4338 = vpop.f32.mrf.mxu0
      %v4339 = vadd.f32 0.0, %v4338
      %4340 = vmatmul.bf16.gmra.mxu0 %v4262
      %v4341 = vpop.f32.mrf.mxu0
      %v4342 = vadd.f32 0.0, %v4341
      %v4343 = vpop.f32.mrf.mxu0
      %v4344 = vadd.f32 0.0, %v4343
      %4345 = vmatmul.bf16.gmra.mxu0 %v4265
      %v4346 = vpop.f32.mrf.mxu0
      %v4347 = vadd.f32 0.0, %v4346
      %v4348 = vpop.f32.mrf.mxu0
      %v4349 = vadd.f32 0.0, %v4348
      %4350 = vmatmul.bf16.gmra.mxu0 %v4268
      %v4351 = vpop.f32.mrf.mxu0
      %v4352 = vadd.f32 0.0, %v4351
      %v4353 = vpop.f32.mrf.mxu0
      %v4354 = vadd.f32 0.0, %v4353
      %4355 = vmatmul.bf16.gmra.mxu0 %v4271
      %v4356 = vpop.f32.mrf.mxu0
      %v4357 = vadd.f32 0.0, %v4356
      %v4358 = vpop.f32.mrf.mxu0
      %v4359 = vadd.f32 0.0, %v4358
      %4360 = vmatmul.bf16.gmra.mxu0 %v4274
      %v4361 = vpop.f32.mrf.mxu0
      %v4362 = vadd.f32 0.0, %v4361
      %v4363 = vpop.f32.mrf.mxu0
      %v4364 = vadd.f32 0.0, %v4363
      %4365 = vmatmul.bf16.gmra.mxu0 %v4277
      %v4366 = vpop.f32.mrf.mxu0
      %v4367 = vadd.f32 0.0, %v4366
      %v4368 = vpop.f32.mrf.mxu0
      %v4369 = vadd.f32 0.0, %v4368
      %4370 = vdwg.mxu0
      %v4371 = vadd.f32 %v3718, %v4292
      %v4372 = vadd.f32 %v3719, %v4294
      %v4373 = vadd.f32 %v3720, %v4297
      %v4374 = vadd.f32 %v3721, %v4299
      %v4375 = vadd.f32 %v3722, %v4302
      %v4376 = vadd.f32 %v3723, %v4304
      %v4377 = vadd.f32 %v3724, %v4307
      %v4378 = vadd.f32 %v3725, %v4309
      %v4379 = vadd.f32 %v3726, %v4312
      %v4380 = vadd.f32 %v3727, %v4314
      %v4381 = vadd.f32 %v3728, %v4317
      %v4382 = vadd.f32 %v3729, %v4319
      %v4383 = vadd.f32 %v3730, %v4322
      %v4384 = vadd.f32 %v3731, %v4324
      %v4385 = vadd.f32 %v3732, %v4327
      %v4386 = vadd.f32 %v3733, %v4329
      %v4387 = vadd.f32 %v3734, %v4332
      %v4388 = vadd.f32 %v3735, %v4334
      %v4389 = vadd.f32 %v3736, %v4337
      %v4390 = vadd.f32 %v3737, %v4339
      %v4391 = vadd.f32 %v3738, %v4342
      %v4392 = vadd.f32 %v3739, %v4344
      %v4393 = vadd.f32 %v3740, %v4347
      %v4394 = vadd.f32 %v3741, %v4349
      %v4395 = vadd.f32 %v3742, %v4352
      %v4396 = vadd.f32 %v3743, %v4354
      %v4397 = vadd.f32 %v3744, %v4357
      %v4398 = vadd.f32 %v3745, %v4359
      %v4399 = vadd.f32 %v3746, %v4362
      %v4400 = vadd.f32 %v3747, %v4364
      %v4401 = vadd.f32 %v3748, %v4367
      %v4402 = vadd.f32 %v3749, %v4369
      %v4403 = vld [vmem:[%s3464] sm:$0xe]
      %v4404 = vld [vmem:[%s3464 + $0xc] sm:$0xe]
      %v4405 = vld [vmem:[%s3464 + $0x18] sm:$0xe]
      %v4406 = vld [vmem:[%s3464 + $0x24] sm:$0xe]
      %v4407 = vld [vmem:[%s3464 + $0x30] sm:$0xe]
      %v4408 = vld [vmem:[%s3464 + $0x3c] sm:$0xe]
      %v4409 = vld [vmem:[%s3464 + $0x48] sm:$0xe]
      %v4410 = vld [vmem:[%s3464 + $0x54] sm:$0xe]
      %v4411 = vld [vmem:[%s3464 + $0x60] sm:$0xe]
      %v4412 = vld [vmem:[%s3464 + $0x6c] sm:$0xe]
      %v4413 = vld [vmem:[%s3464 + $0x78] sm:$0xe]
      %v4414 = vld [vmem:[%s3464 + $0x84] sm:$0xe]
      %v4415 = vld [vmem:[%s3464 + $0x90] sm:$0xe]
      %v4416 = vld [vmem:[%s3464 + $0x9c] sm:$0xe]
      %v4417 = vld [vmem:[%s3464 + $0xa8] sm:$0xe]
      %v4418 = vld [vmem:[%s3464 + $0xb4] sm:$0xe]
      %v4467 = vrot.slane %v4403, 5
      %v4468 = vrot.slane %v4467, 4
      %v4469 = vrot.slane %v3751, 5
      %v4470 = vsel %vm1795, %v4468, %v4469
      %v4471 = vrot.slane %v4469, 4
      %v4472 = vrot.slane %v3752, 5
      %v4473 = vsel %vm1795, %v4471, %v4472
      %v4474 = vrot.slane %v4404, 5
      %v4475 = vrot.slane %v4474, 4
      %v4476 = vrot.slane %v3754, 5
      %v4477 = vsel %vm1795, %v4475, %v4476
      %v4478 = vrot.slane %v4476, 4
      %v4479 = vrot.slane %v3755, 5
      %v4480 = vsel %vm1795, %v4478, %v4479
      %v4481 = vrot.slane %v4405, 5
      %v4482 = vrot.slane %v4481, 4
      %v4483 = vrot.slane %v3757, 5
      %v4484 = vsel %vm1795, %v4482, %v4483
      %v4485 = vrot.slane %v4483, 4
      %v4486 = vrot.slane %v3758, 5
      %v4487 = vsel %vm1795, %v4485, %v4486
      %v4488 = vrot.slane %v4406, 5
      %v4489 = vrot.slane %v4488, 4
      %v4490 = vrot.slane %v3760, 5
      %v4491 = vsel %vm1795, %v4489, %v4490
      %v4492 = vrot.slane %v4490, 4
      %v4493 = vrot.slane %v3761, 5
      %v4494 = vsel %vm1795, %v4492, %v4493
      %v4495 = vrot.slane %v4407, 5
      %v4496 = vrot.slane %v4495, 4
      %v4497 = vrot.slane %v3763, 5
      %v4498 = vsel %vm1795, %v4496, %v4497
      %v4499 = vrot.slane %v4497, 4
      %v4500 = vrot.slane %v3764, 5
      %v4501 = vsel %vm1795, %v4499, %v4500
      %v4502 = vrot.slane %v4408, 5
      %v4503 = vrot.slane %v4502, 4
      %v4504 = vrot.slane %v3766, 5
      %v4505 = vsel %vm1795, %v4503, %v4504
      %v4506 = vrot.slane %v4504, 4
      %v4507 = vrot.slane %v3767, 5
      %v4508 = vsel %vm1795, %v4506, %v4507
      %v4509 = vrot.slane %v4409, 5
      %v4510 = vrot.slane %v4509, 4
      %v4511 = vrot.slane %v3769, 5
      %v4512 = vsel %vm1795, %v4510, %v4511
      %v4513 = vrot.slane %v4511, 4
      %v4514 = vrot.slane %v3770, 5
      %v4515 = vsel %vm1795, %v4513, %v4514
      %v4516 = vrot.slane %v4410, 5
      %v4517 = vrot.slane %v4516, 4
      %v4518 = vrot.slane %v3772, 5
      %v4519 = vsel %vm1795, %v4517, %v4518
      %v4520 = vrot.slane %v4518, 4
      %v4521 = vrot.slane %v3773, 5
      %v4522 = vsel %vm1795, %v4520, %v4521
      %v4523 = vrot.slane %v4411, 5
      %v4524 = vrot.slane %v4523, 4
      %v4525 = vrot.slane %v3775, 5
      %v4526 = vsel %vm1795, %v4524, %v4525
      %v4527 = vrot.slane %v4525, 4
      %v4528 = vrot.slane %v3776, 5
      %v4529 = vsel %vm1795, %v4527, %v4528
      %v4530 = vrot.slane %v4412, 5
      %v4531 = vrot.slane %v4530, 4
      %v4532 = vrot.slane %v3778, 5
      %v4533 = vsel %vm1795, %v4531, %v4532
      %v4534 = vrot.slane %v4532, 4
      %v4535 = vrot.slane %v3779, 5
      %v4536 = vsel %vm1795, %v4534, %v4535
      %v4537 = vrot.slane %v4413, 5
      %v4538 = vrot.slane %v4537, 4
      %v4539 = vrot.slane %v3781, 5
      %v4540 = vsel %vm1795, %v4538, %v4539
      %v4541 = vrot.slane %v4539, 4
      %v4542 = vrot.slane %v3782, 5
      %v4543 = vsel %vm1795, %v4541, %v4542
      %v4544 = vrot.slane %v4414, 5
      %v4545 = vrot.slane %v4544, 4
      %v4546 = vrot.slane %v3784, 5
      %v4547 = vsel %vm1795, %v4545, %v4546
      %v4548 = vrot.slane %v4546, 4
      %v4549 = vrot.slane %v3785, 5
      %v4550 = vsel %vm1795, %v4548, %v4549
      %v4551 = vrot.slane %v4415, 5
      %v4552 = vrot.slane %v4551, 4
      %v4553 = vrot.slane %v3787, 5
      %v4554 = vsel %vm1795, %v4552, %v4553
      %v4555 = vrot.slane %v4553, 4
      %v4556 = vrot.slane %v3788, 5
      %v4557 = vsel %vm1795, %v4555, %v4556
      %v4558 = vrot.slane %v4416, 5
      %v4559 = vrot.slane %v4558, 4
      %v4560 = vrot.slane %v3790, 5
      %v4561 = vsel %vm1795, %v4559, %v4560
      %v4562 = vrot.slane %v4560, 4
      %v4563 = vrot.slane %v3791, 5
      %v4564 = vsel %vm1795, %v4562, %v4563
      %v4565 = vrot.slane %v4417, 5
      %v4566 = vrot.slane %v4565, 4
      %v4567 = vrot.slane %v3793, 5
      %v4568 = vsel %vm1795, %v4566, %v4567
      %v4569 = vrot.slane %v4567, 4
      %v4570 = vrot.slane %v3794, 5
      %v4571 = vsel %vm1795, %v4569, %v4570
      %v4572 = vrot.slane %v4418, 5
      %v4573 = vrot.slane %v4572, 4
      %v4574 = vrot.slane %v3796, 5
      %v4575 = vsel %vm1795, %v4573, %v4574
      %v4576 = vrot.slane %v4574, 4
      %v4577 = vrot.slane %v3797, 5
      %v4578 = vsel %vm1795, %v4576, %v4577
      %v4579 = vld [vmem:[%s1 + $0x20] sm:$0xf]
      %v4580 = vunpack.c.l.b16 %v4470
      %v4581 = vunpack.c.l.b16 %v4473
      %v4582 = vunpack.c.l.b16 %v4477
      %v4583 = vunpack.c.l.b16 %v4480
      %v4584 = vunpack.c.l.b16 %v4484
      %v4585 = vunpack.c.l.b16 %v4487
      %v4586 = vunpack.c.l.b16 %v4491
      %v4587 = vunpack.c.l.b16 %v4494
      %v4588 = vunpack.c.l.b16 %v4498
      %v4589 = vunpack.c.l.b16 %v4501
      %v4590 = vunpack.c.l.b16 %v4505
      %v4591 = vunpack.c.l.b16 %v4508
      %v4592 = vunpack.c.l.b16 %v4512
      %v4593 = vunpack.c.l.b16 %v4515
      %v4594 = vunpack.c.l.b16 %v4519
      %v4595 = vunpack.c.l.b16 %v4522
      %v4596 = vunpack.c.l.b16 %v4526
      %v4597 = vunpack.c.l.b16 %v4529
      %v4598 = vunpack.c.l.b16 %v4533
      %v4599 = vunpack.c.l.b16 %v4536
      %v4600 = vunpack.c.l.b16 %v4540
      %v4601 = vunpack.c.l.b16 %v4543
      %v4602 = vunpack.c.l.b16 %v4547
      %v4603 = vunpack.c.l.b16 %v4550
      %v4604 = vunpack.c.l.b16 %v4554
      %v4605 = vunpack.c.l.b16 %v4557
      %v4606 = vunpack.c.l.b16 %v4561
      %v4607 = vunpack.c.l.b16 %v4564
      %v4608 = vunpack.c.l.b16 %v4568
      %v4609 = vunpack.c.l.b16 %v4571
      %v4610 = vunpack.c.l.b16 %v4575
      %v4611 = vunpack.c.l.b16 %v4578
      %v4612 = vpack.c.b16 %v4581, %v4580
      %v4613 = vpack.c.b16 %v4583, %v4582
      %v4614 = vpack.c.b16 %v4585, %v4584
      %v4615 = vpack.c.b16 %v4587, %v4586
      %v4616 = vpack.c.b16 %v4589, %v4588
      %v4617 = vpack.c.b16 %v4591, %v4590
      %v4618 = vpack.c.b16 %v4593, %v4592
      %v4619 = vpack.c.b16 %v4595, %v4594
      %v4620 = vpack.c.b16 %v4597, %v4596
      %v4621 = vpack.c.b16 %v4599, %v4598
      %v4622 = vpack.c.b16 %v4601, %v4600
      %v4623 = vpack.c.b16 %v4603, %v4602
      %v4624 = vpack.c.b16 %v4605, %v4604
      %v4625 = vpack.c.b16 %v4607, %v4606
      %v4626 = vpack.c.b16 %v4609, %v4608
      %v4627 = vpack.c.b16 %v4611, %v4610
      %v4629 = vsel %vm1383, %v4612, 0
      %v4632 = vsel %vm1383, %v4613, 0
      %v4635 = vsel %vm1383, %v4614, 0
      %v4638 = vsel %vm1383, %v4615, 0
      %v4641 = vsel %vm1383, %v4616, 0
      %v4644 = vsel %vm1383, %v4617, 0
      %v4647 = vsel %vm1383, %v4618, 0
      %v4650 = vsel %vm1383, %v4619, 0
      %v4653 = vsel %vm1383, %v4620, 0
      %v4656 = vsel %vm1383, %v4621, 0
      %v4659 = vsel %vm1383, %v4622, 0
      %v4662 = vsel %vm1383, %v4623, 0
      %v4665 = vsel %vm1383, %v4624, 0
      %v4668 = vsel %vm1383, %v4625, 0
      %v4671 = vsel %vm1383, %v4626, 0
      %v4674 = vsel %vm1383, %v4627, 0
      %v4677 = vsel %vm1432, %v4579, 0
      %4679 = vmatpush.bf16.msra.mxu0 0
      %4680 = vmatpush.bf16.msra.mxu0 0
      %4681 = vmatpush.bf16.msra.mxu0 0
      %4682 = vmatpush.bf16.msra.mxu0 0
      %4683 = vmatpush.bf16.msra.mxu0 0
      %4684 = vmatpush.bf16.msra.mxu0 0
      %4685 = vmatpush.bf16.msra.mxu0 0
      %4686 = vmatpush.bf16.msra.mxu0 %v4677
      %4687 = vmatmul.bf16.gmra.mxu0 %v4629
      %v4688 = vpop.f32.mrf.mxu0
      %v4689 = vadd.f32 0.0, %v4688
      %v4690 = vpop.f32.mrf.mxu0
      %v4691 = vadd.f32 0.0, %v4690
      %4692 = vmatmul.bf16.gmra.mxu0 %v4632
      %v4693 = vpop.f32.mrf.mxu0
      %v4694 = vadd.f32 0.0, %v4693
      %v4695 = vpop.f32.mrf.mxu0
      %v4696 = vadd.f32 0.0, %v4695
      %4697 = vmatmul.bf16.gmra.mxu0 %v4635
      %v4698 = vpop.f32.mrf.mxu0
      %v4699 = vadd.f32 0.0, %v4698
      %v4700 = vpop.f32.mrf.mxu0
      %v4701 = vadd.f32 0.0, %v4700
      %4702 = vmatmul.bf16.gmra.mxu0 %v4638
      %v4703 = vpop.f32.mrf.mxu0
      %v4704 = vadd.f32 0.0, %v4703
      %v4705 = vpop.f32.mrf.mxu0
      %v4706 = vadd.f32 0.0, %v4705
      %4707 = vmatmul.bf16.gmra.mxu0 %v4641
      %v4708 = vpop.f32.mrf.mxu0
      %v4709 = vadd.f32 0.0, %v4708
      %v4710 = vpop.f32.mrf.mxu0
      %v4711 = vadd.f32 0.0, %v4710
      %4712 = vmatmul.bf16.gmra.mxu0 %v4644
      %v4713 = vpop.f32.mrf.mxu0
      %v4714 = vadd.f32 0.0, %v4713
      %v4715 = vpop.f32.mrf.mxu0
      %v4716 = vadd.f32 0.0, %v4715
      %4717 = vmatmul.bf16.gmra.mxu0 %v4647
      %v4718 = vpop.f32.mrf.mxu0
      %v4719 = vadd.f32 0.0, %v4718
      %v4720 = vpop.f32.mrf.mxu0
      %v4721 = vadd.f32 0.0, %v4720
      %4722 = vmatmul.bf16.gmra.mxu0 %v4650
      %v4723 = vpop.f32.mrf.mxu0
      %v4724 = vadd.f32 0.0, %v4723
      %v4725 = vpop.f32.mrf.mxu0
      %v4726 = vadd.f32 0.0, %v4725
      %4727 = vmatmul.bf16.gmra.mxu0 %v4653
      %v4728 = vpop.f32.mrf.mxu0
      %v4729 = vadd.f32 0.0, %v4728
      %v4730 = vpop.f32.mrf.mxu0
      %v4731 = vadd.f32 0.0, %v4730
      %4732 = vmatmul.bf16.gmra.mxu0 %v4656
      %v4733 = vpop.f32.mrf.mxu0
      %v4734 = vadd.f32 0.0, %v4733
      %v4735 = vpop.f32.mrf.mxu0
      %v4736 = vadd.f32 0.0, %v4735
      %4737 = vmatmul.bf16.gmra.mxu0 %v4659
      %v4738 = vpop.f32.mrf.mxu0
      %v4739 = vadd.f32 0.0, %v4738
      %v4740 = vpop.f32.mrf.mxu0
      %v4741 = vadd.f32 0.0, %v4740
      %4742 = vmatmul.bf16.gmra.mxu0 %v4662
      %v4743 = vpop.f32.mrf.mxu0
      %v4744 = vadd.f32 0.0, %v4743
      %v4745 = vpop.f32.mrf.mxu0
      %v4746 = vadd.f32 0.0, %v4745
      %4747 = vmatmul.bf16.gmra.mxu0 %v4665
      %v4748 = vpop.f32.mrf.mxu0
      %v4749 = vadd.f32 0.0, %v4748
      %v4750 = vpop.f32.mrf.mxu0
      %v4751 = vadd.f32 0.0, %v4750
      %4752 = vmatmul.bf16.gmra.mxu0 %v4668
      %v4753 = vpop.f32.mrf.mxu0
      %v4754 = vadd.f32 0.0, %v4753
      %v4755 = vpop.f32.mrf.mxu0
      %v4756 = vadd.f32 0.0, %v4755
      %4757 = vmatmul.bf16.gmra.mxu0 %v4671
      %v4758 = vpop.f32.mrf.mxu0
      %v4759 = vadd.f32 0.0, %v4758
      %v4760 = vpop.f32.mrf.mxu0
      %v4761 = vadd.f32 0.0, %v4760
      %4762 = vmatmul.bf16.gmra.mxu0 %v4674
      %v4763 = vpop.f32.mrf.mxu0
      %v4764 = vadd.f32 0.0, %v4763
      %v4765 = vpop.f32.mrf.mxu0
      %v4766 = vadd.f32 0.0, %v4765
      %4767 = vdwg.mxu0
      %v4768 = vadd.f32 %v4371, %v4689
      %v4769 = vadd.f32 %v4372, %v4691
      %v4770 = vadd.f32 %v4373, %v4694
      %v4771 = vadd.f32 %v4374, %v4696
      %v4772 = vadd.f32 %v4375, %v4699
      %v4773 = vadd.f32 %v4376, %v4701
      %v4774 = vadd.f32 %v4377, %v4704
      %v4775 = vadd.f32 %v4378, %v4706
      %v4776 = vadd.f32 %v4379, %v4709
      %v4777 = vadd.f32 %v4380, %v4711
      %v4778 = vadd.f32 %v4381, %v4714
      %v4779 = vadd.f32 %v4382, %v4716
      %v4780 = vadd.f32 %v4383, %v4719
      %v4781 = vadd.f32 %v4384, %v4721
      %v4782 = vadd.f32 %v4385, %v4724
      %v4783 = vadd.f32 %v4386, %v4726
      %v4784 = vadd.f32 %v4387, %v4729
      %v4785 = vadd.f32 %v4388, %v4731
      %v4786 = vadd.f32 %v4389, %v4734
      %v4787 = vadd.f32 %v4390, %v4736
      %v4788 = vadd.f32 %v4391, %v4739
      %v4789 = vadd.f32 %v4392, %v4741
      %v4790 = vadd.f32 %v4393, %v4744
      %v4791 = vadd.f32 %v4394, %v4746
      %v4792 = vadd.f32 %v4395, %v4749
      %v4793 = vadd.f32 %v4396, %v4751
      %v4794 = vadd.f32 %v4397, %v4754
      %v4795 = vadd.f32 %v4398, %v4756
      %v4796 = vadd.f32 %v4399, %v4759
      %v4797 = vadd.f32 %v4400, %v4761
      %v4798 = vadd.f32 %v4401, %v4764
      %v4799 = vadd.f32 %v4402, %v4766
      %v4800 = vmul.f32 %v4768, %v4768
      %v4801 = vmul.f32 %v4769, %v4769
      %v4802 = vmul.f32 %v4770, %v4770
      %v4803 = vmul.f32 %v4771, %v4771
      %v4804 = vmul.f32 %v4772, %v4772
      %v4805 = vmul.f32 %v4773, %v4773
      %v4806 = vmul.f32 %v4774, %v4774
      %v4807 = vmul.f32 %v4775, %v4775
      %v4808 = vmul.f32 %v4776, %v4776
      %v4809 = vmul.f32 %v4777, %v4777
      %v4810 = vmul.f32 %v4778, %v4778
      %v4811 = vmul.f32 %v4779, %v4779
      %v4812 = vmul.f32 %v4780, %v4780
      %v4813 = vmul.f32 %v4781, %v4781
      %v4814 = vmul.f32 %v4782, %v4782
      %v4815 = vmul.f32 %v4783, %v4783
      %v4816 = vmul.f32 %v4784, %v4784
      %v4817 = vmul.f32 %v4785, %v4785
      %v4818 = vmul.f32 %v4786, %v4786
      %v4819 = vmul.f32 %v4787, %v4787
      %v4820 = vmul.f32 %v4788, %v4788
      %v4821 = vmul.f32 %v4789, %v4789
      %v4822 = vmul.f32 %v4790, %v4790
      %v4823 = vmul.f32 %v4791, %v4791
      %v4824 = vmul.f32 %v4792, %v4792
      %v4825 = vmul.f32 %v4793, %v4793
      %v4826 = vmul.f32 %v4794, %v4794
      %v4827 = vmul.f32 %v4795, %v4795
      %v4828 = vmul.f32 %v4796, %v4796
      %v4829 = vmul.f32 %v4797, %v4797
      %v4830 = vmul.f32 %v4798, %v4798
      %v4831 = vmul.f32 %v4799, %v4799
      %v4832 = vmul.f32 %v4768, %v4800
      %v4833 = vmul.f32 %v4769, %v4801
      %v4834 = vmul.f32 %v4770, %v4802
      %v4835 = vmul.f32 %v4771, %v4803
      %v4836 = vmul.f32 %v4772, %v4804
      %v4837 = vmul.f32 %v4773, %v4805
      %v4838 = vmul.f32 %v4774, %v4806
      %v4839 = vmul.f32 %v4775, %v4807
      %v4840 = vmul.f32 %v4776, %v4808
      %v4841 = vmul.f32 %v4777, %v4809
      %v4842 = vmul.f32 %v4778, %v4810
      %v4843 = vmul.f32 %v4779, %v4811
      %v4844 = vmul.f32 %v4780, %v4812
      %v4845 = vmul.f32 %v4781, %v4813
      %v4846 = vmul.f32 %v4782, %v4814
      %v4847 = vmul.f32 %v4783, %v4815
      %v4848 = vmul.f32 %v4784, %v4816
      %v4849 = vmul.f32 %v4785, %v4817
      %v4850 = vmul.f32 %v4786, %v4818
      %v4851 = vmul.f32 %v4787, %v4819
      %v4852 = vmul.f32 %v4788, %v4820
      %v4853 = vmul.f32 %v4789, %v4821
      %v4854 = vmul.f32 %v4790, %v4822
      %v4855 = vmul.f32 %v4791, %v4823
      %v4856 = vmul.f32 %v4792, %v4824
      %v4857 = vmul.f32 %v4793, %v4825
      %v4858 = vmul.f32 %v4794, %v4826
      %v4859 = vmul.f32 %v4795, %v4827
      %v4860 = vmul.f32 %v4796, %v4828
      %v4861 = vmul.f32 %v4797, %v4829
      %v4862 = vmul.f32 %v4798, %v4830
      %v4863 = vmul.f32 %v4799, %v4831
      %v4864 = vmul.f32 %v4832, 0.044715
      %v4865 = vmul.f32 %v4833, 0.044715
      %v4866 = vmul.f32 %v4834, 0.044715
      %v4867 = vmul.f32 %v4835, 0.044715
      %v4868 = vmul.f32 %v4836, 0.044715
      %v4869 = vmul.f32 %v4837, 0.044715
      %v4870 = vmul.f32 %v4838, 0.044715
      %v4871 = vmul.f32 %v4839, 0.044715
      %v4872 = vmul.f32 %v4840, 0.044715
      %v4873 = vmul.f32 %v4841, 0.044715
      %v4874 = vmul.f32 %v4842, 0.044715
      %v4875 = vmul.f32 %v4843, 0.044715
      %v4876 = vmul.f32 %v4844, 0.044715
      %v4877 = vmul.f32 %v4845, 0.044715
      %v4878 = vmul.f32 %v4846, 0.044715
      %v4879 = vmul.f32 %v4847, 0.044715
      %v4880 = vmul.f32 %v4848, 0.044715
      %v4881 = vmul.f32 %v4849, 0.044715
      %v4882 = vmul.f32 %v4850, 0.044715
      %v4883 = vmul.f32 %v4851, 0.044715
      %v4884 = vmul.f32 %v4852, 0.044715
      %v4885 = vmul.f32 %v4853, 0.044715
      %v4886 = vmul.f32 %v4854, 0.044715
      %v4887 = vmul.f32 %v4855, 0.044715
      %v4888 = vmul.f32 %v4856, 0.044715
      %v4889 = vmul.f32 %v4857, 0.044715
      %v4890 = vmul.f32 %v4858, 0.044715
      %v4891 = vmul.f32 %v4859, 0.044715
      %v4892 = vmul.f32 %v4860, 0.044715
      %v4893 = vmul.f32 %v4861, 0.044715
      %v4894 = vmul.f32 %v4862, 0.044715
      %v4895 = vmul.f32 %v4863, 0.044715
      %v4896 = vadd.f32 %v4768, %v4864
      %v4897 = vadd.f32 %v4769, %v4865
      %v4898 = vadd.f32 %v4770, %v4866
      %v4899 = vadd.f32 %v4771, %v4867
      %v4900 = vadd.f32 %v4772, %v4868
      %v4901 = vadd.f32 %v4773, %v4869
      %v4902 = vadd.f32 %v4774, %v4870
      %v4903 = vadd.f32 %v4775, %v4871
      %v4904 = vadd.f32 %v4776, %v4872
      %v4905 = vadd.f32 %v4777, %v4873
      %v4906 = vadd.f32 %v4778, %v4874
      %v4907 = vadd.f32 %v4779, %v4875
      %v4908 = vadd.f32 %v4780, %v4876
      %v4909 = vadd.f32 %v4781, %v4877
      %v4910 = vadd.f32 %v4782, %v4878
      %v4911 = vadd.f32 %v4783, %v4879
      %v4912 = vadd.f32 %v4784, %v4880
      %v4913 = vadd.f32 %v4785, %v4881
      %v4914 = vadd.f32 %v4786, %v4882
      %v4915 = vadd.f32 %v4787, %v4883
      %v4916 = vadd.f32 %v4788, %v4884
      %v4917 = vadd.f32 %v4789, %v4885
      %v4918 = vadd.f32 %v4790, %v4886
      %v4919 = vadd.f32 %v4791, %v4887
      %v4920 = vadd.f32 %v4792, %v4888
      %v4921 = vadd.f32 %v4793, %v4889
      %v4922 = vadd.f32 %v4794, %v4890
      %v4923 = vadd.f32 %v4795, %v4891
      %v4924 = vadd.f32 %v4796, %v4892
      %v4925 = vadd.f32 %v4797, %v4893
      %v4926 = vadd.f32 %v4798, %v4894
      %v4927 = vadd.f32 %v4799, %v4895
      %v4928 = vmul.f32 %v4896, 0.7978846
      %v4929 = vmul.f32 %v4897, 0.7978846
      %v4930 = vmul.f32 %v4898, 0.7978846
      %v4931 = vmul.f32 %v4899, 0.7978846
      %v4932 = vmul.f32 %v4900, 0.7978846
      %v4933 = vmul.f32 %v4901, 0.7978846
      %v4934 = vmul.f32 %v4902, 0.7978846
      %v4935 = vmul.f32 %v4903, 0.7978846
      %v4936 = vmul.f32 %v4904, 0.7978846
      %v4937 = vmul.f32 %v4905, 0.7978846
      %v4938 = vmul.f32 %v4906, 0.7978846
      %v4939 = vmul.f32 %v4907, 0.7978846
      %v4940 = vmul.f32 %v4908, 0.7978846
      %v4941 = vmul.f32 %v4909, 0.7978846
      %v4942 = vmul.f32 %v4910, 0.7978846
      %v4943 = vmul.f32 %v4911, 0.7978846
      %v4944 = vmul.f32 %v4912, 0.7978846
      %v4945 = vmul.f32 %v4913, 0.7978846
      %v4946 = vmul.f32 %v4914, 0.7978846
      %v4947 = vmul.f32 %v4915, 0.7978846
      %v4948 = vmul.f32 %v4916, 0.7978846
      %v4949 = vmul.f32 %v4917, 0.7978846
      %v4950 = vmul.f32 %v4918, 0.7978846
      %v4951 = vmul.f32 %v4919, 0.7978846
      %v4952 = vmul.f32 %v4920, 0.7978846
      %v4953 = vmul.f32 %v4921, 0.7978846
      %v4954 = vmul.f32 %v4922, 0.7978846
      %v4955 = vmul.f32 %v4923, 0.7978846
      %v4956 = vmul.f32 %v4924, 0.7978846
      %v4957 = vmul.f32 %v4925, 0.7978846
      %v4958 = vmul.f32 %v4926, 0.7978846
      %v4959 = vmul.f32 %v4927, 0.7978846
      %v4960 = vtanh.pop %v4928
      %v4961 = vtanh.pop %v4929
      %v4962 = vtanh.pop %v4930
      %v4963 = vtanh.pop %v4931
      %v4964 = vtanh.pop %v4932
      %v4965 = vtanh.pop %v4933
      %v4966 = vtanh.pop %v4934
      %v4967 = vtanh.pop %v4935
      %v4968 = vtanh.pop %v4936
      %v4969 = vtanh.pop %v4937
      %v4970 = vtanh.pop %v4938
      %v4971 = vtanh.pop %v4939
      %v4972 = vtanh.pop %v4940
      %v4973 = vtanh.pop %v4941
      %v4974 = vtanh.pop %v4942
      %v4975 = vtanh.pop %v4943
      %v4976 = vtanh.pop %v4944
      %v4977 = vtanh.pop %v4945
      %v4978 = vtanh.pop %v4946
      %v4979 = vtanh.pop %v4947
      %v4980 = vtanh.pop %v4948
      %v4981 = vtanh.pop %v4949
      %v4982 = vtanh.pop %v4950
      %v4983 = vtanh.pop %v4951
      %v4984 = vtanh.pop %v4952
      %v4985 = vtanh.pop %v4953
      %v4986 = vtanh.pop %v4954
      %v4987 = vtanh.pop %v4955
      %v4988 = vtanh.pop %v4956
      %v4989 = vtanh.pop %v4957
      %v4990 = vtanh.pop %v4958
      %v4991 = vtanh.pop %v4959
      %v4992 = vadd.f32 %v4960, 1.0
      %v4993 = vadd.f32 %v4961, 1.0
      %v4994 = vadd.f32 %v4962, 1.0
      %v4995 = vadd.f32 %v4963, 1.0
      %v4996 = vadd.f32 %v4964, 1.0
      %v4997 = vadd.f32 %v4965, 1.0
      %v4998 = vadd.f32 %v4966, 1.0
      %v4999 = vadd.f32 %v4967, 1.0
      %v5000 = vadd.f32 %v4968, 1.0
      %v5001 = vadd.f32 %v4969, 1.0
      %v5002 = vadd.f32 %v4970, 1.0
      %v5003 = vadd.f32 %v4971, 1.0
      %v5004 = vadd.f32 %v4972, 1.0
      %v5005 = vadd.f32 %v4973, 1.0
      %v5006 = vadd.f32 %v4974, 1.0
      %v5007 = vadd.f32 %v4975, 1.0
      %v5008 = vadd.f32 %v4976, 1.0
      %v5009 = vadd.f32 %v4977, 1.0
      %v5010 = vadd.f32 %v4978, 1.0
      %v5011 = vadd.f32 %v4979, 1.0
      %v5012 = vadd.f32 %v4980, 1.0
      %v5013 = vadd.f32 %v4981, 1.0
      %v5014 = vadd.f32 %v4982, 1.0
      %v5015 = vadd.f32 %v4983, 1.0
      %v5016 = vadd.f32 %v4984, 1.0
      %v5017 = vadd.f32 %v4985, 1.0
      %v5018 = vadd.f32 %v4986, 1.0
      %v5019 = vadd.f32 %v4987, 1.0
      %v5020 = vadd.f32 %v4988, 1.0
      %v5021 = vadd.f32 %v4989, 1.0
      %v5022 = vadd.f32 %v4990, 1.0
      %v5023 = vadd.f32 %v4991, 1.0
      %v5024 = vmul.f32 %v4992, 0.5
      %v5025 = vmul.f32 %v4993, 0.5
      %v5026 = vmul.f32 %v4994, 0.5
      %v5027 = vmul.f32 %v4995, 0.5
      %v5028 = vmul.f32 %v4996, 0.5
      %v5029 = vmul.f32 %v4997, 0.5
      %v5030 = vmul.f32 %v4998, 0.5
      %v5031 = vmul.f32 %v4999, 0.5
      %v5032 = vmul.f32 %v5000, 0.5
      %v5033 = vmul.f32 %v5001, 0.5
      %v5034 = vmul.f32 %v5002, 0.5
      %v5035 = vmul.f32 %v5003, 0.5
      %v5036 = vmul.f32 %v5004, 0.5
      %v5037 = vmul.f32 %v5005, 0.5
      %v5038 = vmul.f32 %v5006, 0.5
      %v5039 = vmul.f32 %v5007, 0.5
      %v5040 = vmul.f32 %v5008, 0.5
      %v5041 = vmul.f32 %v5009, 0.5
      %v5042 = vmul.f32 %v5010, 0.5
      %v5043 = vmul.f32 %v5011, 0.5
      %v5044 = vmul.f32 %v5012, 0.5
      %v5045 = vmul.f32 %v5013, 0.5
      %v5046 = vmul.f32 %v5014, 0.5
      %v5047 = vmul.f32 %v5015, 0.5
      %v5048 = vmul.f32 %v5016, 0.5
      %v5049 = vmul.f32 %v5017, 0.5
      %v5050 = vmul.f32 %v5018, 0.5
      %v5051 = vmul.f32 %v5019, 0.5
      %v5052 = vmul.f32 %v5020, 0.5
      %v5053 = vmul.f32 %v5021, 0.5
      %v5054 = vmul.f32 %v5022, 0.5
      %v5055 = vmul.f32 %v5023, 0.5
      %v5056 = vmul.f32 %v4768, %v5024
      %v5057 = vmul.f32 %v4769, %v5025
      %v5058 = vmul.f32 %v4770, %v5026
      %v5059 = vmul.f32 %v4771, %v5027
      %v5060 = vmul.f32 %v4772, %v5028
      %v5061 = vmul.f32 %v4773, %v5029
      %v5062 = vmul.f32 %v4774, %v5030
      %v5063 = vmul.f32 %v4775, %v5031
      %v5064 = vmul.f32 %v4776, %v5032
      %v5065 = vmul.f32 %v4777, %v5033
      %v5066 = vmul.f32 %v4778, %v5034
      %v5067 = vmul.f32 %v4779, %v5035
      %v5068 = vmul.f32 %v4780, %v5036
      %v5069 = vmul.f32 %v4781, %v5037
      %v5070 = vmul.f32 %v4782, %v5038
      %v5071 = vmul.f32 %v4783, %v5039
      %v5072 = vmul.f32 %v4784, %v5040
      %v5073 = vmul.f32 %v4785, %v5041
      %v5074 = vmul.f32 %v4786, %v5042
      %v5075 = vmul.f32 %v4787, %v5043
      %v5076 = vmul.f32 %v4788, %v5044
      %v5077 = vmul.f32 %v4789, %v5045
      %v5078 = vmul.f32 %v4790, %v5046
      %v5079 = vmul.f32 %v4791, %v5047
      %v5080 = vmul.f32 %v4792, %v5048
      %v5081 = vmul.f32 %v4793, %v5049
      %v5082 = vmul.f32 %v4794, %v5050
      %v5083 = vmul.f32 %v4795, %v5051
      %v5084 = vmul.f32 %v4796, %v5052
      %v5085 = vmul.f32 %v4797, %v5053
      %v5086 = vmul.f32 %v4798, %v5054
      %v5087 = vmul.f32 %v4799, %v5055
      %v5088 = vunpack.c.l.bf16 %v307
      %v5089 = vunpack.c.l.bf16 %v308
      %v5090 = vunpack.c.l.bf16 %v309
      %v5091 = vunpack.c.l.bf16 %v310
      %v5092 = vunpack.c.l.bf16 %v311
      %v5093 = vunpack.c.l.bf16 %v312
      %v5094 = vunpack.c.l.bf16 %v313
      %v5095 = vunpack.c.l.bf16 %v314
      %v5096 = vunpack.c.l.bf16 %v315
      %v5097 = vunpack.c.l.bf16 %v316
      %v5098 = vunpack.c.l.bf16 %v317
      %v5099 = vunpack.c.l.bf16 %v318
      %v5100 = vunpack.c.l.bf16 %v319
      %v5101 = vunpack.c.l.bf16 %v320
      %v5102 = vunpack.c.l.bf16 %v321
      %v5103 = vunpack.c.l.bf16 %v322
      %v5104 = vunpack.c.l.bf16 %v323
      %v5105 = vunpack.c.l.bf16 %v324
      %v5106 = vunpack.c.l.bf16 %v325
      %v5107 = vunpack.c.l.bf16 %v326
      %v5108 = vunpack.c.l.bf16 %v327
      %v5109 = vunpack.c.l.bf16 %v328
      %v5110 = vunpack.c.l.bf16 %v329
      %v5111 = vunpack.c.l.bf16 %v330
      %v5112 = vunpack.c.l.bf16 %v331
      %v5113 = vunpack.c.l.bf16 %v332
      %v5114 = vunpack.c.l.bf16 %v333
      %v5115 = vunpack.c.l.bf16 %v334
      %v5116 = vunpack.c.l.bf16 %v335
      %v5117 = vunpack.c.l.bf16 %v336
      %v5118 = vunpack.c.l.bf16 %v337
      %v5119 = vunpack.c.l.bf16 %v338
      %v5120 = vadd.f32 %v5056, %v5088
      %v5121 = vadd.f32 %v5057, %v5089
      %v5122 = vadd.f32 %v5058, %v5090
      %v5123 = vadd.f32 %v5059, %v5091
      %v5124 = vadd.f32 %v5060, %v5092
      %v5125 = vadd.f32 %v5061, %v5093
      %v5126 = vadd.f32 %v5062, %v5094
      %v5127 = vadd.f32 %v5063, %v5095
      %v5128 = vadd.f32 %v5064, %v5096
      %v5129 = vadd.f32 %v5065, %v5097
      %v5130 = vadd.f32 %v5066, %v5098
      %v5131 = vadd.f32 %v5067, %v5099
      %v5132 = vadd.f32 %v5068, %v5100
      %v5133 = vadd.f32 %v5069, %v5101
      %v5134 = vadd.f32 %v5070, %v5102
      %v5135 = vadd.f32 %v5071, %v5103
      %v5136 = vadd.f32 %v5072, %v5104
      %v5137 = vadd.f32 %v5073, %v5105
      %v5138 = vadd.f32 %v5074, %v5106
      %v5139 = vadd.f32 %v5075, %v5107
      %v5140 = vadd.f32 %v5076, %v5108
      %v5141 = vadd.f32 %v5077, %v5109
      %v5142 = vadd.f32 %v5078, %v5110
      %v5143 = vadd.f32 %v5079, %v5111
      %v5144 = vadd.f32 %v5080, %v5112
      %v5145 = vadd.f32 %v5081, %v5113
      %v5146 = vadd.f32 %v5082, %v5114
      %v5147 = vadd.f32 %v5083, %v5115
      %v5148 = vadd.f32 %v5084, %v5116
      %v5149 = vadd.f32 %v5085, %v5117
      %v5150 = vadd.f32 %v5086, %v5118
      %v5151 = vadd.f32 %v5087, %v5119
      %v5152 = vld [vmem:[%s2] sm:$0x1]
      %v5154 = vperm.slane %v5152, 0
      %v5156 = vmul.f32 %v5120, %v5154
      %v5157 = vmul.f32 %v5121, %v5154
      %v5158 = vmul.f32 %v5122, %v5154
      %v5159 = vmul.f32 %v5123, %v5154
      %v5160 = vmul.f32 %v5124, %v5154
      %v5161 = vmul.f32 %v5125, %v5154
      %v5162 = vmul.f32 %v5126, %v5154
      %v5163 = vmul.f32 %v5127, %v5154
      %v5164 = vmul.f32 %v5128, %v5154
      %v5165 = vmul.f32 %v5129, %v5154
      %v5166 = vmul.f32 %v5130, %v5154
      %v5167 = vmul.f32 %v5131, %v5154
      %v5168 = vmul.f32 %v5132, %v5154
      %v5169 = vmul.f32 %v5133, %v5154
      %v5170 = vmul.f32 %v5134, %v5154
      %v5171 = vmul.f32 %v5135, %v5154
      %v5172 = vmul.f32 %v5136, %v5154
      %v5173 = vmul.f32 %v5137, %v5154
      %v5174 = vmul.f32 %v5138, %v5154
      %v5175 = vmul.f32 %v5139, %v5154
      %v5176 = vmul.f32 %v5140, %v5154
      %v5177 = vmul.f32 %v5141, %v5154
      %v5178 = vmul.f32 %v5142, %v5154
      %v5179 = vmul.f32 %v5143, %v5154
      %v5180 = vmul.f32 %v5144, %v5154
      %v5181 = vmul.f32 %v5145, %v5154
      %v5182 = vmul.f32 %v5146, %v5154
      %v5183 = vmul.f32 %v5147, %v5154
      %v5184 = vmul.f32 %v5148, %v5154
      %v5185 = vmul.f32 %v5149, %v5154
      %v5186 = vmul.f32 %v5150, %v5154
      %v5187 = vmul.f32 %v5151, %v5154
      %v5188 = vld [vmem:[%s3] sm:$0x1]
      %v5190 = vperm.slane %v5188, 0
      %v5192 = vadd.f32 %v5156, %v5190
      %v5193 = vadd.f32 %v5157, %v5190
      %v5194 = vadd.f32 %v5158, %v5190
      %v5195 = vadd.f32 %v5159, %v5190
      %v5196 = vadd.f32 %v5160, %v5190
      %v5197 = vadd.f32 %v5161, %v5190
      %v5198 = vadd.f32 %v5162, %v5190
      %v5199 = vadd.f32 %v5163, %v5190
      %v5200 = vadd.f32 %v5164, %v5190
      %v5201 = vadd.f32 %v5165, %v5190
      %v5202 = vadd.f32 %v5166, %v5190
      %v5203 = vadd.f32 %v5167, %v5190
      %v5204 = vadd.f32 %v5168, %v5190
      %v5205 = vadd.f32 %v5169, %v5190
      %v5206 = vadd.f32 %v5170, %v5190
      %v5207 = vadd.f32 %v5171, %v5190
      %v5208 = vadd.f32 %v5172, %v5190
      %v5209 = vadd.f32 %v5173, %v5190
      %v5210 = vadd.f32 %v5174, %v5190
      %v5211 = vadd.f32 %v5175, %v5190
      %v5212 = vadd.f32 %v5176, %v5190
      %v5213 = vadd.f32 %v5177, %v5190
      %v5214 = vadd.f32 %v5178, %v5190
      %v5215 = vadd.f32 %v5179, %v5190
      %v5216 = vadd.f32 %v5180, %v5190
      %v5217 = vadd.f32 %v5181, %v5190
      %v5218 = vadd.f32 %v5182, %v5190
      %v5219 = vadd.f32 %v5183, %v5190
      %v5220 = vadd.f32 %v5184, %v5190
      %v5221 = vadd.f32 %v5185, %v5190
      %v5222 = vadd.f32 %v5186, %v5190
      %v5223 = vadd.f32 %v5187, %v5190
      %v5224 = vpack.c.bf16 %v5193, %v5192
      %v5225 = vpack.c.bf16 %v5195, %v5194
      %v5226 = vpack.c.bf16 %v5197, %v5196
      %v5227 = vpack.c.bf16 %v5199, %v5198
      %v5228 = vpack.c.bf16 %v5201, %v5200
      %v5229 = vpack.c.bf16 %v5203, %v5202
      %v5230 = vpack.c.bf16 %v5205, %v5204
      %v5231 = vpack.c.bf16 %v5207, %v5206
      %v5232 = vpack.c.bf16 %v5209, %v5208
      %v5233 = vpack.c.bf16 %v5211, %v5210
      %v5234 = vpack.c.bf16 %v5213, %v5212
      %v5235 = vpack.c.bf16 %v5215, %v5214
      %v5236 = vpack.c.bf16 %v5217, %v5216
      %v5237 = vpack.c.bf16 %v5219, %v5218
      %v5238 = vpack.c.bf16 %v5221, %v5220
      %v5239 = vpack.c.bf16 %v5223, %v5222
      %v5240 = vld [vmem:[%s4] sm:$0xf]
      %v5242 = vsel %vm1383, %v5224, 0
      %v5245 = vsel %vm1383, %v5225, 0
      %v5248 = vsel %vm1383, %v5226, 0
      %v5251 = vsel %vm1383, %v5227, 0
      %v5254 = vsel %vm1383, %v5228, 0
      %v5257 = vsel %vm1383, %v5229, 0
      %v5260 = vsel %vm1383, %v5230, 0
      %v5263 = vsel %vm1383, %v5231, 0
      %v5266 = vsel %vm1383, %v5232, 0
      %v5269 = vsel %vm1383, %v5233, 0
      %v5272 = vsel %vm1383, %v5234, 0
      %v5275 = vsel %vm1383, %v5235, 0
      %v5278 = vsel %vm1383, %v5236, 0
      %v5281 = vsel %vm1383, %v5237, 0
      %v5284 = vsel %vm1383, %v5238, 0
      %v5287 = vsel %vm1383, %v5239, 0
      %v5290 = vsel %vm1432, %v5240, 0
      %5292 = vmatpush.bf16.msra.mxu0 0
      %5293 = vmatpush.bf16.msra.mxu0 0
      %5294 = vmatpush.bf16.msra.mxu0 0
      %5295 = vmatpush.bf16.msra.mxu0 0
      %5296 = vmatpush.bf16.msra.mxu0 0
      %5297 = vmatpush.bf16.msra.mxu0 0
      %5298 = vmatpush.bf16.msra.mxu0 0
      %5299 = vmatpush.bf16.msra.mxu0 %v5290
      %5300 = vmatmul.bf16.gmra.mxu0 %v5242
      %v5301 = vpop.f32.mrf.mxu0
      %v5302 = vadd.f32 0.0, %v5301
      %v5303 = vpop.f32.mrf.mxu0
      %v5304 = vadd.f32 0.0, %v5303
      %5305 = vmatmul.bf16.gmra.mxu0 %v5245
      %v5306 = vpop.f32.mrf.mxu0
      %v5307 = vadd.f32 0.0, %v5306
      %v5308 = vpop.f32.mrf.mxu0
      %v5309 = vadd.f32 0.0, %v5308
      %5310 = vmatmul.bf16.gmra.mxu0 %v5248
      %v5311 = vpop.f32.mrf.mxu0
      %v5312 = vadd.f32 0.0, %v5311
      %v5313 = vpop.f32.mrf.mxu0
      %v5314 = vadd.f32 0.0, %v5313
      %5315 = vmatmul.bf16.gmra.mxu0 %v5251
      %v5316 = vpop.f32.mrf.mxu0
      %v5317 = vadd.f32 0.0, %v5316
      %v5318 = vpop.f32.mrf.mxu0
      %v5319 = vadd.f32 0.0, %v5318
      %5320 = vmatmul.bf16.gmra.mxu0 %v5254
      %v5321 = vpop.f32.mrf.mxu0
      %v5322 = vadd.f32 0.0, %v5321
      %v5323 = vpop.f32.mrf.mxu0
      %v5324 = vadd.f32 0.0, %v5323
      %5325 = vmatmul.bf16.gmra.mxu0 %v5257
      %v5326 = vpop.f32.mrf.mxu0
      %v5327 = vadd.f32 0.0, %v5326
      %v5328 = vpop.f32.mrf.mxu0
      %v5329 = vadd.f32 0.0, %v5328
      %5330 = vmatmul.bf16.gmra.mxu0 %v5260
      %v5331 = vpop.f32.mrf.mxu0
      %v5332 = vadd.f32 0.0, %v5331
      %v5333 = vpop.f32.mrf.mxu0
      %v5334 = vadd.f32 0.0, %v5333
      %5335 = vmatmul.bf16.gmra.mxu0 %v5263
      %v5336 = vpop.f32.mrf.mxu0
      %v5337 = vadd.f32 0.0, %v5336
      %v5338 = vpop.f32.mrf.mxu0
      %v5339 = vadd.f32 0.0, %v5338
      %5340 = vmatmul.bf16.gmra.mxu0 %v5266
      %v5341 = vpop.f32.mrf.mxu0
      %v5342 = vadd.f32 0.0, %v5341
      %v5343 = vpop.f32.mrf.mxu0
      %v5344 = vadd.f32 0.0, %v5343
      %5345 = vmatmul.bf16.gmra.mxu0 %v5269
      %v5346 = vpop.f32.mrf.mxu0
      %v5347 = vadd.f32 0.0, %v5346
      %v5348 = vpop.f32.mrf.mxu0
      %v5349 = vadd.f32 0.0, %v5348
      %5350 = vmatmul.bf16.gmra.mxu0 %v5272
      %v5351 = vpop.f32.mrf.mxu0
      %v5352 = vadd.f32 0.0, %v5351
      %v5353 = vpop.f32.mrf.mxu0
      %v5354 = vadd.f32 0.0, %v5353
      %5355 = vmatmul.bf16.gmra.mxu0 %v5275
      %v5356 = vpop.f32.mrf.mxu0
      %v5357 = vadd.f32 0.0, %v5356
      %v5358 = vpop.f32.mrf.mxu0
      %v5359 = vadd.f32 0.0, %v5358
      %5360 = vmatmul.bf16.gmra.mxu0 %v5278
      %v5361 = vpop.f32.mrf.mxu0
      %v5362 = vadd.f32 0.0, %v5361
      %v5363 = vpop.f32.mrf.mxu0
      %v5364 = vadd.f32 0.0, %v5363
      %5365 = vmatmul.bf16.gmra.mxu0 %v5281
      %v5366 = vpop.f32.mrf.mxu0
      %v5367 = vadd.f32 0.0, %v5366
      %v5368 = vpop.f32.mrf.mxu0
      %v5369 = vadd.f32 0.0, %v5368
      %5370 = vmatmul.bf16.gmra.mxu0 %v5284
      %v5371 = vpop.f32.mrf.mxu0
      %v5372 = vadd.f32 0.0, %v5371
      %v5373 = vpop.f32.mrf.mxu0
      %v5374 = vadd.f32 0.0, %v5373
      %5375 = vmatmul.bf16.gmra.mxu0 %v5287
      %v5376 = vpop.f32.mrf.mxu0
      %v5377 = vadd.f32 0.0, %v5376
      %v5378 = vpop.f32.mrf.mxu0
      %v5379 = vadd.f32 0.0, %v5378
      %5380 = vdwg.mxu0
      %v5381 = vmul.f32 %v5302, %v5302
      %v5382 = vmul.f32 %v5304, %v5304
      %v5383 = vmul.f32 %v5307, %v5307
      %v5384 = vmul.f32 %v5309, %v5309
      %v5385 = vmul.f32 %v5312, %v5312
      %v5386 = vmul.f32 %v5314, %v5314
      %v5387 = vmul.f32 %v5317, %v5317
      %v5388 = vmul.f32 %v5319, %v5319
      %v5389 = vmul.f32 %v5322, %v5322
      %v5390 = vmul.f32 %v5324, %v5324
      %v5391 = vmul.f32 %v5327, %v5327
      %v5392 = vmul.f32 %v5329, %v5329
      %v5393 = vmul.f32 %v5332, %v5332
      %v5394 = vmul.f32 %v5334, %v5334
      %v5395 = vmul.f32 %v5337, %v5337
      %v5396 = vmul.f32 %v5339, %v5339
      %v5397 = vmul.f32 %v5342, %v5342
      %v5398 = vmul.f32 %v5344, %v5344
      %v5399 = vmul.f32 %v5347, %v5347
      %v5400 = vmul.f32 %v5349, %v5349
      %v5401 = vmul.f32 %v5352, %v5352
      %v5402 = vmul.f32 %v5354, %v5354
      %v5403 = vmul.f32 %v5357, %v5357
      %v5404 = vmul.f32 %v5359, %v5359
      %v5405 = vmul.f32 %v5362, %v5362
      %v5406 = vmul.f32 %v5364, %v5364
      %v5407 = vmul.f32 %v5367, %v5367
      %v5408 = vmul.f32 %v5369, %v5369
      %v5409 = vmul.f32 %v5372, %v5372
      %v5410 = vmul.f32 %v5374, %v5374
      %v5411 = vmul.f32 %v5377, %v5377
      %v5412 = vmul.f32 %v5379, %v5379
      %v5413 = vmul.f32 %v5302, %v5381
      %v5414 = vmul.f32 %v5304, %v5382
      %v5415 = vmul.f32 %v5307, %v5383
      %v5416 = vmul.f32 %v5309, %v5384
      %v5417 = vmul.f32 %v5312, %v5385
      %v5418 = vmul.f32 %v5314, %v5386
      %v5419 = vmul.f32 %v5317, %v5387
      %v5420 = vmul.f32 %v5319, %v5388
      %v5421 = vmul.f32 %v5322, %v5389
      %v5422 = vmul.f32 %v5324, %v5390
      %v5423 = vmul.f32 %v5327, %v5391
      %v5424 = vmul.f32 %v5329, %v5392
      %v5425 = vmul.f32 %v5332, %v5393
      %v5426 = vmul.f32 %v5334, %v5394
      %v5427 = vmul.f32 %v5337, %v5395
      %v5428 = vmul.f32 %v5339, %v5396
      %v5429 = vmul.f32 %v5342, %v5397
      %v5430 = vmul.f32 %v5344, %v5398
      %v5431 = vmul.f32 %v5347, %v5399
      %v5432 = vmul.f32 %v5349, %v5400
      %v5433 = vmul.f32 %v5352, %v5401
      %v5434 = vmul.f32 %v5354, %v5402
      %v5435 = vmul.f32 %v5357, %v5403
      %v5436 = vmul.f32 %v5359, %v5404
      %v5437 = vmul.f32 %v5362, %v5405
      %v5438 = vmul.f32 %v5364, %v5406
      %v5439 = vmul.f32 %v5367, %v5407
      %v5440 = vmul.f32 %v5369, %v5408
      %v5441 = vmul.f32 %v5372, %v5409
      %v5442 = vmul.f32 %v5374, %v5410
      %v5443 = vmul.f32 %v5377, %v5411
      %v5444 = vmul.f32 %v5379, %v5412
      %v5445 = vmul.f32 %v5413, 0.044715
      %v5446 = vmul.f32 %v5414, 0.044715
      %v5447 = vmul.f32 %v5415, 0.044715
      %v5448 = vmul.f32 %v5416, 0.044715
      %v5449 = vmul.f32 %v5417, 0.044715
      %v5450 = vmul.f32 %v5418, 0.044715
      %v5451 = vmul.f32 %v5419, 0.044715
      %v5452 = vmul.f32 %v5420, 0.044715
      %v5453 = vmul.f32 %v5421, 0.044715
      %v5454 = vmul.f32 %v5422, 0.044715
      %v5455 = vmul.f32 %v5423, 0.044715
      %v5456 = vmul.f32 %v5424, 0.044715
      %v5457 = vmul.f32 %v5425, 0.044715
      %v5458 = vmul.f32 %v5426, 0.044715
      %v5459 = vmul.f32 %v5427, 0.044715
      %v5460 = vmul.f32 %v5428, 0.044715
      %v5461 = vmul.f32 %v5429, 0.044715
      %v5462 = vmul.f32 %v5430, 0.044715
      %v5463 = vmul.f32 %v5431, 0.044715
      %v5464 = vmul.f32 %v5432, 0.044715
      %v5465 = vmul.f32 %v5433, 0.044715
      %v5466 = vmul.f32 %v5434, 0.044715
      %v5467 = vmul.f32 %v5435, 0.044715
      %v5468 = vmul.f32 %v5436, 0.044715
      %v5469 = vmul.f32 %v5437, 0.044715
      %v5470 = vmul.f32 %v5438, 0.044715
      %v5471 = vmul.f32 %v5439, 0.044715
      %v5472 = vmul.f32 %v5440, 0.044715
      %v5473 = vmul.f32 %v5441, 0.044715
      %v5474 = vmul.f32 %v5442, 0.044715
      %v5475 = vmul.f32 %v5443, 0.044715
      %v5476 = vmul.f32 %v5444, 0.044715
      %v5477 = vadd.f32 %v5302, %v5445
      %v5478 = vadd.f32 %v5304, %v5446
      %v5479 = vadd.f32 %v5307, %v5447
      %v5480 = vadd.f32 %v5309, %v5448
      %v5481 = vadd.f32 %v5312, %v5449
      %v5482 = vadd.f32 %v5314, %v5450
      %v5483 = vadd.f32 %v5317, %v5451
      %v5484 = vadd.f32 %v5319, %v5452
      %v5485 = vadd.f32 %v5322, %v5453
      %v5486 = vadd.f32 %v5324, %v5454
      %v5487 = vadd.f32 %v5327, %v5455
      %v5488 = vadd.f32 %v5329, %v5456
      %v5489 = vadd.f32 %v5332, %v5457
      %v5490 = vadd.f32 %v5334, %v5458
      %v5491 = vadd.f32 %v5337, %v5459
      %v5492 = vadd.f32 %v5339, %v5460
      %v5493 = vadd.f32 %v5342, %v5461
      %v5494 = vadd.f32 %v5344, %v5462
      %v5495 = vadd.f32 %v5347, %v5463
      %v5496 = vadd.f32 %v5349, %v5464
      %v5497 = vadd.f32 %v5352, %v5465
      %v5498 = vadd.f32 %v5354, %v5466
      %v5499 = vadd.f32 %v5357, %v5467
      %v5500 = vadd.f32 %v5359, %v5468
      %v5501 = vadd.f32 %v5362, %v5469
      %v5502 = vadd.f32 %v5364, %v5470
      %v5503 = vadd.f32 %v5367, %v5471
      %v5504 = vadd.f32 %v5369, %v5472
      %v5505 = vadd.f32 %v5372, %v5473
      %v5506 = vadd.f32 %v5374, %v5474
      %v5507 = vadd.f32 %v5377, %v5475
      %v5508 = vadd.f32 %v5379, %v5476
      %v5509 = vmul.f32 %v5477, 0.7978846
      %v5510 = vmul.f32 %v5478, 0.7978846
      %v5511 = vmul.f32 %v5479, 0.7978846
      %v5512 = vmul.f32 %v5480, 0.7978846
      %v5513 = vmul.f32 %v5481, 0.7978846
      %v5514 = vmul.f32 %v5482, 0.7978846
      %v5515 = vmul.f32 %v5483, 0.7978846
      %v5516 = vmul.f32 %v5484, 0.7978846
      %v5517 = vmul.f32 %v5485, 0.7978846
      %v5518 = vmul.f32 %v5486, 0.7978846
      %v5519 = vmul.f32 %v5487, 0.7978846
      %v5520 = vmul.f32 %v5488, 0.7978846
      %v5521 = vmul.f32 %v5489, 0.7978846
      %v5522 = vmul.f32 %v5490, 0.7978846
      %v5523 = vmul.f32 %v5491, 0.7978846
      %v5524 = vmul.f32 %v5492, 0.7978846
      %v5525 = vmul.f32 %v5493, 0.7978846
      %v5526 = vmul.f32 %v5494, 0.7978846
      %v5527 = vmul.f32 %v5495, 0.7978846
      %v5528 = vmul.f32 %v5496, 0.7978846
      %v5529 = vmul.f32 %v5497, 0.7978846
      %v5530 = vmul.f32 %v5498, 0.7978846
      %v5531 = vmul.f32 %v5499, 0.7978846
      %v5532 = vmul.f32 %v5500, 0.7978846
      %v5533 = vmul.f32 %v5501, 0.7978846
      %v5534 = vmul.f32 %v5502, 0.7978846
      %v5535 = vmul.f32 %v5503, 0.7978846
      %v5536 = vmul.f32 %v5504, 0.7978846
      %v5537 = vmul.f32 %v5505, 0.7978846
      %v5538 = vmul.f32 %v5506, 0.7978846
      %v5539 = vmul.f32 %v5507, 0.7978846
      %v5540 = vmul.f32 %v5508, 0.7978846
      %v5541 = vtanh.pop %v5509
      %v5542 = vtanh.pop %v5510
      %v5543 = vtanh.pop %v5511
      %v5544 = vtanh.pop %v5512
      %v5545 = vtanh.pop %v5513
      %v5546 = vtanh.pop %v5514
      %v5547 = vtanh.pop %v5515
      %v5548 = vtanh.pop %v5516
      %v5549 = vtanh.pop %v5517
      %v5550 = vtanh.pop %v5518
      %v5551 = vtanh.pop %v5519
      %v5552 = vtanh.pop %v5520
      %v5553 = vtanh.pop %v5521
      %v5554 = vtanh.pop %v5522
      %v5555 = vtanh.pop %v5523
      %v5556 = vtanh.pop %v5524
      %v5557 = vtanh.pop %v5525
      %v5558 = vtanh.pop %v5526
      %v5559 = vtanh.pop %v5527
      %v5560 = vtanh.pop %v5528
      %v5561 = vtanh.pop %v5529
      %v5562 = vtanh.pop %v5530
      %v5563 = vtanh.pop %v5531
      %v5564 = vtanh.pop %v5532
      %v5565 = vtanh.pop %v5533
      %v5566 = vtanh.pop %v5534
      %v5567 = vtanh.pop %v5535
      %v5568 = vtanh.pop %v5536
      %v5569 = vtanh.pop %v5537
      %v5570 = vtanh.pop %v5538
      %v5571 = vtanh.pop %v5539
      %v5572 = vtanh.pop %v5540
      %v5573 = vadd.f32 %v5541, 1.0
      %v5574 = vadd.f32 %v5542, 1.0
      %v5575 = vadd.f32 %v5543, 1.0
      %v5576 = vadd.f32 %v5544, 1.0
      %v5577 = vadd.f32 %v5545, 1.0
      %v5578 = vadd.f32 %v5546, 1.0
      %v5579 = vadd.f32 %v5547, 1.0
      %v5580 = vadd.f32 %v5548, 1.0
      %v5581 = vadd.f32 %v5549, 1.0
      %v5582 = vadd.f32 %v5550, 1.0
      %v5583 = vadd.f32 %v5551, 1.0
      %v5584 = vadd.f32 %v5552, 1.0
      %v5585 = vadd.f32 %v5553, 1.0
      %v5586 = vadd.f32 %v5554, 1.0
      %v5587 = vadd.f32 %v5555, 1.0
      %v5588 = vadd.f32 %v5556, 1.0
      %v5589 = vadd.f32 %v5557, 1.0
      %v5590 = vadd.f32 %v5558, 1.0
      %v5591 = vadd.f32 %v5559, 1.0
      %v5592 = vadd.f32 %v5560, 1.0
      %v5593 = vadd.f32 %v5561, 1.0
      %v5594 = vadd.f32 %v5562, 1.0
      %v5595 = vadd.f32 %v5563, 1.0
      %v5596 = vadd.f32 %v5564, 1.0
      %v5597 = vadd.f32 %v5565, 1.0
      %v5598 = vadd.f32 %v5566, 1.0
      %v5599 = vadd.f32 %v5567, 1.0
      %v5600 = vadd.f32 %v5568, 1.0
      %v5601 = vadd.f32 %v5569, 1.0
      %v5602 = vadd.f32 %v5570, 1.0
      %v5603 = vadd.f32 %v5571, 1.0
      %v5604 = vadd.f32 %v5572, 1.0
      %v5605 = vmul.f32 %v5573, 0.5
      %v5606 = vmul.f32 %v5574, 0.5
      %v5607 = vmul.f32 %v5575, 0.5
      %v5608 = vmul.f32 %v5576, 0.5
      %v5609 = vmul.f32 %v5577, 0.5
      %v5610 = vmul.f32 %v5578, 0.5
      %v5611 = vmul.f32 %v5579, 0.5
      %v5612 = vmul.f32 %v5580, 0.5
      %v5613 = vmul.f32 %v5581, 0.5
      %v5614 = vmul.f32 %v5582, 0.5
      %v5615 = vmul.f32 %v5583, 0.5
      %v5616 = vmul.f32 %v5584, 0.5
      %v5617 = vmul.f32 %v5585, 0.5
      %v5618 = vmul.f32 %v5586, 0.5
      %v5619 = vmul.f32 %v5587, 0.5
      %v5620 = vmul.f32 %v5588, 0.5
      %v5621 = vmul.f32 %v5589, 0.5
      %v5622 = vmul.f32 %v5590, 0.5
      %v5623 = vmul.f32 %v5591, 0.5
      %v5624 = vmul.f32 %v5592, 0.5
      %v5625 = vmul.f32 %v5593, 0.5
      %v5626 = vmul.f32 %v5594, 0.5
      %v5627 = vmul.f32 %v5595, 0.5
      %v5628 = vmul.f32 %v5596, 0.5
      %v5629 = vmul.f32 %v5597, 0.5
      %v5630 = vmul.f32 %v5598, 0.5
      %v5631 = vmul.f32 %v5599, 0.5
      %v5632 = vmul.f32 %v5600, 0.5
      %v5633 = vmul.f32 %v5601, 0.5
      %v5634 = vmul.f32 %v5602, 0.5
      %v5635 = vmul.f32 %v5603, 0.5
      %v5636 = vmul.f32 %v5604, 0.5
      %v5637 = vmul.f32 %v5302, %v5605
      %v5638 = vmul.f32 %v5304, %v5606
      %v5639 = vmul.f32 %v5307, %v5607
      %v5640 = vmul.f32 %v5309, %v5608
      %v5641 = vmul.f32 %v5312, %v5609
      %v5642 = vmul.f32 %v5314, %v5610
      %v5643 = vmul.f32 %v5317, %v5611
      %v5644 = vmul.f32 %v5319, %v5612
      %v5645 = vmul.f32 %v5322, %v5613
      %v5646 = vmul.f32 %v5324, %v5614
      %v5647 = vmul.f32 %v5327, %v5615
      %v5648 = vmul.f32 %v5329, %v5616
      %v5649 = vmul.f32 %v5332, %v5617
      %v5650 = vmul.f32 %v5334, %v5618
      %v5651 = vmul.f32 %v5337, %v5619
      %v5652 = vmul.f32 %v5339, %v5620
      %v5653 = vmul.f32 %v5342, %v5621
      %v5654 = vmul.f32 %v5344, %v5622
      %v5655 = vmul.f32 %v5347, %v5623
      %v5656 = vmul.f32 %v5349, %v5624
      %v5657 = vmul.f32 %v5352, %v5625
      %v5658 = vmul.f32 %v5354, %v5626
      %v5659 = vmul.f32 %v5357, %v5627
      %v5660 = vmul.f32 %v5359, %v5628
      %v5661 = vmul.f32 %v5362, %v5629
      %v5662 = vmul.f32 %v5364, %v5630
      %v5663 = vmul.f32 %v5367, %v5631
      %v5664 = vmul.f32 %v5369, %v5632
      %v5665 = vmul.f32 %v5372, %v5633
      %v5666 = vmul.f32 %v5374, %v5634
      %v5667 = vmul.f32 %v5377, %v5635
      %v5668 = vmul.f32 %v5379, %v5636
      %v5669 = vpack.c.bf16 %v5638, %v5637
      %v5670 = vpack.c.bf16 %v5640, %v5639
      %v5671 = vpack.c.bf16 %v5642, %v5641
      %v5672 = vpack.c.bf16 %v5644, %v5643
      %v5673 = vpack.c.bf16 %v5646, %v5645
      %v5674 = vpack.c.bf16 %v5648, %v5647
      %v5675 = vpack.c.bf16 %v5650, %v5649
      %v5676 = vpack.c.bf16 %v5652, %v5651
      %v5677 = vpack.c.bf16 %v5654, %v5653
      %v5678 = vpack.c.bf16 %v5656, %v5655
      %v5679 = vpack.c.bf16 %v5658, %v5657
      %v5680 = vpack.c.bf16 %v5660, %v5659
      %v5681 = vpack.c.bf16 %v5662, %v5661
      %v5682 = vpack.c.bf16 %v5664, %v5663
      %v5683 = vpack.c.bf16 %v5666, %v5665
      %v5684 = vpack.c.bf16 %v5668, %v5667
      %v5685 = vld [vmem:[%s5] sm:$0xf]
      %v5686 = vld [vmem:[%s5 + $0x4] sm:$0xf]
      %v5687 = vld [vmem:[%s5 + $0x8] sm:$0xf]
      %v5688 = vld [vmem:[%s5 + $0xc] sm:$0xf]
      %v5693 = vunpack.c.l.b16 %v5685
      %v5694 = vunpack.c.l.b16 %v5686
      %v5695 = vunpack.c.l.b16 %v5687
      %v5696 = vunpack.c.l.b16 %v5688
      %v5697 = vpack.c.b16 %v5694, %v5693
      %v5698 = vpack.c.b16 %v5696, %v5695
      %vm5701 = vcmask 261120
      %v5703 = vsel %vm5701, %v5669, 0
      %v5706 = vsel %vm5701, %v5670, 0
      %v5709 = vsel %vm5701, %v5671, 0
      %v5712 = vsel %vm5701, %v5672, 0
      %v5715 = vsel %vm5701, %v5673, 0
      %v5718 = vsel %vm5701, %v5674, 0
      %v5721 = vsel %vm5701, %v5675, 0
      %v5724 = vsel %vm5701, %v5676, 0
      %v5727 = vsel %vm5701, %v5677, 0
      %v5730 = vsel %vm5701, %v5678, 0
      %v5733 = vsel %vm5701, %v5679, 0
      %v5736 = vsel %vm5701, %v5680, 0
      %v5739 = vsel %vm5701, %v5681, 0
      %v5742 = vsel %vm5701, %v5682, 0
      %v5745 = vsel %vm5701, %v5683, 0
      %v5748 = vsel %vm5701, %v5684, 0
      %5750 = vmatpush.bf16.msra.mxu0 0
      %5751 = vmatpush.bf16.msra.mxu0 0
      %5752 = vmatpush.bf16.msra.mxu0 0
      %5753 = vmatpush.bf16.msra.mxu0 0
      %5754 = vmatpush.bf16.msra.mxu0 0
      %5755 = vmatpush.bf16.msra.mxu0 0
      %5756 = vmatpush.bf16.msra.mxu0 %v5698
      %5757 = vmatpush.bf16.msra.mxu0 %v5697
      %5758 = vmatmul.bf16.gmra.mxu0 %v5703
      %v5759 = vpop.f32.mrf.mxu0
      %v5760 = vadd.f32 0.0, %v5759
      %v5761 = vpop.f32.mrf.mxu0
      %v5762 = vadd.f32 0.0, %v5761
      %5763 = vmatmul.bf16.gmra.mxu0 %v5706
      %v5764 = vpop.f32.mrf.mxu0
      %v5765 = vadd.f32 0.0, %v5764
      %v5766 = vpop.f32.mrf.mxu0
      %v5767 = vadd.f32 0.0, %v5766
      %5768 = vmatmul.bf16.gmra.mxu0 %v5709
      %v5769 = vpop.f32.mrf.mxu0
      %v5770 = vadd.f32 0.0, %v5769
      %v5771 = vpop.f32.mrf.mxu0
      %v5772 = vadd.f32 0.0, %v5771
      %5773 = vmatmul.bf16.gmra.mxu0 %v5712
      %v5774 = vpop.f32.mrf.mxu0
      %v5775 = vadd.f32 0.0, %v5774
      %v5776 = vpop.f32.mrf.mxu0
      %v5777 = vadd.f32 0.0, %v5776
      %5778 = vmatmul.bf16.gmra.mxu0 %v5715
      %v5779 = vpop.f32.mrf.mxu0
      %v5780 = vadd.f32 0.0, %v5779
      %v5781 = vpop.f32.mrf.mxu0
      %v5782 = vadd.f32 0.0, %v5781
      %5783 = vmatmul.bf16.gmra.mxu0 %v5718
      %v5784 = vpop.f32.mrf.mxu0
      %v5785 = vadd.f32 0.0, %v5784
      %v5786 = vpop.f32.mrf.mxu0
      %v5787 = vadd.f32 0.0, %v5786
      %5788 = vmatmul.bf16.gmra.mxu0 %v5721
      %v5789 = vpop.f32.mrf.mxu0
      %v5790 = vadd.f32 0.0, %v5789
      %v5791 = vpop.f32.mrf.mxu0
      %v5792 = vadd.f32 0.0, %v5791
      %5793 = vmatmul.bf16.gmra.mxu0 %v5724
      %v5794 = vpop.f32.mrf.mxu0
      %v5795 = vadd.f32 0.0, %v5794
      %v5796 = vpop.f32.mrf.mxu0
      %v5797 = vadd.f32 0.0, %v5796
      %5798 = vmatmul.bf16.gmra.mxu0 %v5727
      %v5799 = vpop.f32.mrf.mxu0
      %v5800 = vadd.f32 0.0, %v5799
      %v5801 = vpop.f32.mrf.mxu0
      %v5802 = vadd.f32 0.0, %v5801
      %5803 = vmatmul.bf16.gmra.mxu0 %v5730
      %v5804 = vpop.f32.mrf.mxu0
      %v5805 = vadd.f32 0.0, %v5804
      %v5806 = vpop.f32.mrf.mxu0
      %v5807 = vadd.f32 0.0, %v5806
      %5808 = vmatmul.bf16.gmra.mxu0 %v5733
      %v5809 = vpop.f32.mrf.mxu0
      %v5810 = vadd.f32 0.0, %v5809
      %v5811 = vpop.f32.mrf.mxu0
      %v5812 = vadd.f32 0.0, %v5811
      %5813 = vmatmul.bf16.gmra.mxu0 %v5736
      %v5814 = vpop.f32.mrf.mxu0
      %v5815 = vadd.f32 0.0, %v5814
      %v5816 = vpop.f32.mrf.mxu0
      %v5817 = vadd.f32 0.0, %v5816
      %5818 = vmatmul.bf16.gmra.mxu0 %v5739
      %v5819 = vpop.f32.mrf.mxu0
      %v5820 = vadd.f32 0.0, %v5819
      %v5821 = vpop.f32.mrf.mxu0
      %v5822 = vadd.f32 0.0, %v5821
      %5823 = vmatmul.bf16.gmra.mxu0 %v5742
      %v5824 = vpop.f32.mrf.mxu0
      %v5825 = vadd.f32 0.0, %v5824
      %v5826 = vpop.f32.mrf.mxu0
      %v5827 = vadd.f32 0.0, %v5826
      %5828 = vmatmul.bf16.gmra.mxu0 %v5745
      %v5829 = vpop.f32.mrf.mxu0
      %v5830 = vadd.f32 0.0, %v5829
      %v5831 = vpop.f32.mrf.mxu0
      %v5832 = vadd.f32 0.0, %v5831
      %5833 = vmatmul.bf16.gmra.mxu0 %v5748
      %v5834 = vpop.f32.mrf.mxu0
      %v5835 = vadd.f32 0.0, %v5834
      %v5836 = vpop.f32.mrf.mxu0
      %v5837 = vadd.f32 0.0, %v5836
      %5838 = vdwg.mxu0
      %v5839 = vld [vmem:[%s6] sm:$0x1]
      %v5841 = vperm.slane %v5839, 0
      %v5843 = vmul.f32 %v5760, %v5841
      %v5844 = vmul.f32 %v5762, %v5841
      %v5845 = vmul.f32 %v5765, %v5841
      %v5846 = vmul.f32 %v5767, %v5841
      %v5847 = vmul.f32 %v5770, %v5841
      %v5848 = vmul.f32 %v5772, %v5841
      %v5849 = vmul.f32 %v5775, %v5841
      %v5850 = vmul.f32 %v5777, %v5841
      %v5851 = vmul.f32 %v5780, %v5841
      %v5852 = vmul.f32 %v5782, %v5841
      %v5853 = vmul.f32 %v5785, %v5841
      %v5854 = vmul.f32 %v5787, %v5841
      %v5855 = vmul.f32 %v5790, %v5841
      %v5856 = vmul.f32 %v5792, %v5841
      %v5857 = vmul.f32 %v5795, %v5841
      %v5858 = vmul.f32 %v5797, %v5841
      %v5859 = vmul.f32 %v5800, %v5841
      %v5860 = vmul.f32 %v5802, %v5841
      %v5861 = vmul.f32 %v5805, %v5841
      %v5862 = vmul.f32 %v5807, %v5841
      %v5863 = vmul.f32 %v5810, %v5841
      %v5864 = vmul.f32 %v5812, %v5841
      %v5865 = vmul.f32 %v5815, %v5841
      %v5866 = vmul.f32 %v5817, %v5841
      %v5867 = vmul.f32 %v5820, %v5841
      %v5868 = vmul.f32 %v5822, %v5841
      %v5869 = vmul.f32 %v5825, %v5841
      %v5870 = vmul.f32 %v5827, %v5841
      %v5871 = vmul.f32 %v5830, %v5841
      %v5872 = vmul.f32 %v5832, %v5841
      %v5873 = vmul.f32 %v5835, %v5841
      %v5874 = vmul.f32 %v5837, %v5841
      %v5875 = vld [vmem:[%s7] sm:$0x1]
      %v5877 = vperm.slane %v5875, 0
      %v5879 = vadd.f32 %v5843, %v5877
      %v5880 = vadd.f32 %v5844, %v5877
      %v5881 = vadd.f32 %v5845, %v5877
      %v5882 = vadd.f32 %v5846, %v5877
      %v5883 = vadd.f32 %v5847, %v5877
      %v5884 = vadd.f32 %v5848, %v5877
      %v5885 = vadd.f32 %v5849, %v5877
      %v5886 = vadd.f32 %v5850, %v5877
      %v5887 = vadd.f32 %v5851, %v5877
      %v5888 = vadd.f32 %v5852, %v5877
      %v5889 = vadd.f32 %v5853, %v5877
      %v5890 = vadd.f32 %v5854, %v5877
      %v5891 = vadd.f32 %v5855, %v5877
      %v5892 = vadd.f32 %v5856, %v5877
      %v5893 = vadd.f32 %v5857, %v5877
      %v5894 = vadd.f32 %v5858, %v5877
      %v5895 = vadd.f32 %v5859, %v5877
      %v5896 = vadd.f32 %v5860, %v5877
      %v5897 = vadd.f32 %v5861, %v5877
      %v5898 = vadd.f32 %v5862, %v5877
      %v5899 = vadd.f32 %v5863, %v5877
      %v5900 = vadd.f32 %v5864, %v5877
      %v5901 = vadd.f32 %v5865, %v5877
      %v5902 = vadd.f32 %v5866, %v5877
      %v5903 = vadd.f32 %v5867, %v5877
      %v5904 = vadd.f32 %v5868, %v5877
      %v5905 = vadd.f32 %v5869, %v5877
      %v5906 = vadd.f32 %v5870, %v5877
      %v5907 = vadd.f32 %v5871, %v5877
      %v5908 = vadd.f32 %v5872, %v5877
      %v5909 = vadd.f32 %v5873, %v5877
      %v5910 = vadd.f32 %v5874, %v5877
      %5911 = vst.msk [vmem:[%s305] sm:$0xff] %vm1383, %v5879
      %5912 = vst.msk [vmem:[%s305 + $0x8] sm:$0xff] %vm1383, %v5880
      %5913 = vst.msk [vmem:[%s305 + $0x10] sm:$0xff] %vm1383, %v5881
      %5914 = vst.msk [vmem:[%s305 + $0x18] sm:$0xff] %vm1383, %v5882
      %5915 = vst.msk [vmem:[%s305 + $0x20] sm:$0xff] %vm1383, %v5883
      %5916 = vst.msk [vmem:[%s305 + $0x28] sm:$0xff] %vm1383, %v5884
      %5917 = vst.msk [vmem:[%s305 + $0x30] sm:$0xff] %vm1383, %v5885
      %5918 = vst.msk [vmem:[%s305 + $0x38] sm:$0xff] %vm1383, %v5886
      %5919 = vst.msk [vmem:[%s305 + $0x40] sm:$0xff] %vm1383, %v5887
      %5920 = vst.msk [vmem:[%s305 + $0x48] sm:$0xff] %vm1383, %v5888
      %5921 = vst.msk [vmem:[%s305 + $0x50] sm:$0xff] %vm1383, %v5889
      %5922 = vst.msk [vmem:[%s305 + $0x58] sm:$0xff] %vm1383, %v5890
      %5923 = vst.msk [vmem:[%s305 + $0x60] sm:$0xff] %vm1383, %v5891
      %5924 = vst.msk [vmem:[%s305 + $0x68] sm:$0xff] %vm1383, %v5892
      %5925 = vst.msk [vmem:[%s305 + $0x70] sm:$0xff] %vm1383, %v5893
      %5926 = vst.msk [vmem:[%s305 + $0x78] sm:$0xff] %vm1383, %v5894
      %5927 = vst.msk [vmem:[%s305 + $0x80] sm:$0xff] %vm1383, %v5895
      %5928 = vst.msk [vmem:[%s305 + $0x88] sm:$0xff] %vm1383, %v5896
      %5929 = vst.msk [vmem:[%s305 + $0x90] sm:$0xff] %vm1383, %v5897
      %5930 = vst.msk [vmem:[%s305 + $0x98] sm:$0xff] %vm1383, %v5898
      %5931 = vst.msk [vmem:[%s305 + $0xa0] sm:$0xff] %vm1383, %v5899
      %5932 = vst.msk [vmem:[%s305 + $0xa8] sm:$0xff] %vm1383, %v5900
      %5933 = vst.msk [vmem:[%s305 + $0xb0] sm:$0xff] %vm1383, %v5901
      %5934 = vst.msk [vmem:[%s305 + $0xb8] sm:$0xff] %vm1383, %v5902
      %5935 = vst.msk [vmem:[%s305 + $0xc0] sm:$0xff] %vm1383, %v5903
      %5936 = vst.msk [vmem:[%s305 + $0xc8] sm:$0xff] %vm1383, %v5904
      %5937 = vst.msk [vmem:[%s305 + $0xd0] sm:$0xff] %vm1383, %v5905
      %5938 = vst.msk [vmem:[%s305 + $0xd8] sm:$0xff] %vm1383, %v5906
      %5939 = vst.msk [vmem:[%s305 + $0xe0] sm:$0xff] %vm1383, %v5907
      %5940 = vst.msk [vmem:[%s305 + $0xe8] sm:$0xff] %vm1383, %v5908
      %5941 = vst.msk [vmem:[%s305 + $0xf0] sm:$0xff] %vm1383, %v5909
      %5942 = vst.msk [vmem:[%s305 + $0xf8] sm:$0xff] %vm1383, %v5910
      %p5943 = scmp.lt.s32.totalorder %s19, 1
      %s5944 = scalar_select %p5943, %s19, 1
      %s5945 = smul.addr %s5944, 32
      %s5946 = smul.addr %s5945, 8
      %s5947 = scalar_lea.vmem %s8, %s5946
      // Predicated region
      $region53: #{tpu_custom_call.1} parent=51 // pred_check
        %p5948 = pneg %p210
      $region54: #{tpu_custom_call.1} parent=51 // pred_check_branch
        %5950 = sbr.rel (%p5948) target = $region56
      $region55: #{tpu_custom_call.1} parent=51 // pred_region
        _
      $region56: #{tpu_custom_call.1} parent=51 // pred_fallthru
        _
    $region52: #{tpu_custom_call.1} parent=5 // pred_fallthru
      _
    %p5951 = scmp.le.s32.totalorder 2, %s14
    // Predicated region
    $region57: #{tpu_custom_call.1} parent=5 // pred_check
      %p5952 = pneg %p5951
    $region58: #{tpu_custom_call.1} parent=5 // pred_check_branch
      %5954 = sbr.rel (%p5952) target = $region60
    $region59: #{tpu_custom_call.1} parent=5 // pred_region
      %s5955 = ssub.s32 %s14, 2
      // Predicated region
      $region61: #{tpu_custom_call.1} parent=59 // pred_check
        %p5956 = pneg %p216
      $region62: #{tpu_custom_call.1} parent=59 // pred_check_branch
        %5958 = sbr.rel (%p5956) target = $region64
      $region63: #{tpu_custom_call.1} parent=59 // pred_region
        %p5959 = scmp.lt.s32.totalorder %s20, 1
        %s5960 = scalar_select %p5959, %s20, 1
        %s5961 = smul.addr %s5960, 32
        %s5962 = smul.addr %s5961, 8
        %s5963 = scalar_lea.vmem %s8, %s5962
      $region64: #{tpu_custom_call.1} parent=59 // pred_fallthru
        _
    $region60: #{tpu_custom_call.1} parent=5 // pred_fallthru
      _
  $region6: #{tpu_custom_call.1} parent=0 // loop_footer
    %s18 = sadd.s32 1, %s14
  $region7: #{tpu_custom_call.1} parent=0 // loop_footer_branch
    %13 = sbr.rel target = $region3
  $region8: #{tpu_custom_call.1} parent=0 // loop_exit
    _

</llo_original>
